<compile_context>
chip_gen: v7x
topology: tpu7x:2x2x1
jax: 0.10.0
libtpu: 0.0.40
codegen_flags: <defaults>
</compile_context>

<pallas_src>
import functools
import math

import jax
import jax.numpy as jnp
from jax.experimental import pallas as pl
from jax.experimental.pallas import tpu as pltpu

EPS = 1e-5  # nn.LayerNorm default


# ----------------------------- in-kernel helpers ----------------------------- #

def _ln_f32(x, g, b):
    """LayerNorm over the last axis, computed in f32."""
    mean = jnp.mean(x, axis=-1, keepdims=True)
    xc = x - mean
    var = jnp.mean(xc * xc, axis=-1, keepdims=True)
    return xc * jax.lax.rsqrt(var + EPS) * g + b


def _erf_f32(x):
    """Single-precision erf (Eigen / XLA rational approximation).

    Pure mul/add/div so it lowers to plain VPU ops; accurate to ~1e-7 abs,
    matching jax.scipy.special.erf / torch.erf well within f32 tolerance.
    """
    x = jnp.clip(x, -4.0, 4.0)
    x2 = x * x
    # numerator (odd polynomial)
    a = jnp.float32(-2.72614225801306e-10)
    a = a * x2 + jnp.float32(2.77068142495902e-08)
    a = a * x2 + jnp.float32(-2.10102402082508e-06)
    a = a * x2 + jnp.float32(-5.69250639462346e-05)
    a = a * x2 + jnp.float32(-7.34990630326855e-04)
    a = a * x2 + jnp.float32(-2.95459980854025e-03)
    a = a * x2 + jnp.float32(-1.60960333262415e-02)
    num = x * a
    # denominator (even polynomial)
    b = jnp.float32(-1.45660718464996e-05)
    b = b * x2 + jnp.float32(-2.13374055278905e-04)
    b = b * x2 + jnp.float32(-1.68282697438203e-03)
    b = b * x2 + jnp.float32(-7.37332916720468e-03)
    b = b * x2 + jnp.float32(-1.42647390514189e-02)
    return num / b


def _gelu_exact_f32(x):
    """Exact erf-based GELU (PyTorch F.gelu default)."""
    return 0.5 * x * (1.0 + _erf_f32(x * jnp.float32(1.0 / math.sqrt(2.0))))


# -------------------- fused (LN + MHA + out-proj + residual) ----------------- #

def _attn_block_kernel(*refs, nhead, self_attn):
    """out = x + (MHA(LN(x), kv) @ Wo + bo), one batch element per grid step.

    self_attn=True : K/V source is LN(x) itself (PyTorch self_attn(q2,q2,q2));
                     no separate kv input is DMA'd.
    self_attn=False: K/V source is the raw `kv` tensor (cross attention on the
                     un-normalized `value`).
    """
    if self_attn:
        (x_ref, g_ref, b_ref, wq_ref, bq_ref, wk_ref, bk_ref,
         wv_ref, bv_ref, wo_ref, bo_ref, o_ref, attn_ref) = refs
        kv_ref = None
    else:
        (x_ref, kv_ref, g_ref, b_ref, wq_ref, bq_ref, wk_ref, bk_ref,
         wv_ref, bv_ref, wo_ref, bo_ref, o_ref, attn_ref) = refs

    x = x_ref[0].astype(jnp.float32)                       # (Sq, D)
    g = g_ref[...].astype(jnp.float32)                     # (1, D)
    b = b_ref[...].astype(jnp.float32)                     # (1, D)
    xn = _ln_f32(x, g, b)                                  # (Sq, D) f32

    if self_attn:
        kvn = xn                                           # reuse, no 2nd LN
    else:
        kvn = kv_ref[0].astype(jnp.float32)                # (Sk, D), no LN

    # Projections; accumulate in f32 on the MXU.
    q = jnp.dot(xn.astype(wq_ref.dtype), wq_ref[...],
                preferred_element_type=jnp.float32) + bq_ref[...].astype(jnp.float32)
    k = jnp.dot(kvn.astype(wk_ref.dtype), wk_ref[...],
                preferred_element_type=jnp.float32) + bk_ref[...].astype(jnp.float32)
    v = jnp.dot(kvn.astype(wv_ref.dtype), wv_ref[...],
                preferred_element_type=jnp.float32) + bv_ref[...].astype(jnp.float32)

    d = q.shape[-1]
    dh = d // nhead
    scale = 1.0 / math.sqrt(dh)

    # Per-head attention from the full-width slabs; results are packed into a
    # lane-dense (Sq, D) VMEM scratch so the output projection is one big
    # K=D matmul and the final store is a single full-width slab.
    for h in range(nhead):                                 # static python loop
        sl = slice(h * dh, (h + 1) * dh)
        qh, kh, vh = q[:, sl], k[:, sl], v[:, sl]
        s = jax.lax.dot_general(qh, kh, (((1,), (1,)), ((), ())),
                                preferred_element_type=jnp.float32) * scale
        m = jnp.max(s, axis=-1, keepdims=True)
        p = jnp.exp(s - m)
        l = jnp.sum(p, axis=-1, keepdims=True)
        oh = jnp.dot(p, vh, preferred_element_type=jnp.float32)
        # Normalize *after* the PV matmul on the small (Sq, dh) tile instead
        # of dividing the (Sq, Sk) probability tile.
        attn_ref[:, sl] = oh / l

    attn = attn_ref[...]                                   # (Sq, D) f32
    out = jnp.dot(attn.astype(wo_ref.dtype), wo_ref[...],
                  preferred_element_type=jnp.float32) + bo_ref[...].astype(jnp.float32)
    o_ref[0] = (x + out).astype(o_ref.dtype)               # fused residual add


def fused_attention_block(x, kv, gamma, beta, p, nhead, *, self_attn):
    """x: (B, Sq, D) residual stream;  kv: (B, Sk, D) key/value source or None."""
    bsz, sq, d = x.shape

    def const2d(shape):
        return pl.BlockSpec(shape, lambda i: (0, 0))       # VMEM-resident

    in_specs = [pl.BlockSpec((1, sq, d), lambda i: (i, 0, 0))]   # x (residual)
    args = [x]
    if not self_attn:
        sk = kv.shape[1]
        in_specs.append(pl.BlockSpec((1, sk, d), lambda i: (i, 0, 0)))  # kv
        args.append(kv)

    in_specs += [
        const2d((1, d)), const2d((1, d)),                  # gamma, beta
        const2d((d, d)), const2d((1, d)),                  # wq, bq
        const2d((d, d)), const2d((1, d)),                  # wk, bk
        const2d((d, d)), const2d((1, d)),                  # wv, bv
        const2d((d, d)), const2d((1, d)),                  # wo, bo
    ]
    args += [gamma.reshape(1, d), beta.reshape(1, d),
             p["wq"], p["bq"].reshape(1, d),
             p["wk"], p["bk"].reshape(1, d),
             p["wv"], p["bv"].reshape(1, d),
             p["wo"], p["bo"].reshape(1, d)]

    kern = functools.partial(_attn_block_kernel, nhead=nhead, self_attn=self_attn)
    return pl.pallas_call(
        kern,
        grid=(bsz,),
        in_specs=in_specs,
        out_specs=pl.BlockSpec((1, sq, d), lambda i: (i, 0, 0)),
        out_shape=jax.ShapeDtypeStruct((bsz, sq, d), x.dtype),
        scratch_shapes=[pltpu.VMEM((sq, d), jnp.float32)],
        compiler_params=pltpu.CompilerParams(dimension_semantics=("parallel",)),
    )(*args)


# ------------------------ fused (LN + FFN + residual) ------------------------ #

def _ln_ffn_kernel(x_ref, g_ref, b_ref, w1_ref, b1_ref, w2_ref, b2_ref, o_ref):
    x = x_ref[...].astype(jnp.float32)                     # (TN, D)
    xn = _ln_f32(x, g_ref[...].astype(jnp.float32), b_ref[...].astype(jnp.float32))
    h = jnp.dot(xn.astype(w1_ref.dtype), w1_ref[...],
                preferred_element_type=jnp.float32) + b1_ref[...].astype(jnp.float32)
    h = _gelu_exact_f32(h)                                 # exact erf GELU (F.gelu)
    o = jnp.dot(h.astype(w2_ref.dtype), w2_ref[...],
                preferred_element_type=jnp.float32) + b2_ref[...].astype(jnp.float32)
    o_ref[...] = (x + o).astype(o_ref.dtype)               # fused residual add


def _row_tile(n, max_rows):
    """Largest 8-aligned divisor of n that is <= max_rows (or n itself)."""
    if n <= max_rows:
        return n
    for t in range(max_rows - (max_rows % 8), 7, -8):
        if n % t == 0:
            return t
    return n


def fused_ln_ffn_block(x, gamma, beta, w1, b1, w2, b2, *, max_rows=256):
    # max_rows=256 keeps the f32 hidden tile + double-buffered inputs within
    # v7x's 64 MiB VMEM at production dff; v5e/v6e could go to 512+.
    bsz, s, d = x.shape
    n = bsz * s
    f = w1.shape[1]
    tn = _row_tile(n, max_rows)
    x2 = x.reshape(n, d)

    out = pl.pallas_call(
        _ln_ffn_kernel,
        grid=(n // tn,),
        in_specs=[
            pl.BlockSpec((tn, d), lambda i: (i, 0)),        # x row tile
            pl.BlockSpec((1, d), lambda i: (0, 0)),         # gamma
            pl.BlockSpec((1, d), lambda i: (0, 0)),         # beta
            pl.BlockSpec((d, f), lambda i: (0, 0)),         # w1 (resident)
            pl.BlockSpec((1, f), lambda i: (0, 0)),         # b1
            pl.BlockSpec((f, d), lambda i: (0, 0)),         # w2 (resident)
            pl.BlockSpec((1, d), lambda i: (0, 0)),         # b2
        ],
        out_specs=pl.BlockSpec((tn, d), lambda i: (i, 0)),
        out_shape=jax.ShapeDtypeStruct((n, d), x.dtype),
        compiler_params=pltpu.CompilerParams(dimension_semantics=("parallel",)),
    )(x2, gamma.reshape(1, d), beta.reshape(1, d),
      w1, b1.reshape(1, f), w2, b2.reshape(1, d))
    return out.reshape(bsz, s, d)


# --------------------------------- layer glue -------------------------------- #

def transformer_decoder_layer(query, value, params, nhead):
    # 1) query = query + OutProj(SelfMHA(LN1(query)))
    query = fused_attention_block(query, None, params["g1"], params["be1"],
                                  params["self_attn"], nhead, self_attn=True)
    # 2) query = query + OutProj(CrossMHA(q=LN2(query), k=v=value))
    query = fused_attention_block(query, value, params["g2"], params["be2"],
                                  params["cross_attn"], nhead, self_attn=False)
    # 3) query = query + FFN(LN3(query))
    query = fused_ln_ffn_block(query, params["g3"], params["be3"],
                               params["w1"], params["b1"],
                               params["w2"], params["b2"])
    return query


# ------------------------------ pure-JAX reference --------------------------- #

def _ref_ln(x, g, b):
    mean = jnp.mean(x, axis=-1, keepdims=True)
    var = jnp.mean((x - mean) ** 2, axis=-1, keepdims=True)
    return (x - mean) * jax.lax.rsqrt(var + EPS) * g + b


def _ref_mha(query, key, value, p, nhead):
    b, sq, e = query.shape
    sk = key.shape[1]
    dh = e // nhead
    q = query @ p["wq"] + p["bq"]
    k = key @ p["wk"] + p["bk"]
    v = value @ p["wv"] + p["bv"]
    q = q.reshape(b, sq, nhead, dh).transpose(0, 2, 1, 3)
    k = k.reshape(b, sk, nhead, dh).transpose(0, 2, 1, 3)
    v = v.reshape(b, sk, nhead, dh).transpose(0, 2, 1, 3)
    s = jnp.einsum("bhqd,bhkd->bhqk", q, k) / jnp.sqrt(dh).astype(q.dtype)
    a = jax.nn.softmax(s, axis=-1)
    o = jnp.einsum("bhqk,bhkd->bhqd", a, v)
    o = o.transpose(0, 2, 1, 3).reshape(b, sq, e)
    return o @ p["wo"] + p["bo"]


def reference_forward(query, value, params, nhead):
    q2 = _ref_ln(query, params["g1"], params["be1"])
    query = query + _ref_mha(q2, q2, q2, params["self_attn"], nhead)
    q2 = _ref_ln(query, params["g2"], params["be2"])
    query = query + _ref_mha(q2, value, value, params["cross_attn"], nhead)
    q2 = _ref_ln(query, params["g3"], params["be3"])
    h = jax.nn.gelu(q2 @ params["w1"] + params["b1"], approximate=False)
    query = query + (h @ params["w2"] + params["b2"])
    return query


# ------------------------------------ main ------------------------------------ #

def make_params(key, d_model, nhead, dim_ff):
    keys = jax.random.split(key, 16)
    f32 = jnp.float32

    def w(k, shape, scale=0.05):
        return (scale * jax.random.normal(k, shape)).astype(f32)

    def mha_params(k):
        ks = jax.random.split(k, 8)
        return {
            "wq": w(ks[0], (d_model, d_model)), "bq": w(ks[1], (d_model,)),
            "wk": w(ks[2], (d_model, d_model)), "bk": w(ks[3], (d_model,)),
            "wv": w(ks[4], (d_model, d_model)), "bv": w(ks[5], (d_model,)),
            "wo": w(ks[6], (d_model, d_model)), "bo": w(ks[7], (d_model,)),
        }

    return {
        "self_attn": mha_params(keys[0]),
        "cross_attn": mha_params(keys[1]),
        "w1": w(keys[2], (d_model, dim_ff)), "b1": w(keys[3], (dim_ff,)),
        "w2": w(keys[4], (dim_ff, d_model)), "b2": w(keys[5], (d_model,)),
        "g1": jnp.ones((d_model,), f32), "be1": jnp.zeros((d_model,), f32),
        "g2": jnp.ones((d_model,), f32), "be2": jnp.zeros((d_model,), f32),
        "g3": jnp.ones((d_model,), f32), "be3": jnp.zeros((d_model,), f32),
    }


if __name__ == "__main__":
    d_model, nhead, dim_ff = 32, 4, 64
    batch, q_seq, v_seq = 2, 8, 16

    root = jax.random.PRNGKey(0)
    k_q, k_v, k_p = jax.random.split(root, 3)
    query = jax.random.normal(k_q, (batch, q_seq, d_model), dtype=jnp.float32)
    value = jax.random.normal(k_v, (batch, v_seq, d_model), dtype=jnp.float32)
    params = make_params(k_p, d_model, nhead, dim_ff)

    fwd = jax.jit(functools.partial(transformer_decoder_layer, nhead=nhead))
    out = jax.block_until_ready(fwd(query, value, params))

    ref = reference_forward(query, value, params, nhead)
    assert out.shape == (batch, q_seq, d_model)
    max_diff = float(jnp.max(jnp.abs(out - ref)))
    assert jnp.allclose(out, ref, atol=1e-4, rtol=1e-4), f"max abs diff {max_diff}"

    print("KERNEL_OK")
</pallas_src>

<mosaic_0001>
module attributes {stable_mosaic.version = 11 : i64} {
  func.func @_ln_ffn_kernel(%arg0: i32, %arg1: memref<16x32xf32, #tpu.memory_space<vmem>>, %arg2: memref<1x32xf32, #tpu.memory_space<vmem>>, %arg3: memref<1x32xf32, #tpu.memory_space<vmem>>, %arg4: memref<32x64xf32, #tpu.memory_space<vmem>>, %arg5: memref<1x64xf32, #tpu.memory_space<vmem>>, %arg6: memref<64x32xf32, #tpu.memory_space<vmem>>, %arg7: memref<1x32xf32, #tpu.memory_space<vmem>>, %arg8: memref<16x32xf32, #tpu.memory_space<vmem>>) attributes {dimension_semantics = [#tpu.dimension_semantics<parallel>], iteration_bounds = array<i64: 1>, scalar_prefetch = 0 : i64, scratch_operands = 0 : i64, tpu.core_type = #tpu.core_type<tc>, window_params = [{transform_indices = @transform_0, window_bounds = array<i64: 16, 32>}, {pipeline_mode = #tpu.pipeline_mode<synchronous>, transform_indices = @transform_1, window_bounds = array<i64: 1, 32>}, {pipeline_mode = #tpu.pipeline_mode<synchronous>, transform_indices = @transform_2, window_bounds = array<i64: 1, 32>}, {pipeline_mode = #tpu.pipeline_mode<synchronous>, transform_indices = @transform_3, window_bounds = array<i64: 32, 64>}, {pipeline_mode = #tpu.pipeline_mode<synchronous>, transform_indices = @transform_4, window_bounds = array<i64: 1, 64>}, {pipeline_mode = #tpu.pipeline_mode<synchronous>, transform_indices = @transform_5, window_bounds = array<i64: 64, 32>}, {pipeline_mode = #tpu.pipeline_mode<synchronous>, transform_indices = @transform_6, window_bounds = array<i64: 1, 32>}, {transform_indices = @transform_7, window_bounds = array<i64: 16, 32>}]} {
    %c0 = arith.constant 0 : index
    %c0_0 = arith.constant 0 : index
    %0 = vector.load %arg1[%c0, %c0_0] : memref<16x32xf32, #tpu.memory_space<vmem>>, vector<16x32xf32>
    %c0_1 = arith.constant 0 : index
    %c0_2 = arith.constant 0 : index
    %1 = vector.load %arg2[%c0_1, %c0_2] : memref<1x32xf32, #tpu.memory_space<vmem>>, vector<1x32xf32>
    %c0_3 = arith.constant 0 : index
    %c0_4 = arith.constant 0 : index
    %2 = vector.load %arg3[%c0_3, %c0_4] : memref<1x32xf32, #tpu.memory_space<vmem>>, vector<1x32xf32>
    %cst = arith.constant dense<0.000000e+00> : vector<16xf32>
    %3 = vector.multi_reduction <add>, %0, %cst [1] : vector<16x32xf32> to vector<16xf32>
    %4 = vector.shape_cast %3 : vector<16xf32> to vector<16x1xf32>
    %cst_5 = arith.constant 3.200000e+01 : f32
    %5 = vector.broadcast %cst_5 : f32 to vector<16x1xf32>
    %6 = arith.divf %4, %5 : vector<16x1xf32>
    %7 = vector.broadcast %6 : vector<16x1xf32> to vector<16x32xf32>
    %8 = arith.subf %0, %7 : vector<16x32xf32>
    %9 = arith.mulf %8, %8 : vector<16x32xf32>
    %cst_6 = arith.constant dense<0.000000e+00> : vector<16xf32>
    %10 = vector.multi_reduction <add>, %9, %cst_6 [1] : vector<16x32xf32> to vector<16xf32>
    %11 = vector.shape_cast %10 : vector<16xf32> to vector<16x1xf32>
    %cst_7 = arith.constant 3.200000e+01 : f32
    %12 = vector.broadcast %cst_7 : f32 to vector<16x1xf32>
    %13 = arith.divf %11, %12 : vector<16x1xf32>
    %cst_8 = arith.constant 9.99999974E-6 : f32
    %14 = vector.broadcast %cst_8 : f32 to vector<16x1xf32>
    %15 = arith.addf %13, %14 : vector<16x1xf32>
    %16 = math.rsqrt %15 : vector<16x1xf32>
    %17 = vector.broadcast %16 : vector<16x1xf32> to vector<16x32xf32>
    %18 = arith.mulf %8, %17 : vector<16x32xf32>
    %19 = vector.broadcast %1 : vector<1x32xf32> to vector<16x32xf32>
    %20 = arith.mulf %18, %19 : vector<16x32xf32>
    %21 = vector.broadcast %2 : vector<1x32xf32> to vector<16x32xf32>
    %22 = arith.addf %20, %21 : vector<16x32xf32>
    %c0_9 = arith.constant 0 : index
    %c0_10 = arith.constant 0 : index
    %23 = vector.load %arg4[%c0_9, %c0_10] : memref<32x64xf32, #tpu.memory_space<vmem>>, vector<32x64xf32>
    %cst_11 = arith.constant dense<0.000000e+00> : vector<16x64xf32>
    %24 = tpu.matmul %22, %23, %cst_11 {dimension_numbers = #tpu.dot_dimension_numbers<[1], [0], [0], [1], [0, 0, 1, 1], [], []>} : vector<16x32xf32>, vector<32x64xf32>, vector<16x64xf32> -> vector<16x64xf32>
    %c0_12 = arith.constant 0 : index
    %c0_13 = arith.constant 0 : index
    %25 = vector.load %arg5[%c0_12, %c0_13] : memref<1x64xf32, #tpu.memory_space<vmem>>, vector<1x64xf32>
    %26 = vector.broadcast %25 : vector<1x64xf32> to vector<16x64xf32>
    %27 = arith.addf %24, %26 : vector<16x64xf32>
    %cst_14 = arith.constant 5.000000e-01 : f32
    %28 = vector.broadcast %cst_14 : f32 to vector<16x64xf32>
    %29 = arith.mulf %28, %27 : vector<16x64xf32>
    %cst_15 = arith.constant 0.707106769 : f32
    %30 = vector.broadcast %cst_15 : f32 to vector<16x64xf32>
    %31 = arith.mulf %27, %30 : vector<16x64xf32>
    %cst_16 = arith.constant -4.000000e+00 : f32
    %cst_17 = arith.constant 4.000000e+00 : f32
    %32 = vector.broadcast %cst_16 : f32 to vector<16x64xf32>
    %33 = arith.maximumf %32, %31 : vector<16x64xf32>
    %34 = vector.broadcast %cst_17 : f32 to vector<16x64xf32>
    %35 = arith.minimumf %34, %33 : vector<16x64xf32>
    %36 = arith.mulf %35, %35 : vector<16x64xf32>
    %cst_18 = arith.constant -2.72614237E-10 : f32
    %37 = vector.broadcast %cst_18 : f32 to vector<16x64xf32>
    %38 = arith.mulf %37, %36 : vector<16x64xf32>
    %cst_19 = arith.constant 2.77068146E-8 : f32
    %39 = vector.broadcast %cst_19 : f32 to vector<16x64xf32>
    %40 = arith.addf %38, %39 : vector<16x64xf32>
    %41 = arith.mulf %40, %36 : vector<16x64xf32>
    %cst_20 = arith.constant -2.10102394E-6 : f32
    %42 = vector.broadcast %cst_20 : f32 to vector<16x64xf32>
    %43 = arith.addf %41, %42 : vector<16x64xf32>
    %44 = arith.mulf %43, %36 : vector<16x64xf32>
    %cst_21 = arith.constant -5.69250624E-5 : f32
    %45 = vector.broadcast %cst_21 : f32 to vector<16x64xf32>
    %46 = arith.addf %44, %45 : vector<16x64xf32>
    %47 = arith.mulf %46, %36 : vector<16x64xf32>
    %cst_22 = arith.constant -7.34990637E-4 : f32
    %48 = vector.broadcast %cst_22 : f32 to vector<16x64xf32>
    %49 = arith.addf %47, %48 : vector<16x64xf32>
    %50 = arith.mulf %49, %36 : vector<16x64xf32>
    %cst_23 = arith.constant -2.954600e-03 : f32
    %51 = vector.broadcast %cst_23 : f32 to vector<16x64xf32>
    %52 = arith.addf %50, %51 : vector<16x64xf32>
    %53 = arith.mulf %52, %36 : vector<16x64xf32>
    %cst_24 = arith.constant -0.0160960332 : f32
    %54 = vector.broadcast %cst_24 : f32 to vector<16x64xf32>
    %55 = arith.addf %53, %54 : vector<16x64xf32>
    %56 = arith.mulf %35, %55 : vector<16x64xf32>
    %cst_25 = arith.constant -1.45660715E-5 : f32
    %57 = vector.broadcast %cst_25 : f32 to vector<16x64xf32>
    %58 = arith.mulf %57, %36 : vector<16x64xf32>
    %cst_26 = arith.constant -2.13374049E-4 : f32
    %59 = vector.broadcast %cst_26 : f32 to vector<16x64xf32>
    %60 = arith.addf %58, %59 : vector<16x64xf32>
    %61 = arith.mulf %60, %36 : vector<16x64xf32>
    %cst_27 = arith.constant -0.00168282702 : f32
    %62 = vector.broadcast %cst_27 : f32 to vector<16x64xf32>
    %63 = arith.addf %61, %62 : vector<16x64xf32>
    %64 = arith.mulf %63, %36 : vector<16x64xf32>
    %cst_28 = arith.constant -0.00737332925 : f32
    %65 = vector.broadcast %cst_28 : f32 to vector<16x64xf32>
    %66 = arith.addf %64, %65 : vector<16x64xf32>
    %67 = arith.mulf %66, %36 : vector<16x64xf32>
    %cst_29 = arith.constant -0.0142647391 : f32
    %68 = vector.broadcast %cst_29 : f32 to vector<16x64xf32>
    %69 = arith.addf %67, %68 : vector<16x64xf32>
    %70 = arith.divf %56, %69 : vector<16x64xf32>
    %cst_30 = arith.constant 1.000000e+00 : f32
    %71 = vector.broadcast %cst_30 : f32 to vector<16x64xf32>
    %72 = arith.addf %71, %70 : vector<16x64xf32>
    %73 = arith.mulf %29, %72 : vector<16x64xf32>
    %c0_31 = arith.constant 0 : index
    %c0_32 = arith.constant 0 : index
    %74 = vector.load %arg6[%c0_31, %c0_32] : memref<64x32xf32, #tpu.memory_space<vmem>>, vector<64x32xf32>
    %cst_33 = arith.constant dense<0.000000e+00> : vector<16x32xf32>
    %75 = tpu.matmul %73, %74, %cst_33 {dimension_numbers = #tpu.dot_dimension_numbers<[1], [0], [0], [1], [0, 0, 1, 1], [], []>} : vector<16x64xf32>, vector<64x32xf32>, vector<16x32xf32> -> vector<16x32xf32>
    %c0_34 = arith.constant 0 : index
    %c0_35 = arith.constant 0 : index
    %76 = vector.load %arg7[%c0_34, %c0_35] : memref<1x32xf32, #tpu.memory_space<vmem>>, vector<1x32xf32>
    %77 = vector.broadcast %76 : vector<1x32xf32> to vector<16x32xf32>
    %78 = arith.addf %75, %77 : vector<16x32xf32>
    %79 = arith.addf %0, %78 : vector<16x32xf32>
    %c0_36 = arith.constant 0 : index
    %c0_37 = arith.constant 0 : index
    %80 = vector.load %arg8[%c0_36, %c0_37] : memref<16x32xf32, #tpu.memory_space<vmem>>, vector<16x32xf32>
    tpu.vector_store %arg8[%c0_36, %c0_37], %79 {strides = array<i32>} : memref<16x32xf32, #tpu.memory_space<vmem>>, vector<16x32xf32>,
    return
  }
  func.func @transform_0(%arg0: i32) -> (i32, i32) {
    %c0_i32 = arith.constant 0 : i32
    %c0_i32_0 = arith.constant 0 : i32
    return %arg0, %c0_i32 : i32, i32
  }
  func.func @transform_1(%arg0: i32) -> (i32, i32) {
    %c0_i32 = arith.constant 0 : i32
    %c0_i32_0 = arith.constant 0 : i32
    %c0_i32_1 = arith.constant 0 : i32
    return %c0_i32, %c0_i32_0 : i32, i32
  }
  func.func @transform_2(%arg0: i32) -> (i32, i32) {
    %c0_i32 = arith.constant 0 : i32
    %c0_i32_0 = arith.constant 0 : i32
    %c0_i32_1 = arith.constant 0 : i32
    return %c0_i32, %c0_i32_0 : i32, i32
  }
  func.func @transform_3(%arg0: i32) -> (i32, i32) {
    %c0_i32 = arith.constant 0 : i32
    %c0_i32_0 = arith.constant 0 : i32
    %c0_i32_1 = arith.constant 0 : i32
    return %c0_i32, %c0_i32_0 : i32, i32
  }
  func.func @transform_4(%arg0: i32) -> (i32, i32) {
    %c0_i32 = arith.constant 0 : i32
    %c0_i32_0 = arith.constant 0 : i32
    %c0_i32_1 = arith.constant 0 : i32
    return %c0_i32, %c0_i32_0 : i32, i32
  }
  func.func @transform_5(%arg0: i32) -> (i32, i32) {
    %c0_i32 = arith.constant 0 : i32
    %c0_i32_0 = arith.constant 0 : i32
    %c0_i32_1 = arith.constant 0 : i32
    return %c0_i32, %c0_i32_0 : i32, i32
  }
  func.func @transform_6(%arg0: i32) -> (i32, i32) {
    %c0_i32 = arith.constant 0 : i32
    %c0_i32_0 = arith.constant 0 : i32
    %c0_i32_1 = arith.constant 0 : i32
    return %c0_i32, %c0_i32_0 : i32, i32
  }
  func.func @transform_7(%arg0: i32) -> (i32, i32) {
    %c0_i32 = arith.constant 0 : i32
    %c0_i32_0 = arith.constant 0 : i32
    return %arg0, %c0_i32 : i32, i32
  }
}

module attributes {stable_mosaic.version = 11 : i64} {
  func.func @_attn_block_kernel(%arg0: i32, %arg1: memref<1x8x32xf32, #tpu.memory_space<vmem>>, %arg2: memref<1x32xf32, #tpu.memory_space<vmem>>, %arg3: memref<1x32xf32, #tpu.memory_space<vmem>>, %arg4: memref<32x32xf32, #tpu.memory_space<vmem>>, %arg5: memref<1x32xf32, #tpu.memory_space<vmem>>, %arg6: memref<32x32xf32, #tpu.memory_space<vmem>>, %arg7: memref<1x32xf32, #tpu.memory_space<vmem>>, %arg8: memref<32x32xf32, #tpu.memory_space<vmem>>, %arg9: memref<1x32xf32, #tpu.memory_space<vmem>>, %arg10: memref<32x32xf32, #tpu.memory_space<vmem>>, %arg11: memref<1x32xf32, #tpu.memory_space<vmem>>, %arg12: memref<1x8x32xf32, #tpu.memory_space<vmem>>, %arg13: memref<8x32xf32, #tpu.memory_space<vmem>>) attributes {dimension_semantics = [#tpu.dimension_semantics<parallel>], iteration_bounds = array<i64: 2>, scalar_prefetch = 0 : i64, scratch_operands = 1 : i64, tpu.core_type = #tpu.core_type<tc>, window_params = [{transform_indices = @transform_0, window_bounds = array<i64: 1, 8, 32>}, {pipeline_mode = #tpu.pipeline_mode<synchronous>, transform_indices = @transform_1, window_bounds = array<i64: 1, 32>}, {pipeline_mode = #tpu.pipeline_mode<synchronous>, transform_indices = @transform_2, window_bounds = array<i64: 1, 32>}, {pipeline_mode = #tpu.pipeline_mode<synchronous>, transform_indices = @transform_3, window_bounds = array<i64: 32, 32>}, {pipeline_mode = #tpu.pipeline_mode<synchronous>, transform_indices = @transform_4, window_bounds = array<i64: 1, 32>}, {pipeline_mode = #tpu.pipeline_mode<synchronous>, transform_indices = @transform_5, window_bounds = array<i64: 32, 32>}, {pipeline_mode = #tpu.pipeline_mode<synchronous>, transform_indices = @transform_6, window_bounds = array<i64: 1, 32>}, {pipeline_mode = #tpu.pipeline_mode<synchronous>, transform_indices = @transform_7, window_bounds = array<i64: 32, 32>}, {pipeline_mode = #tpu.pipeline_mode<synchronous>, transform_indices = @transform_8, window_bounds = array<i64: 1, 32>}, {pipeline_mode = #tpu.pipeline_mode<synchronous>, transform_indices = @transform_9, window_bounds = array<i64: 32, 32>}, {pipeline_mode = #tpu.pipeline_mode<synchronous>, transform_indices = @transform_10, window_bounds = array<i64: 1, 32>}, {transform_indices = @transform_11, window_bounds = array<i64: 1, 8, 32>}]} {
    %c0 = arith.constant 0 : index
    %c0_0 = arith.constant 0 : index
    %c0_1 = arith.constant 0 : index
    %0 = vector.load %arg1[%c0, %c0_0, %c0_1] : memref<1x8x32xf32, #tpu.memory_space<vmem>>, vector<1x8x32xf32>
    %1 = vector.shape_cast %0 : vector<1x8x32xf32> to vector<8x32xf32>
    %c0_2 = arith.constant 0 : index
    %c0_3 = arith.constant 0 : index
    %2 = vector.load %arg2[%c0_2, %c0_3] : memref<1x32xf32, #tpu.memory_space<vmem>>, vector<1x32xf32>
    %c0_4 = arith.constant 0 : index
    %c0_5 = arith.constant 0 : index
    %3 = vector.load %arg3[%c0_4, %c0_5] : memref<1x32xf32, #tpu.memory_space<vmem>>, vector<1x32xf32>
    %cst = arith.constant dense<0.000000e+00> : vector<8xf32>
    %4 = vector.multi_reduction <add>, %1, %cst [1] : vector<8x32xf32> to vector<8xf32>
    %5 = vector.shape_cast %4 : vector<8xf32> to vector<8x1xf32>
    %cst_6 = arith.constant 3.200000e+01 : f32
    %6 = vector.broadcast %cst_6 : f32 to vector<8x1xf32>
    %7 = arith.divf %5, %6 : vector<8x1xf32>
    %8 = vector.broadcast %7 : vector<8x1xf32> to vector<8x32xf32>
    %9 = arith.subf %1, %8 : vector<8x32xf32>
    %10 = arith.mulf %9, %9 : vector<8x32xf32>
    %cst_7 = arith.constant dense<0.000000e+00> : vector<8xf32>
    %11 = vector.multi_reduction <add>, %10, %cst_7 [1] : vector<8x32xf32> to vector<8xf32>
    %12 = vector.shape_cast %11 : vector<8xf32> to vector<8x1xf32>
    %cst_8 = arith.constant 3.200000e+01 : f32
    %13 = vector.broadcast %cst_8 : f32 to vector<8x1xf32>
    %14 = arith.divf %12, %13 : vector<8x1xf32>
    %cst_9 = arith.constant 9.99999974E-6 : f32
    %15 = vector.broadcast %cst_9 : f32 to vector<8x1xf32>
    %16 = arith.addf %14, %15 : vector<8x1xf32>
    %17 = math.rsqrt %16 : vector<8x1xf32>
    %18 = vector.broadcast %17 : vector<8x1xf32> to vector<8x32xf32>
    %19 = arith.mulf %9, %18 : vector<8x32xf32>
    %20 = vector.broadcast %2 : vector<1x32xf32> to vector<8x32xf32>
    %21 = arith.mulf %19, %20 : vector<8x32xf32>
    %22 = vector.broadcast %3 : vector<1x32xf32> to vector<8x32xf32>
    %23 = arith.addf %21, %22 : vector<8x32xf32>
    %c0_10 = arith.constant 0 : index
    %c0_11 = arith.constant 0 : index
    %24 = vector.load %arg4[%c0_10, %c0_11] : memref<32x32xf32, #tpu.memory_space<vmem>>, vector<32x32xf32>
    %cst_12 = arith.constant dense<0.000000e+00> : vector<8x32xf32>
    %25 = tpu.matmul %23, %24, %cst_12 {dimension_numbers = #tpu.dot_dimension_numbers<[1], [0], [0], [1], [0, 0, 1, 1], [], []>} : vector<8x32xf32>, vector<32x32xf32>, vector<8x32xf32> -> vector<8x32xf32>
    %c0_13 = arith.constant 0 : index
    %c0_14 = arith.constant 0 : index
    %26 = vector.load %arg5[%c0_13, %c0_14] : memref<1x32xf32, #tpu.memory_space<vmem>>, vector<1x32xf32>
    %27 = vector.broadcast %26 : vector<1x32xf32> to vector<8x32xf32>
    %28 = arith.addf %25, %27 : vector<8x32xf32>
    %c0_15 = arith.constant 0 : index
    %c0_16 = arith.constant 0 : index
    %29 = vector.load %arg6[%c0_15, %c0_16] : memref<32x32xf32, #tpu.memory_space<vmem>>, vector<32x32xf32>
    %cst_17 = arith.constant dense<0.000000e+00> : vector<8x32xf32>
    %30 = tpu.matmul %23, %29, %cst_17 {dimension_numbers = #tpu.dot_dimension_numbers<[1], [0], [0], [1], [0, 0, 1, 1], [], []>} : vector<8x32xf32>, vector<32x32xf32>, vector<8x32xf32> -> vector<8x32xf32>
    %c0_18 = arith.constant 0 : index
    %c0_19 = arith.constant 0 : index
    %31 = vector.load %arg7[%c0_18, %c0_19] : memref<1x32xf32, #tpu.memory_space<vmem>>, vector<1x32xf32>
    %32 = vector.broadcast %31 : vector<1x32xf32> to vector<8x32xf32>
    %33 = arith.addf %30, %32 : vector<8x32xf32>
    %c0_20 = arith.constant 0 : index
    %c0_21 = arith.constant 0 : index
    %34 = vector.load %arg8[%c0_20, %c0_21] : memref<32x32xf32, #tpu.memory_space<vmem>>, vector<32x32xf32>
    %cst_22 = arith.constant dense<0.000000e+00> : vector<8x32xf32>
    %35 = tpu.matmul %23, %34, %cst_22 {dimension_numbers = #tpu.dot_dimension_numbers<[1], [0], [0], [1], [0, 0, 1, 1], [], []>} : vector<8x32xf32>, vector<32x32xf32>, vector<8x32xf32> -> vector<8x32xf32>
    %c0_23 = arith.constant 0 : index
    %c0_24 = arith.constant 0 : index
    %36 = vector.load %arg9[%c0_23, %c0_24] : memref<1x32xf32, #tpu.memory_space<vmem>>, vector<1x32xf32>
    %37 = vector.broadcast %36 : vector<1x32xf32> to vector<8x32xf32>
    %38 = arith.addf %35, %37 : vector<8x32xf32>
    %39 = vector.extract_strided_slice %28 {offsets = [0, 0], sizes = [8, 8], strides = [1, 1]} : vector<8x32xf32> to vector<8x8xf32>
    %40 = vector.extract_strided_slice %33 {offsets = [0, 0], sizes = [8, 8], strides = [1, 1]} : vector<8x32xf32> to vector<8x8xf32>
    %41 = vector.extract_strided_slice %38 {offsets = [0, 0], sizes = [8, 8], strides = [1, 1]} : vector<8x32xf32> to vector<8x8xf32>
    %cst_25 = arith.constant dense<0.000000e+00> : vector<8x8xf32>
    %42 = tpu.matmul %39, %40, %cst_25 {dimension_numbers = #tpu.dot_dimension_numbers<[1], [1], [0], [0], [0, 0, 1, 0], [], []>} : vector<8x8xf32>, vector<8x8xf32>, vector<8x8xf32> -> vector<8x8xf32>
    %cst_26 = arith.constant 0.353553385 : f32
    %43 = vector.broadcast %cst_26 : f32 to vector<8x8xf32>
    %44 = arith.mulf %42, %43 : vector<8x8xf32>
    %cst_27 = arith.constant dense<0xFF800000> : vector<8xf32>
    %45 = vector.multi_reduction <maximumf>, %44, %cst_27 [1] : vector<8x8xf32> to vector<8xf32>
    %46 = vector.shape_cast %45 : vector<8xf32> to vector<8x1xf32>
    %47 = vector.broadcast %46 : vector<8x1xf32> to vector<8x8xf32>
    %48 = arith.subf %44, %47 : vector<8x8xf32>
    %49 = math.exp %48 : vector<8x8xf32>
    %cst_28 = arith.constant dense<0.000000e+00> : vector<8xf32>
    %50 = vector.multi_reduction <add>, %49, %cst_28 [1] : vector<8x8xf32> to vector<8xf32>
    %51 = vector.shape_cast %50 : vector<8xf32> to vector<8x1xf32>
    %cst_29 = arith.constant dense<0.000000e+00> : vector<8x8xf32>
    %52 = tpu.matmul %49, %41, %cst_29 {dimension_numbers = #tpu.dot_dimension_numbers<[1], [0], [0], [1], [0, 0, 1, 1], [], []>} : vector<8x8xf32>, vector<8x8xf32>, vector<8x8xf32> -> vector<8x8xf32>
    %53 = vector.broadcast %51 : vector<8x1xf32> to vector<8x8xf32>
    %54 = arith.divf %52, %53 : vector<8x8xf32>
    %c0_30 = arith.constant 0 : index
    %c0_31 = arith.constant 0 : index
    %55 = vector.load %arg13[%c0_30, %c0_31] : memref<8x32xf32, #tpu.memory_space<vmem>>, vector<8x8xf32>
    tpu.vector_store %arg13[%c0_30, %c0_31], %54 {strides = array<i32>} : memref<8x32xf32, #tpu.memory_space<vmem>>, vector<8x8xf32>,
    %56 = vector.extract_strided_slice %28 {offsets = [0, 8], sizes = [8, 8], strides = [1, 1]} : vector<8x32xf32> to vector<8x8xf32>
    %57 = vector.extract_strided_slice %33 {offsets = [0, 8], sizes = [8, 8], strides = [1, 1]} : vector<8x32xf32> to vector<8x8xf32>
    %58 = vector.extract_strided_slice %38 {offsets = [0, 8], sizes = [8, 8], strides = [1, 1]} : vector<8x32xf32> to vector<8x8xf32>
    %cst_32 = arith.constant dense<0.000000e+00> : vector<8x8xf32>
    %59 = tpu.matmul %56, %57, %cst_32 {dimension_numbers = #tpu.dot_dimension_numbers<[1], [1], [0], [0], [0, 0, 1, 0], [], []>} : vector<8x8xf32>, vector<8x8xf32>, vector<8x8xf32> -> vector<8x8xf32>
    %cst_33 = arith.constant 0.353553385 : f32
    %60 = vector.broadcast %cst_33 : f32 to vector<8x8xf32>
    %61 = arith.mulf %59, %60 : vector<8x8xf32>
    %cst_34 = arith.constant dense<0xFF800000> : vector<8xf32>
    %62 = vector.multi_reduction <maximumf>, %61, %cst_34 [1] : vector<8x8xf32> to vector<8xf32>
    %63 = vector.shape_cast %62 : vector<8xf32> to vector<8x1xf32>
    %64 = vector.broadcast %63 : vector<8x1xf32> to vector<8x8xf32>
    %65 = arith.subf %61, %64 : vector<8x8xf32>
    %66 = math.exp %65 : vector<8x8xf32>
    %cst_35 = arith.constant dense<0.000000e+00> : vector<8xf32>
    %67 = vector.multi_reduction <add>, %66, %cst_35 [1] : vector<8x8xf32> to vector<8xf32>
    %68 = vector.shape_cast %67 : vector<8xf32> to vector<8x1xf32>
    %cst_36 = arith.constant dense<0.000000e+00> : vector<8x8xf32>
    %69 = tpu.matmul %66, %58, %cst_36 {dimension_numbers = #tpu.dot_dimension_numbers<[1], [0], [0], [1], [0, 0, 1, 1], [], []>} : vector<8x8xf32>, vector<8x8xf32>, vector<8x8xf32> -> vector<8x8xf32>
    %70 = vector.broadcast %68 : vector<8x1xf32> to vector<8x8xf32>
    %71 = arith.divf %69, %70 : vector<8x8xf32>
    %c0_37 = arith.constant 0 : index
    %c8 = arith.constant 8 : index
    %72 = vector.load %arg13[%c0_37, %c8] : memref<8x32xf32, #tpu.memory_space<vmem>>, vector<8x8xf32>
    tpu.vector_store %arg13[%c0_37, %c8], %71 {strides = array<i32>} : memref<8x32xf32, #tpu.memory_space<vmem>>, vector<8x8xf32>,
    %73 = vector.extract_strided_slice %28 {offsets = [0, 16], sizes = [8, 8], strides = [1, 1]} : vector<8x32xf32> to vector<8x8xf32>
    %74 = vector.extract_strided_slice %33 {offsets = [0, 16], sizes = [8, 8], strides = [1, 1]} : vector<8x32xf32> to vector<8x8xf32>
    %75 = vector.extract_strided_slice %38 {offsets = [0, 16], sizes = [8, 8], strides = [1, 1]} : vector<8x32xf32> to vector<8x8xf32>
    %cst_38 = arith.constant dense<0.000000e+00> : vector<8x8xf32>
    %76 = tpu.matmul %73, %74, %cst_38 {dimension_numbers = #tpu.dot_dimension_numbers<[1], [1], [0], [0], [0, 0, 1, 0], [], []>} : vector<8x8xf32>, vector<8x8xf32>, vector<8x8xf32> -> vector<8x8xf32>
    %cst_39 = arith.constant 0.353553385 : f32
    %77 = vector.broadcast %cst_39 : f32 to vector<8x8xf32>
    %78 = arith.mulf %76, %77 : vector<8x8xf32>
    %cst_40 = arith.constant dense<0xFF800000> : vector<8xf32>
    %79 = vector.multi_reduction <maximumf>, %78, %cst_40 [1] : vector<8x8xf32> to vector<8xf32>
    %80 = vector.shape_cast %79 : vector<8xf32> to vector<8x1xf32>
    %81 = vector.broadcast %80 : vector<8x1xf32> to vector<8x8xf32>
    %82 = arith.subf %78, %81 : vector<8x8xf32>
    %83 = math.exp %82 : vector<8x8xf32>
    %cst_41 = arith.constant dense<0.000000e+00> : vector<8xf32>
    %84 = vector.multi_reduction <add>, %83, %cst_41 [1] : vector<8x8xf32> to vector<8xf32>
    %85 = vector.shape_cast %84 : vector<8xf32> to vector<8x1xf32>
    %cst_42 = arith.constant dense<0.000000e+00> : vector<8x8xf32>
    %86 = tpu.matmul %83, %75, %cst_42 {dimension_numbers = #tpu.dot_dimension_numbers<[1], [0], [0], [1], [0, 0, 1, 1], [], []>} : vector<8x8xf32>, vector<8x8xf32>, vector<8x8xf32> -> vector<8x8xf32>
    %87 = vector.broadcast %85 : vector<8x1xf32> to vector<8x8xf32>
    %88 = arith.divf %86, %87 : vector<8x8xf32>
    %c0_43 = arith.constant 0 : index
    %c16 = arith.constant 16 : index
    %89 = vector.load %arg13[%c0_43, %c16] : memref<8x32xf32, #tpu.memory_space<vmem>>, vector<8x8xf32>
    tpu.vector_store %arg13[%c0_43, %c16], %88 {strides = array<i32>} : memref<8x32xf32, #tpu.memory_space<vmem>>, vector<8x8xf32>,
    %90 = vector.extract_strided_slice %28 {offsets = [0, 24], sizes = [8, 8], strides = [1, 1]} : vector<8x32xf32> to vector<8x8xf32>
    %91 = vector.extract_strided_slice %33 {offsets = [0, 24], sizes = [8, 8], strides = [1, 1]} : vector<8x32xf32> to vector<8x8xf32>
    %92 = vector.extract_strided_slice %38 {offsets = [0, 24], sizes = [8, 8], strides = [1, 1]} : vector<8x32xf32> to vector<8x8xf32>
    %cst_44 = arith.constant dense<0.000000e+00> : vector<8x8xf32>
    %93 = tpu.matmul %90, %91, %cst_44 {dimension_numbers = #tpu.dot_dimension_numbers<[1], [1], [0], [0], [0, 0, 1, 0], [], []>} : vector<8x8xf32>, vector<8x8xf32>, vector<8x8xf32> -> vector<8x8xf32>
    %cst_45 = arith.constant 0.353553385 : f32
    %94 = vector.broadcast %cst_45 : f32 to vector<8x8xf32>
    %95 = arith.mulf %93, %94 : vector<8x8xf32>
    %cst_46 = arith.constant dense<0xFF800000> : vector<8xf32>
    %96 = vector.multi_reduction <maximumf>, %95, %cst_46 [1] : vector<8x8xf32> to vector<8xf32>
    %97 = vector.shape_cast %96 : vector<8xf32> to vector<8x1xf32>
    %98 = vector.broadcast %97 : vector<8x1xf32> to vector<8x8xf32>
    %99 = arith.subf %95, %98 : vector<8x8xf32>
    %100 = math.exp %99 : vector<8x8xf32>
    %cst_47 = arith.constant dense<0.000000e+00> : vector<8xf32>
    %101 = vector.multi_reduction <add>, %100, %cst_47 [1] : vector<8x8xf32> to vector<8xf32>
    %102 = vector.shape_cast %101 : vector<8xf32> to vector<8x1xf32>
    %cst_48 = arith.constant dense<0.000000e+00> : vector<8x8xf32>
    %103 = tpu.matmul %100, %92, %cst_48 {dimension_numbers = #tpu.dot_dimension_numbers<[1], [0], [0], [1], [0, 0, 1, 1], [], []>} : vector<8x8xf32>, vector<8x8xf32>, vector<8x8xf32> -> vector<8x8xf32>
    %104 = vector.broadcast %102 : vector<8x1xf32> to vector<8x8xf32>
    %105 = arith.divf %103, %104 : vector<8x8xf32>
    %c0_49 = arith.constant 0 : index
    %c24 = arith.constant 24 : index
    %106 = vector.load %arg13[%c0_49, %c24] : memref<8x32xf32, #tpu.memory_space<vmem>>, vector<8x8xf32>
    tpu.vector_store %arg13[%c0_49, %c24], %105 {strides = array<i32>} : memref<8x32xf32, #tpu.memory_space<vmem>>, vector<8x8xf32>,
    %c0_50 = arith.constant 0 : index
    %c0_51 = arith.constant 0 : index
    %107 = vector.load %arg13[%c0_50, %c0_51] : memref<8x32xf32, #tpu.memory_space<vmem>>, vector<8x32xf32>
    %c0_52 = arith.constant 0 : index
    %c0_53 = arith.constant 0 : index
    %108 = vector.load %arg10[%c0_52, %c0_53] : memref<32x32xf32, #tpu.memory_space<vmem>>, vector<32x32xf32>
    %cst_54 = arith.constant dense<0.000000e+00> : vector<8x32xf32>
    %109 = tpu.matmul %107, %108, %cst_54 {dimension_numbers = #tpu.dot_dimension_numbers<[1], [0], [0], [1], [0, 0, 1, 1], [], []>} : vector<8x32xf32>, vector<32x32xf32>, vector<8x32xf32> -> vector<8x32xf32>
    %c0_55 = arith.constant 0 : index
    %c0_56 = arith.constant 0 : index
    %110 = vector.load %arg11[%c0_55, %c0_56] : memref<1x32xf32, #tpu.memory_space<vmem>>, vector<1x32xf32>
    %111 = vector.broadcast %110 : vector<1x32xf32> to vector<8x32xf32>
    %112 = arith.addf %109, %111 : vector<8x32xf32>
    %113 = arith.addf %1, %112 : vector<8x32xf32>
    %c0_57 = arith.constant 0 : index
    %c0_58 = arith.constant 0 : index
    %c0_59 = arith.constant 0 : index
    %114 = vector.load %arg12[%c0_57, %c0_58, %c0_59] : memref<1x8x32xf32, #tpu.memory_space<vmem>>, vector<1x8x32xf32>
    %115 = vector.shape_cast %114 : vector<1x8x32xf32> to vector<8x32xf32>
    %116 = vector.shape_cast %113 : vector<8x32xf32> to vector<1x8x32xf32>
    tpu.vector_store %arg12[%c0_57, %c0_58, %c0_59], %116 {strides = array<i32>} : memref<1x8x32xf32, #tpu.memory_space<vmem>>, vector<1x8x32xf32>,
    return
  }
  func.func @transform_0(%arg0: i32) -> (i32, i32, i32) {
    %c0_i32 = arith.constant 0 : i32
    %c0_i32_0 = arith.constant 0 : i32
    %c0_i32_1 = arith.constant 0 : i32
    return %arg0, %c0_i32, %c0_i32_0 : i32, i32, i32
  }
  func.func @transform_1(%arg0: i32) -> (i32, i32) {
    %c0_i32 = arith.constant 0 : i32
    %c0_i32_0 = arith.constant 0 : i32
    %c0_i32_1 = arith.constant 0 : i32
    return %c0_i32, %c0_i32_0 : i32, i32
  }
  func.func @transform_2(%arg0: i32) -> (i32, i32) {
    %c0_i32 = arith.constant 0 : i32
    %c0_i32_0 = arith.constant 0 : i32
    %c0_i32_1 = arith.constant 0 : i32
    return %c0_i32, %c0_i32_0 : i32, i32
  }
  func.func @transform_3(%arg0: i32) -> (i32, i32) {
    %c0_i32 = arith.constant 0 : i32
    %c0_i32_0 = arith.constant 0 : i32
    %c0_i32_1 = arith.constant 0 : i32
    return %c0_i32, %c0_i32_0 : i32, i32
  }
  func.func @transform_4(%arg0: i32) -> (i32, i32) {
    %c0_i32 = arith.constant 0 : i32
    %c0_i32_0 = arith.constant 0 : i32
    %c0_i32_1 = arith.constant 0 : i32
    return %c0_i32, %c0_i32_0 : i32, i32
  }
  func.func @transform_5(%arg0: i32) -> (i32, i32) {
    %c0_i32 = arith.constant 0 : i32
    %c0_i32_0 = arith.constant 0 : i32
    %c0_i32_1 = arith.constant 0 : i32
    return %c0_i32, %c0_i32_0 : i32, i32
  }
  func.func @transform_6(%arg0: i32) -> (i32, i32) {
    %c0_i32 = arith.constant 0 : i32
    %c0_i32_0 = arith.constant 0 : i32
    %c0_i32_1 = arith.constant 0 : i32
    return %c0_i32, %c0_i32_0 : i32, i32
  }
  func.func @transform_7(%arg0: i32) -> (i32, i32) {
    %c0_i32 = arith.constant 0 : i32
    %c0_i32_0 = arith.constant 0 : i32
    %c0_i32_1 = arith.constant 0 : i32
    return %c0_i32, %c0_i32_0 : i32, i32
  }
  func.func @transform_8(%arg0: i32) -> (i32, i32) {
    %c0_i32 = arith.constant 0 : i32
    %c0_i32_0 = arith.constant 0 : i32
    %c0_i32_1 = arith.constant 0 : i32
    return %c0_i32, %c0_i32_0 : i32, i32
  }
  func.func @transform_9(%arg0: i32) -> (i32, i32) {
    %c0_i32 = arith.constant 0 : i32
    %c0_i32_0 = arith.constant 0 : i32
    %c0_i32_1 = arith.constant 0 : i32
    return %c0_i32, %c0_i32_0 : i32, i32
  }
  func.func @transform_10(%arg0: i32) -> (i32, i32) {
    %c0_i32 = arith.constant 0 : i32
    %c0_i32_0 = arith.constant 0 : i32
    %c0_i32_1 = arith.constant 0 : i32
    return %c0_i32, %c0_i32_0 : i32, i32
  }
  func.func @transform_11(%arg0: i32) -> (i32, i32, i32) {
    %c0_i32 = arith.constant 0 : i32
    %c0_i32_0 = arith.constant 0 : i32
    %c0_i32_1 = arith.constant 0 : i32
    return %arg0, %c0_i32, %c0_i32_0 : i32, i32, i32
  }
}

module attributes {stable_mosaic.version = 11 : i64} {
  func.func @_attn_block_kernel(%arg0: i32, %arg1: memref<1x8x32xf32, #tpu.memory_space<vmem>>, %arg2: memref<1x16x32xf32, #tpu.memory_space<vmem>>, %arg3: memref<1x32xf32, #tpu.memory_space<vmem>>, %arg4: memref<1x32xf32, #tpu.memory_space<vmem>>, %arg5: memref<32x32xf32, #tpu.memory_space<vmem>>, %arg6: memref<1x32xf32, #tpu.memory_space<vmem>>, %arg7: memref<32x32xf32, #tpu.memory_space<vmem>>, %arg8: memref<1x32xf32, #tpu.memory_space<vmem>>, %arg9: memref<32x32xf32, #tpu.memory_space<vmem>>, %arg10: memref<1x32xf32, #tpu.memory_space<vmem>>, %arg11: memref<32x32xf32, #tpu.memory_space<vmem>>, %arg12: memref<1x32xf32, #tpu.memory_space<vmem>>, %arg13: memref<1x8x32xf32, #tpu.memory_space<vmem>>, %arg14: memref<8x32xf32, #tpu.memory_space<vmem>>) attributes {dimension_semantics = [#tpu.dimension_semantics<parallel>], iteration_bounds = array<i64: 2>, scalar_prefetch = 0 : i64, scratch_operands = 1 : i64, tpu.core_type = #tpu.core_type<tc>, window_params = [{transform_indices = @transform_0, window_bounds = array<i64: 1, 8, 32>}, {transform_indices = @transform_1, window_bounds = array<i64: 1, 16, 32>}, {pipeline_mode = #tpu.pipeline_mode<synchronous>, transform_indices = @transform_2, window_bounds = array<i64: 1, 32>}, {pipeline_mode = #tpu.pipeline_mode<synchronous>, transform_indices = @transform_3, window_bounds = array<i64: 1, 32>}, {pipeline_mode = #tpu.pipeline_mode<synchronous>, transform_indices = @transform_4, window_bounds = array<i64: 32, 32>}, {pipeline_mode = #tpu.pipeline_mode<synchronous>, transform_indices = @transform_5, window_bounds = array<i64: 1, 32>}, {pipeline_mode = #tpu.pipeline_mode<synchronous>, transform_indices = @transform_6, window_bounds = array<i64: 32, 32>}, {pipeline_mode = #tpu.pipeline_mode<synchronous>, transform_indices = @transform_7, window_bounds = array<i64: 1, 32>}, {pipeline_mode = #tpu.pipeline_mode<synchronous>, transform_indices = @transform_8, window_bounds = array<i64: 32, 32>}, {pipeline_mode = #tpu.pipeline_mode<synchronous>, transform_indices = @transform_9, window_bounds = array<i64: 1, 32>}, {pipeline_mode = #tpu.pipeline_mode<synchronous>, transform_indices = @transform_10, window_bounds = array<i64: 32, 32>}, {pipeline_mode = #tpu.pipeline_mode<synchronous>, transform_indices = @transform_11, window_bounds = array<i64: 1, 32>}, {transform_indices = @transform_12, window_bounds = array<i64: 1, 8, 32>}]} {
    %c0 = arith.constant 0 : index
    %c0_0 = arith.constant 0 : index
    %c0_1 = arith.constant 0 : index
    %0 = vector.load %arg1[%c0, %c0_0, %c0_1] : memref<1x8x32xf32, #tpu.memory_space<vmem>>, vector<1x8x32xf32>
    %1 = vector.shape_cast %0 : vector<1x8x32xf32> to vector<8x32xf32>
    %c0_2 = arith.constant 0 : index
    %c0_3 = arith.constant 0 : index
    %2 = vector.load %arg3[%c0_2, %c0_3] : memref<1x32xf32, #tpu.memory_space<vmem>>, vector<1x32xf32>
    %c0_4 = arith.constant 0 : index
    %c0_5 = arith.constant 0 : index
    %3 = vector.load %arg4[%c0_4, %c0_5] : memref<1x32xf32, #tpu.memory_space<vmem>>, vector<1x32xf32>
    %cst = arith.constant dense<0.000000e+00> : vector<8xf32>
    %4 = vector.multi_reduction <add>, %1, %cst [1] : vector<8x32xf32> to vector<8xf32>
    %5 = vector.shape_cast %4 : vector<8xf32> to vector<8x1xf32>
    %cst_6 = arith.constant 3.200000e+01 : f32
    %6 = vector.broadcast %cst_6 : f32 to vector<8x1xf32>
    %7 = arith.divf %5, %6 : vector<8x1xf32>
    %8 = vector.broadcast %7 : vector<8x1xf32> to vector<8x32xf32>
    %9 = arith.subf %1, %8 : vector<8x32xf32>
    %10 = arith.mulf %9, %9 : vector<8x32xf32>
    %cst_7 = arith.constant dense<0.000000e+00> : vector<8xf32>
    %11 = vector.multi_reduction <add>, %10, %cst_7 [1] : vector<8x32xf32> to vector<8xf32>
    %12 = vector.shape_cast %11 : vector<8xf32> to vector<8x1xf32>
    %cst_8 = arith.constant 3.200000e+01 : f32
    %13 = vector.broadcast %cst_8 : f32 to vector<8x1xf32>
    %14 = arith.divf %12, %13 : vector<8x1xf32>
    %cst_9 = arith.constant 9.99999974E-6 : f32
    %15 = vector.broadcast %cst_9 : f32 to vector<8x1xf32>
    %16 = arith.addf %14, %15 : vector<8x1xf32>
    %17 = math.rsqrt %16 : vector<8x1xf32>
    %18 = vector.broadcast %17 : vector<8x1xf32> to vector<8x32xf32>
    %19 = arith.mulf %9, %18 : vector<8x32xf32>
    %20 = vector.broadcast %2 : vector<1x32xf32> to vector<8x32xf32>
    %21 = arith.mulf %19, %20 : vector<8x32xf32>
    %22 = vector.broadcast %3 : vector<1x32xf32> to vector<8x32xf32>
    %23 = arith.addf %21, %22 : vector<8x32xf32>
    %c0_10 = arith.constant 0 : index
    %c0_11 = arith.constant 0 : index
    %c0_12 = arith.constant 0 : index
    %24 = vector.load %arg2[%c0_10, %c0_11, %c0_12] : memref<1x16x32xf32, #tpu.memory_space<vmem>>, vector<1x16x32xf32>
    %25 = vector.shape_cast %24 : vector<1x16x32xf32> to vector<16x32xf32>
    %c0_13 = arith.constant 0 : index
    %c0_14 = arith.constant 0 : index
    %26 = vector.load %arg5[%c0_13, %c0_14] : memref<32x32xf32, #tpu.memory_space<vmem>>, vector<32x32xf32>
    %cst_15 = arith.constant dense<0.000000e+00> : vector<8x32xf32>
    %27 = tpu.matmul %23, %26, %cst_15 {dimension_numbers = #tpu.dot_dimension_numbers<[1], [0], [0], [1], [0, 0, 1, 1], [], []>} : vector<8x32xf32>, vector<32x32xf32>, vector<8x32xf32> -> vector<8x32xf32>
    %c0_16 = arith.constant 0 : index
    %c0_17 = arith.constant 0 : index
    %28 = vector.load %arg6[%c0_16, %c0_17] : memref<1x32xf32, #tpu.memory_space<vmem>>, vector<1x32xf32>
    %29 = vector.broadcast %28 : vector<1x32xf32> to vector<8x32xf32>
    %30 = arith.addf %27, %29 : vector<8x32xf32>
    %c0_18 = arith.constant 0 : index
    %c0_19 = arith.constant 0 : index
    %31 = vector.load %arg7[%c0_18, %c0_19] : memref<32x32xf32, #tpu.memory_space<vmem>>, vector<32x32xf32>
    %cst_20 = arith.constant dense<0.000000e+00> : vector<16x32xf32>
    %32 = tpu.matmul %25, %31, %cst_20 {dimension_numbers = #tpu.dot_dimension_numbers<[1], [0], [0], [1], [0, 0, 1, 1], [], []>} : vector<16x32xf32>, vector<32x32xf32>, vector<16x32xf32> -> vector<16x32xf32>
    %c0_21 = arith.constant 0 : index
    %c0_22 = arith.constant 0 : index
    %33 = vector.load %arg8[%c0_21, %c0_22] : memref<1x32xf32, #tpu.memory_space<vmem>>, vector<1x32xf32>
    %34 = vector.broadcast %33 : vector<1x32xf32> to vector<16x32xf32>
    %35 = arith.addf %32, %34 : vector<16x32xf32>
    %c0_23 = arith.constant 0 : index
    %c0_24 = arith.constant 0 : index
    %36 = vector.load %arg9[%c0_23, %c0_24] : memref<32x32xf32, #tpu.memory_space<vmem>>, vector<32x32xf32>
    %cst_25 = arith.constant dense<0.000000e+00> : vector<16x32xf32>
    %37 = tpu.matmul %25, %36, %cst_25 {dimension_numbers = #tpu.dot_dimension_numbers<[1], [0], [0], [1], [0, 0, 1, 1], [], []>} : vector<16x32xf32>, vector<32x32xf32>, vector<16x32xf32> -> vector<16x32xf32>
    %c0_26 = arith.constant 0 : index
    %c0_27 = arith.constant 0 : index
    %38 = vector.load %arg10[%c0_26, %c0_27] : memref<1x32xf32, #tpu.memory_space<vmem>>, vector<1x32xf32>
    %39 = vector.broadcast %38 : vector<1x32xf32> to vector<16x32xf32>
    %40 = arith.addf %37, %39 : vector<16x32xf32>
    %41 = vector.extract_strided_slice %30 {offsets = [0, 0], sizes = [8, 8], strides = [1, 1]} : vector<8x32xf32> to vector<8x8xf32>
    %42 = vector.extract_strided_slice %35 {offsets = [0, 0], sizes = [16, 8], strides = [1, 1]} : vector<16x32xf32> to vector<16x8xf32>
    %43 = vector.extract_strided_slice %40 {offsets = [0, 0], sizes = [16, 8], strides = [1, 1]} : vector<16x32xf32> to vector<16x8xf32>
    %cst_28 = arith.constant dense<0.000000e+00> : vector<8x16xf32>
    %44 = tpu.matmul %41, %42, %cst_28 {dimension_numbers = #tpu.dot_dimension_numbers<[1], [1], [0], [0], [0, 0, 1, 0], [], []>} : vector<8x8xf32>, vector<16x8xf32>, vector<8x16xf32> -> vector<8x16xf32>
    %cst_29 = arith.constant 0.353553385 : f32
    %45 = vector.broadcast %cst_29 : f32 to vector<8x16xf32>
    %46 = arith.mulf %44, %45 : vector<8x16xf32>
    %cst_30 = arith.constant dense<0xFF800000> : vector<8xf32>
    %47 = vector.multi_reduction <maximumf>, %46, %cst_30 [1] : vector<8x16xf32> to vector<8xf32>
    %48 = vector.shape_cast %47 : vector<8xf32> to vector<8x1xf32>
    %49 = vector.broadcast %48 : vector<8x1xf32> to vector<8x16xf32>
    %50 = arith.subf %46, %49 : vector<8x16xf32>
    %51 = math.exp %50 : vector<8x16xf32>
    %cst_31 = arith.constant dense<0.000000e+00> : vector<8xf32>
    %52 = vector.multi_reduction <add>, %51, %cst_31 [1] : vector<8x16xf32> to vector<8xf32>
    %53 = vector.shape_cast %52 : vector<8xf32> to vector<8x1xf32>
    %cst_32 = arith.constant dense<0.000000e+00> : vector<8x8xf32>
    %54 = tpu.matmul %51, %43, %cst_32 {dimension_numbers = #tpu.dot_dimension_numbers<[1], [0], [0], [1], [0, 0, 1, 1], [], []>} : vector<8x16xf32>, vector<16x8xf32>, vector<8x8xf32> -> vector<8x8xf32>
    %55 = vector.broadcast %53 : vector<8x1xf32> to vector<8x8xf32>
    %56 = arith.divf %54, %55 : vector<8x8xf32>
    %c0_33 = arith.constant 0 : index
    %c0_34 = arith.constant 0 : index
    %57 = vector.load %arg14[%c0_33, %c0_34] : memref<8x32xf32, #tpu.memory_space<vmem>>, vector<8x8xf32>
    tpu.vector_store %arg14[%c0_33, %c0_34], %56 {strides = array<i32>} : memref<8x32xf32, #tpu.memory_space<vmem>>, vector<8x8xf32>,
    %58 = vector.extract_strided_slice %30 {offsets = [0, 8], sizes = [8, 8], strides = [1, 1]} : vector<8x32xf32> to vector<8x8xf32>
    %59 = vector.extract_strided_slice %35 {offsets = [0, 8], sizes = [16, 8], strides = [1, 1]} : vector<16x32xf32> to vector<16x8xf32>
    %60 = vector.extract_strided_slice %40 {offsets = [0, 8], sizes = [16, 8], strides = [1, 1]} : vector<16x32xf32> to vector<16x8xf32>
    %cst_35 = arith.constant dense<0.000000e+00> : vector<8x16xf32>
    %61 = tpu.matmul %58, %59, %cst_35 {dimension_numbers = #tpu.dot_dimension_numbers<[1], [1], [0], [0], [0, 0, 1, 0], [], []>} : vector<8x8xf32>, vector<16x8xf32>, vector<8x16xf32> -> vector<8x16xf32>
    %cst_36 = arith.constant 0.353553385 : f32
    %62 = vector.broadcast %cst_36 : f32 to vector<8x16xf32>
    %63 = arith.mulf %61, %62 : vector<8x16xf32>
    %cst_37 = arith.constant dense<0xFF800000> : vector<8xf32>
    %64 = vector.multi_reduction <maximumf>, %63, %cst_37 [1] : vector<8x16xf32> to vector<8xf32>
    %65 = vector.shape_cast %64 : vector<8xf32> to vector<8x1xf32>
    %66 = vector.broadcast %65 : vector<8x1xf32> to vector<8x16xf32>
    %67 = arith.subf %63, %66 : vector<8x16xf32>
    %68 = math.exp %67 : vector<8x16xf32>
    %cst_38 = arith.constant dense<0.000000e+00> : vector<8xf32>
    %69 = vector.multi_reduction <add>, %68, %cst_38 [1] : vector<8x16xf32> to vector<8xf32>
    %70 = vector.shape_cast %69 : vector<8xf32> to vector<8x1xf32>
    %cst_39 = arith.constant dense<0.000000e+00> : vector<8x8xf32>
    %71 = tpu.matmul %68, %60, %cst_39 {dimension_numbers = #tpu.dot_dimension_numbers<[1], [0], [0], [1], [0, 0, 1, 1], [], []>} : vector<8x16xf32>, vector<16x8xf32>, vector<8x8xf32> -> vector<8x8xf32>
    %72 = vector.broadcast %70 : vector<8x1xf32> to vector<8x8xf32>
    %73 = arith.divf %71, %72 : vector<8x8xf32>
    %c0_40 = arith.constant 0 : index
    %c8 = arith.constant 8 : index
    %74 = vector.load %arg14[%c0_40, %c8] : memref<8x32xf32, #tpu.memory_space<vmem>>, vector<8x8xf32>
    tpu.vector_store %arg14[%c0_40, %c8], %73 {strides = array<i32>} : memref<8x32xf32, #tpu.memory_space<vmem>>, vector<8x8xf32>,
    %75 = vector.extract_strided_slice %30 {offsets = [0, 16], sizes = [8, 8], strides = [1, 1]} : vector<8x32xf32> to vector<8x8xf32>
    %76 = vector.extract_strided_slice %35 {offsets = [0, 16], sizes = [16, 8], strides = [1, 1]} : vector<16x32xf32> to vector<16x8xf32>
    %77 = vector.extract_strided_slice %40 {offsets = [0, 16], sizes = [16, 8], strides = [1, 1]} : vector<16x32xf32> to vector<16x8xf32>
    %cst_41 = arith.constant dense<0.000000e+00> : vector<8x16xf32>
    %78 = tpu.matmul %75, %76, %cst_41 {dimension_numbers = #tpu.dot_dimension_numbers<[1], [1], [0], [0], [0, 0, 1, 0], [], []>} : vector<8x8xf32>, vector<16x8xf32>, vector<8x16xf32> -> vector<8x16xf32>
    %cst_42 = arith.constant 0.353553385 : f32
    %79 = vector.broadcast %cst_42 : f32 to vector<8x16xf32>
    %80 = arith.mulf %78, %79 : vector<8x16xf32>
    %cst_43 = arith.constant dense<0xFF800000> : vector<8xf32>
    %81 = vector.multi_reduction <maximumf>, %80, %cst_43 [1] : vector<8x16xf32> to vector<8xf32>
    %82 = vector.shape_cast %81 : vector<8xf32> to vector<8x1xf32>
    %83 = vector.broadcast %82 : vector<8x1xf32> to vector<8x16xf32>
    %84 = arith.subf %80, %83 : vector<8x16xf32>
    %85 = math.exp %84 : vector<8x16xf32>
    %cst_44 = arith.constant dense<0.000000e+00> : vector<8xf32>
    %86 = vector.multi_reduction <add>, %85, %cst_44 [1] : vector<8x16xf32> to vector<8xf32>
    %87 = vector.shape_cast %86 : vector<8xf32> to vector<8x1xf32>
    %cst_45 = arith.constant dense<0.000000e+00> : vector<8x8xf32>
    %88 = tpu.matmul %85, %77, %cst_45 {dimension_numbers = #tpu.dot_dimension_numbers<[1], [0], [0], [1], [0, 0, 1, 1], [], []>} : vector<8x16xf32>, vector<16x8xf32>, vector<8x8xf32> -> vector<8x8xf32>
    %89 = vector.broadcast %87 : vector<8x1xf32> to vector<8x8xf32>
    %90 = arith.divf %88, %89 : vector<8x8xf32>
    %c0_46 = arith.constant 0 : index
    %c16 = arith.constant 16 : index
    %91 = vector.load %arg14[%c0_46, %c16] : memref<8x32xf32, #tpu.memory_space<vmem>>, vector<8x8xf32>
    tpu.vector_store %arg14[%c0_46, %c16], %90 {strides = array<i32>} : memref<8x32xf32, #tpu.memory_space<vmem>>, vector<8x8xf32>,
    %92 = vector.extract_strided_slice %30 {offsets = [0, 24], sizes = [8, 8], strides = [1, 1]} : vector<8x32xf32> to vector<8x8xf32>
    %93 = vector.extract_strided_slice %35 {offsets = [0, 24], sizes = [16, 8], strides = [1, 1]} : vector<16x32xf32> to vector<16x8xf32>
    %94 = vector.extract_strided_slice %40 {offsets = [0, 24], sizes = [16, 8], strides = [1, 1]} : vector<16x32xf32> to vector<16x8xf32>
    %cst_47 = arith.constant dense<0.000000e+00> : vector<8x16xf32>
    %95 = tpu.matmul %92, %93, %cst_47 {dimension_numbers = #tpu.dot_dimension_numbers<[1], [1], [0], [0], [0, 0, 1, 0], [], []>} : vector<8x8xf32>, vector<16x8xf32>, vector<8x16xf32> -> vector<8x16xf32>
    %cst_48 = arith.constant 0.353553385 : f32
    %96 = vector.broadcast %cst_48 : f32 to vector<8x16xf32>
    %97 = arith.mulf %95, %96 : vector<8x16xf32>
    %cst_49 = arith.constant dense<0xFF800000> : vector<8xf32>
    %98 = vector.multi_reduction <maximumf>, %97, %cst_49 [1] : vector<8x16xf32> to vector<8xf32>
    %99 = vector.shape_cast %98 : vector<8xf32> to vector<8x1xf32>
    %100 = vector.broadcast %99 : vector<8x1xf32> to vector<8x16xf32>
    %101 = arith.subf %97, %100 : vector<8x16xf32>
    %102 = math.exp %101 : vector<8x16xf32>
    %cst_50 = arith.constant dense<0.000000e+00> : vector<8xf32>
    %103 = vector.multi_reduction <add>, %102, %cst_50 [1] : vector<8x16xf32> to vector<8xf32>
    %104 = vector.shape_cast %103 : vector<8xf32> to vector<8x1xf32>
    %cst_51 = arith.constant dense<0.000000e+00> : vector<8x8xf32>
    %105 = tpu.matmul %102, %94, %cst_51 {dimension_numbers = #tpu.dot_dimension_numbers<[1], [0], [0], [1], [0, 0, 1, 1], [], []>} : vector<8x16xf32>, vector<16x8xf32>, vector<8x8xf32> -> vector<8x8xf32>
    %106 = vector.broadcast %104 : vector<8x1xf32> to vector<8x8xf32>
    %107 = arith.divf %105, %106 : vector<8x8xf32>
    %c0_52 = arith.constant 0 : index
    %c24 = arith.constant 24 : index
    %108 = vector.load %arg14[%c0_52, %c24] : memref<8x32xf32, #tpu.memory_space<vmem>>, vector<8x8xf32>
    tpu.vector_store %arg14[%c0_52, %c24], %107 {strides = array<i32>} : memref<8x32xf32, #tpu.memory_space<vmem>>, vector<8x8xf32>,
    %c0_53 = arith.constant 0 : index
    %c0_54 = arith.constant 0 : index
    %109 = vector.load %arg14[%c0_53, %c0_54] : memref<8x32xf32, #tpu.memory_space<vmem>>, vector<8x32xf32>
    %c0_55 = arith.constant 0 : index
    %c0_56 = arith.constant 0 : index
    %110 = vector.load %arg11[%c0_55, %c0_56] : memref<32x32xf32, #tpu.memory_space<vmem>>, vector<32x32xf32>
    %cst_57 = arith.constant dense<0.000000e+00> : vector<8x32xf32>
    %111 = tpu.matmul %109, %110, %cst_57 {dimension_numbers = #tpu.dot_dimension_numbers<[1], [0], [0], [1], [0, 0, 1, 1], [], []>} : vector<8x32xf32>, vector<32x32xf32>, vector<8x32xf32> -> vector<8x32xf32>
    %c0_58 = arith.constant 0 : index
    %c0_59 = arith.constant 0 : index
    %112 = vector.load %arg12[%c0_58, %c0_59] : memref<1x32xf32, #tpu.memory_space<vmem>>, vector<1x32xf32>
    %113 = vector.broadcast %112 : vector<1x32xf32> to vector<8x32xf32>
    %114 = arith.addf %111, %113 : vector<8x32xf32>
    %115 = arith.addf %1, %114 : vector<8x32xf32>
    %c0_60 = arith.constant 0 : index
    %c0_61 = arith.constant 0 : index
    %c0_62 = arith.constant 0 : index
    %116 = vector.load %arg13[%c0_60, %c0_61, %c0_62] : memref<1x8x32xf32, #tpu.memory_space<vmem>>, vector<1x8x32xf32>
    %117 = vector.shape_cast %116 : vector<1x8x32xf32> to vector<8x32xf32>
    %118 = vector.shape_cast %115 : vector<8x32xf32> to vector<1x8x32xf32>
    tpu.vector_store %arg13[%c0_60, %c0_61, %c0_62], %118 {strides = array<i32>} : memref<1x8x32xf32, #tpu.memory_space<vmem>>, vector<1x8x32xf32>,
    return
  }
  func.func @transform_0(%arg0: i32) -> (i32, i32, i32) {
    %c0_i32 = arith.constant 0 : i32
    %c0_i32_0 = arith.constant 0 : i32
    %c0_i32_1 = arith.constant 0 : i32
    return %arg0, %c0_i32, %c0_i32_0 : i32, i32, i32
  }
  func.func @transform_1(%arg0: i32) -> (i32, i32, i32) {
    %c0_i32 = arith.constant 0 : i32
    %c0_i32_0 = arith.constant 0 : i32
    %c0_i32_1 = arith.constant 0 : i32
    return %arg0, %c0_i32, %c0_i32_0 : i32, i32, i32
  }
  func.func @transform_2(%arg0: i32) -> (i32, i32) {
    %c0_i32 = arith.constant 0 : i32
    %c0_i32_0 = arith.constant 0 : i32
    %c0_i32_1 = arith.constant 0 : i32
    return %c0_i32, %c0_i32_0 : i32, i32
  }
  func.func @transform_3(%arg0: i32) -> (i32, i32) {
    %c0_i32 = arith.constant 0 : i32
    %c0_i32_0 = arith.constant 0 : i32
    %c0_i32_1 = arith.constant 0 : i32
    return %c0_i32, %c0_i32_0 : i32, i32
  }
  func.func @transform_4(%arg0: i32) -> (i32, i32) {
    %c0_i32 = arith.constant 0 : i32
    %c0_i32_0 = arith.constant 0 : i32
    %c0_i32_1 = arith.constant 0 : i32
    return %c0_i32, %c0_i32_0 : i32, i32
  }
  func.func @transform_5(%arg0: i32) -> (i32, i32) {
    %c0_i32 = arith.constant 0 : i32
    %c0_i32_0 = arith.constant 0 : i32
    %c0_i32_1 = arith.constant 0 : i32
    return %c0_i32, %c0_i32_0 : i32, i32
  }
  func.func @transform_6(%arg0: i32) -> (i32, i32) {
    %c0_i32 = arith.constant 0 : i32
    %c0_i32_0 = arith.constant 0 : i32
    %c0_i32_1 = arith.constant 0 : i32
    return %c0_i32, %c0_i32_0 : i32, i32
  }
  func.func @transform_7(%arg0: i32) -> (i32, i32) {
    %c0_i32 = arith.constant 0 : i32
    %c0_i32_0 = arith.constant 0 : i32
    %c0_i32_1 = arith.constant 0 : i32
    return %c0_i32, %c0_i32_0 : i32, i32
  }
  func.func @transform_8(%arg0: i32) -> (i32, i32) {
    %c0_i32 = arith.constant 0 : i32
    %c0_i32_0 = arith.constant 0 : i32
    %c0_i32_1 = arith.constant 0 : i32
    return %c0_i32, %c0_i32_0 : i32, i32
  }
  func.func @transform_9(%arg0: i32) -> (i32, i32) {
    %c0_i32 = arith.constant 0 : i32
    %c0_i32_0 = arith.constant 0 : i32
    %c0_i32_1 = arith.constant 0 : i32
    return %c0_i32, %c0_i32_0 : i32, i32
  }
  func.func @transform_10(%arg0: i32) -> (i32, i32) {
    %c0_i32 = arith.constant 0 : i32
    %c0_i32_0 = arith.constant 0 : i32
    %c0_i32_1 = arith.constant 0 : i32
    return %c0_i32, %c0_i32_0 : i32, i32
  }
  func.func @transform_11(%arg0: i32) -> (i32, i32) {
    %c0_i32 = arith.constant 0 : i32
    %c0_i32_0 = arith.constant 0 : i32
    %c0_i32_1 = arith.constant 0 : i32
    return %c0_i32, %c0_i32_0 : i32, i32
  }
  func.func @transform_12(%arg0: i32) -> (i32, i32, i32) {
    %c0_i32 = arith.constant 0 : i32
    %c0_i32_0 = arith.constant 0 : i32
    %c0_i32_1 = arith.constant 0 : i32
    return %arg0, %c0_i32, %c0_i32_0 : i32, i32, i32
  }
}

</mosaic_0001>

<llo_original>
// kernel: transformer_decoder_layer.5
$region0: #{transformer_decoder_layer.5}
  #allocation0 [shape = 'u32[]', space=smem, size = 0x4, offset = 0x4, fixed_abs, tag = 'smem constant byte address 0x4 - core index']
  #allocation1 [shape = 'u32[144,128]{1,0:T(1,128)}', space=vmem, size = 0x12000, scoped, tag = 'internal scratch']
  %s0 = inlined_call_operand.vmem [shape: f32[16,32], index: 0, kind: input, shape index: {}]
  %s1 = inlined_call_operand.vmem [shape: f32[1,32], index: 1, kind: input, shape index: {}]
  %s2 = inlined_call_operand.vmem [shape: f32[1,32], index: 2, kind: input, shape index: {}]
  %s3 = inlined_call_operand.vmem [shape: f32[32,64], index: 3, kind: input, shape index: {}]
  %s4 = inlined_call_operand.vmem [shape: f32[1,64], index: 4, kind: input, shape index: {}]
  %s5 = inlined_call_operand.vmem [shape: f32[64,32], index: 5, kind: input, shape index: {}]
  %s6 = inlined_call_operand.vmem [shape: f32[1,32], index: 6, kind: input, shape index: {}]
  %s7 = inlined_call_operand.hbm [shape: f32[16,32], index: 7, kind: output, shape index: {}]
  %s8 = sld [smem:[#allocation0]]
  $region38: #{transformer_decoder_layer.5} parent=0
    _
  %s10 = ssub.s32 1, %s8
  %s11 = scalar_select 0, %s10, %s8
  $region1: #{transformer_decoder_layer.5} parent=0
    #allocation2 [shape = 'u8[8192]{0}', space=vmem, size = 0x2000, scoped, tag = 'output window, operand 0, single buffered']
    #allocation3 [shape = 's32[1]{0}', space=sflag, size = 0x4, scoped, tag = 'scoped memory for transformer_decoder_layer.5']
    %12 = vsyncpa [#allocation3], 0
    // Predicated region
    $region2: #{transformer_decoder_layer.5} parent=1 // pred_check
      _
    $region3: #{transformer_decoder_layer.5} parent=1 // pred_check_branch
      %14 = sbr.rel (0) target = $region5
    $region4: #{transformer_decoder_layer.5} parent=1 // pred_region
      _
    $region5: #{transformer_decoder_layer.5} parent=1 // pred_fallthru
      _
    // Predicated region
    $region6: #{transformer_decoder_layer.5} parent=1 // pred_check
      _
    $region7: #{transformer_decoder_layer.5} parent=1 // pred_check_branch
      %16 = sbr.rel (0) target = $region9
    $region8: #{transformer_decoder_layer.5} parent=1 // pred_region
      _
    $region9: #{transformer_decoder_layer.5} parent=1 // pred_fallthru
      _
    // Predicated region
    $region10: #{transformer_decoder_layer.5} parent=1 // pred_check
      _
    $region11: #{transformer_decoder_layer.5} parent=1 // pred_check_branch
      %18 = sbr.rel (0) target = $region13
    $region12: #{transformer_decoder_layer.5} parent=1 // pred_region
      _
    $region13: #{transformer_decoder_layer.5} parent=1 // pred_fallthru
      _
    // Predicated region
    $region14: #{transformer_decoder_layer.5} parent=1 // pred_check
      _
    $region15: #{transformer_decoder_layer.5} parent=1 // pred_check_branch
      %20 = sbr.rel (0) target = $region17
    $region16: #{transformer_decoder_layer.5} parent=1 // pred_region
      _
    $region17: #{transformer_decoder_layer.5} parent=1 // pred_fallthru
      _
    // Predicated region
    $region18: #{transformer_decoder_layer.5} parent=1 // pred_check
      _
    $region19: #{transformer_decoder_layer.5} parent=1 // pred_check_branch
      %22 = sbr.rel (0) target = $region21
    $region20: #{transformer_decoder_layer.5} parent=1 // pred_region
      _
    $region21: #{transformer_decoder_layer.5} parent=1 // pred_fallthru
      _
    // Predicated region
    $region22: #{transformer_decoder_layer.5} parent=1 // pred_check
      _
    $region23: #{transformer_decoder_layer.5} parent=1 // pred_check_branch
      %24 = sbr.rel (0) target = $region25
    $region24: #{transformer_decoder_layer.5} parent=1 // pred_region
      _
    $region25: #{transformer_decoder_layer.5} parent=1 // pred_fallthru
      _
    // Predicated region
    $region26: #{transformer_decoder_layer.5} parent=1 // pred_check
      _
    $region27: #{transformer_decoder_layer.5} parent=1 // pred_check_branch
      %26 = sbr.rel (0) target = $region29
    $region28: #{transformer_decoder_layer.5} parent=1 // pred_region
      _
    $region29: #{transformer_decoder_layer.5} parent=1 // pred_fallthru
      _
    %v27 = vld [vmem:[%s0] sm:$0xff]
    %v28 = vld [vmem:[%s0 + $0x8] sm:$0xff]
    %v29 = vld [vmem:[%s1] sm:$0x1]
    %v30 = vld [vmem:[%s2] sm:$0x1]
    %vm31 = vcmask 261120
    %v32 = vsel %vm31, %v27, 0.0
    %33 = vadd.xlane.f32.xlu0 %v32
    %v34 = vpop.xlane.xlu0 %33
    %v35 = vsel %vm31, %v28, 0.0
    %36 = vadd.xlane.f32.xlu0 %v35
    %v37 = vpop.xlane.xlu0 %36
    %v38 = vrcp.pop 32.0
    %v39 = vmul.f32 %v34, %v38
    %v40 = vmul.f32 %v37, %v38
    %v41 = vsub.f32 %v27, %v39
    %v42 = vsub.f32 %v28, %v40
    %v43 = vmul.f32 %v41, %v41
    %v44 = vmul.f32 %v42, %v42
    %v45 = vsel %vm31, %v43, 0.0
    %46 = vadd.xlane.f32.xlu0 %v45
    %v47 = vpop.xlane.xlu0 %46
    %v48 = vsel %vm31, %v44, 0.0
    %49 = vadd.xlane.f32.xlu0 %v48
    %v50 = vpop.xlane.xlu0 %49
    %v51 = vmul.f32 %v47, %v38
    %v52 = vmul.f32 %v50, %v38
    %v53 = vadd.f32 %v51, 1e-05
    %v54 = vadd.f32 %v52, 1e-05
    %v55 = vrsqrt.pop %v53
    %v56 = vrsqrt.pop %v54
    %v57 = vmul.f32 %v41, %v55
    %v58 = vmul.f32 %v42, %v56
    %v60 = vlaneseq
    %v61 = vshrl.u32 %v60, 7
    %v62 = vsub.s32 0, %v61
    %v63 = vrot.slane %v29, %v62
    %v65 = vmul.f32 %v57, %v63
    %v66 = vmul.f32 %v58, %v63
    %v68 = vlaneseq
    %v69 = vshrl.u32 %v68, 7
    %v70 = vsub.s32 0, %v69
    %v71 = vrot.slane %v30, %v70
    %v73 = vadd.f32 %v65, %v71
    %v74 = vadd.f32 %v66, %v71
    %v75 = vld [vmem:[%s3] sm:$0xff]
    %v76 = vld [vmem:[%s3 + $0x8] sm:$0xff]
    %v77 = vld [vmem:[%s3 + $0x10] sm:$0xff]
    %v78 = vld [vmem:[%s3 + $0x18] sm:$0xff]
    %v79 = vld [vmem:[%s4] sm:$0x1]
    %v81 = vlaneseq
    %v82 = vshrl.u32 %v81, 7
    %v83 = vsub.s32 0, %v82
    %v84 = vrot.slane %v79, %v83
    %v87 = vsel %vm31, %v73, 0
    %v90 = vsel %vm31, %v74, 0
    %92 = vmatprep.subr.mxu0 0.0
    %93 = vmatpush1.msra.mxu0 %v75
    %94 = vmatprep.subr.mxu0 0.0
    %95 = vmatpush1.msra.mxu0 %v76
    %96 = vmatprep.subr.mxu0 0.0
    %97 = vmatpush1.msra.mxu0 %v77
    %98 = vmatprep.subr.mxu0 0.0
    %99 = vmatpush1.msra.mxu0 %v78
    %100 = vmatprep.subr.mxu0 0.0
    %101 = vmatpush1.msra.mxu0 0.0
    %102 = vmatprep.subr.mxu0 0.0
    %103 = vmatpush1.msra.mxu0 0.0
    %104 = vmatprep.subr.mxu0 0.0
    %105 = vmatpush1.msra.mxu0 0.0
    %106 = vmatprep.subr.mxu0 0.0
    %107 = vmatpush1.msra.mxu0 0.0
    %108 = vmatprep.subr.mxu0 0.0
    %109 = vmatpush1.msra.mxu0 0.0
    %110 = vmatprep.subr.mxu0 0.0
    %111 = vmatpush1.msra.mxu0 0.0
    %112 = vmatprep.subr.mxu0 0.0
    %113 = vmatpush1.msra.mxu0 0.0
    %114 = vmatprep.subr.mxu0 0.0
    %115 = vmatpush1.msra.mxu0 0.0
    %116 = vmatprep.subr.mxu0 0.0
    %117 = vmatpush1.msra.mxu0 0.0
    %118 = vmatprep.subr.mxu0 0.0
    %119 = vmatpush1.msra.mxu0 0.0
    %120 = vmatprep.subr.mxu0 0.0
    %121 = vmatpush1.msra.mxu0 0.0
    %122 = vmatprep.subr.mxu0 0.0
    %123 = vmatpush1.msra.mxu0 0.0
    %124 = vmatprep.subr.mxu0 0.0
    %125 = vmatpush1.msra.mxu0 0.0
    %126 = vmatprep.subr.mxu0 0.0
    %127 = vmatpush1.msra.mxu0 0.0
    %128 = vmatprep.subr.mxu0 0.0
    %129 = vmatpush1.msra.mxu0 0.0
    %130 = vmatprep.subr.mxu0 0.0
    %131 = vmatpush1.msra.mxu0 0.0
    %132 = vmatprep.subr.mxu0 0.0
    %133 = vmatpush1.msra.mxu0 0.0
    %134 = vmatprep.subr.mxu0 0.0
    %135 = vmatpush1.msra.mxu0 0.0
    %136 = vmatprep.subr.mxu0 0.0
    %137 = vmatpush1.msra.mxu0 0.0
    %138 = vmatprep.subr.mxu0 0.0
    %139 = vmatpush1.msra.mxu0 0.0
    %140 = vmatprep.subr.mxu0 0.0
    %141 = vmatpush1.msra.mxu0 0.0
    %142 = vmatprep.subr.mxu0 0.0
    %143 = vmatpush1.msra.mxu0 0.0
    %144 = vmatprep.subr.mxu0 0.0
    %145 = vmatpush1.msra.mxu0 0.0
    %146 = vmatprep.subr.mxu0 0.0
    %147 = vmatpush1.msra.mxu0 0.0
    %148 = vmatprep.subr.mxu0 0.0
    %149 = vmatpush1.msra.mxu0 0.0
    %150 = vmatprep.subr.mxu0 0.0
    %151 = vmatpush1.msra.mxu0 0.0
    %152 = vmatprep.subr.mxu0 0.0
    %153 = vmatpush1.msra.mxu0 0.0
    %154 = vmatprep.subr.mxu0 0.0
    %155 = vmatpush1.msra.mxu0 0.0
    %156 = vmatprep.mubr.f32.mxu0 0.0
    %157 = vmatmul.mubr.f32.gmra.mrb[0].mxu0 %v87
    %v158 = vpop.f32.mrb[0].mxu0
    %v159 = vadd.f32 %v84, %v158
    %v160 = vpop.f32.mrb[0].mxu0
    %161 = vmatprep.mubr.f32.mxu0 0.0
    %162 = vmatmul.mubr.f32.gmra.mrb[0].mxu0 %v90
    %v163 = vpop.f32.mrb[0].mxu0
    %v164 = vadd.f32 %v84, %v163
    %v165 = vpop.f32.mrb[0].mxu0
    %166 = vdwg.mxu0
    %v167 = vmul.f32 %v159, 0.5
    %v168 = vmul.f32 %v164, 0.5
    %v169 = vmul.f32 %v159, 0.70710677
    %v170 = vmul.f32 %v164, 0.70710677
    %v171 = vmax.f32 %v169, -4.0
    %v172 = vmax.f32 %v170, -4.0
    %v173 = vmin.f32 %v171, 4.0
    %v174 = vmin.f32 %v172, 4.0
    %v175 = vmul.f32 %v173, %v173
    %v176 = vmul.f32 %v174, %v174
    %v177 = vmul.f32 %v175, -2.7261424e-10
    %v178 = vmul.f32 %v176, -2.7261424e-10
    %v179 = vadd.f32 %v177, 2.7706815e-08
    %v180 = vadd.f32 %v178, 2.7706815e-08
    %v181 = vmul.f32 %v179, %v175
    %v182 = vmul.f32 %v180, %v176
    %v183 = vadd.f32 %v181, -2.101024e-06
    %v184 = vadd.f32 %v182, -2.101024e-06
    %v185 = vmul.f32 %v183, %v175
    %v186 = vmul.f32 %v184, %v176
    %v187 = vadd.f32 %v185, -5.6925062e-05
    %v188 = vadd.f32 %v186, -5.6925062e-05
    %v189 = vmul.f32 %v187, %v175
    %v190 = vmul.f32 %v188, %v176
    %v191 = vadd.f32 %v189, -0.00073499064
    %v192 = vadd.f32 %v190, -0.00073499064
    %v193 = vmul.f32 %v191, %v175
    %v194 = vmul.f32 %v192, %v176
    %v195 = vadd.f32 %v193, -0.0029546
    %v196 = vadd.f32 %v194, -0.0029546
    %v197 = vmul.f32 %v195, %v175
    %v198 = vmul.f32 %v196, %v176
    %v199 = vadd.f32 %v197, -0.016096033
    %v200 = vadd.f32 %v198, -0.016096033
    %v201 = vmul.f32 %v173, %v199
    %v202 = vmul.f32 %v174, %v200
    %v203 = vmul.f32 %v175, -1.45660715e-05
    %v204 = vmul.f32 %v176, -1.45660715e-05
    %v205 = vadd.f32 %v203, -0.00021337405
    %v206 = vadd.f32 %v204, -0.00021337405
    %v207 = vmul.f32 %v205, %v175
    %v208 = vmul.f32 %v206, %v176
    %v209 = vadd.f32 %v207, -0.001682827
    %v210 = vadd.f32 %v208, -0.001682827
    %v211 = vmul.f32 %v209, %v175
    %v212 = vmul.f32 %v210, %v176
    %v213 = vadd.f32 %v211, -0.0073733293
    %v214 = vadd.f32 %v212, -0.0073733293
    %v215 = vmul.f32 %v213, %v175
    %v216 = vmul.f32 %v214, %v176
    %v217 = vadd.f32 %v215, -0.014264739
    %v218 = vadd.f32 %v216, -0.014264739
    %v219 = vrcp.pop %v217
    %v220 = vmul.f32 %v201, %v219
    %v221 = vrcp.pop %v218
    %v222 = vmul.f32 %v202, %v221
    %v223 = vadd.f32 %v220, 1.0
    %v224 = vadd.f32 %v222, 1.0
    %v225 = vmul.f32 %v167, %v223
    %v226 = vmul.f32 %v168, %v224
    %v227 = vld [vmem:[%s5] sm:$0xff]
    %v228 = vld [vmem:[%s5 + $0x8] sm:$0xff]
    %v229 = vld [vmem:[%s5 + $0x10] sm:$0xff]
    %v230 = vld [vmem:[%s5 + $0x18] sm:$0xff]
    %v231 = vld [vmem:[%s5 + $0x20] sm:$0xff]
    %v232 = vld [vmem:[%s5 + $0x28] sm:$0xff]
    %v233 = vld [vmem:[%s5 + $0x30] sm:$0xff]
    %v234 = vld [vmem:[%s5 + $0x38] sm:$0xff]
    %v235 = vld [vmem:[%s6] sm:$0x1]
    %v237 = vlaneseq
    %v238 = vshrl.u32 %v237, 7
    %v239 = vsub.s32 0, %v238
    %v240 = vrot.slane %v235, %v239
    %vm242 = vcmask 523264
    %v244 = vsel %vm242, %v225, 0
    %v247 = vsel %vm242, %v226, 0
    %249 = vmatprep.subr.mxu0 0.0
    %250 = vmatpush1.msra.mxu0 %v227
    %251 = vmatprep.subr.mxu0 0.0
    %252 = vmatpush1.msra.mxu0 %v228
    %253 = vmatprep.subr.mxu0 0.0
    %254 = vmatpush1.msra.mxu0 %v229
    %255 = vmatprep.subr.mxu0 0.0
    %256 = vmatpush1.msra.mxu0 %v230
    %257 = vmatprep.subr.mxu0 0.0
    %258 = vmatpush1.msra.mxu0 %v231
    %259 = vmatprep.subr.mxu0 0.0
    %260 = vmatpush1.msra.mxu0 %v232
    %261 = vmatprep.subr.mxu0 0.0
    %262 = vmatpush1.msra.mxu0 %v233
    %263 = vmatprep.subr.mxu0 0.0
    %264 = vmatpush1.msra.mxu0 %v234
    %265 = vmatprep.subr.mxu0 0.0
    %266 = vmatpush1.msra.mxu0 0.0
    %267 = vmatprep.subr.mxu0 0.0
    %268 = vmatpush1.msra.mxu0 0.0
    %269 = vmatprep.subr.mxu0 0.0
    %270 = vmatpush1.msra.mxu0 0.0
    %271 = vmatprep.subr.mxu0 0.0
    %272 = vmatpush1.msra.mxu0 0.0
    %273 = vmatprep.subr.mxu0 0.0
    %274 = vmatpush1.msra.mxu0 0.0
    %275 = vmatprep.subr.mxu0 0.0
    %276 = vmatpush1.msra.mxu0 0.0
    %277 = vmatprep.subr.mxu0 0.0
    %278 = vmatpush1.msra.mxu0 0.0
    %279 = vmatprep.subr.mxu0 0.0
    %280 = vmatpush1.msra.mxu0 0.0
    %281 = vmatprep.subr.mxu0 0.0
    %282 = vmatpush1.msra.mxu0 0.0
    %283 = vmatprep.subr.mxu0 0.0
    %284 = vmatpush1.msra.mxu0 0.0
    %285 = vmatprep.subr.mxu0 0.0
    %286 = vmatpush1.msra.mxu0 0.0
    %287 = vmatprep.subr.mxu0 0.0
    %288 = vmatpush1.msra.mxu0 0.0
    %289 = vmatprep.subr.mxu0 0.0
    %290 = vmatpush1.msra.mxu0 0.0
    %291 = vmatprep.subr.mxu0 0.0
    %292 = vmatpush1.msra.mxu0 0.0
    %293 = vmatprep.subr.mxu0 0.0
    %294 = vmatpush1.msra.mxu0 0.0
    %295 = vmatprep.subr.mxu0 0.0
    %296 = vmatpush1.msra.mxu0 0.0
    %297 = vmatprep.subr.mxu0 0.0
    %298 = vmatpush1.msra.mxu0 0.0
    %299 = vmatprep.subr.mxu0 0.0
    %300 = vmatpush1.msra.mxu0 0.0
    %301 = vmatprep.subr.mxu0 0.0
    %302 = vmatpush1.msra.mxu0 0.0
    %303 = vmatprep.subr.mxu0 0.0
    %304 = vmatpush1.msra.mxu0 0.0
    %305 = vmatprep.subr.mxu0 0.0
    %306 = vmatpush1.msra.mxu0 0.0
    %307 = vmatprep.subr.mxu0 0.0
    %308 = vmatpush1.msra.mxu0 0.0
    %309 = vmatprep.subr.mxu0 0.0
    %310 = vmatpush1.msra.mxu0 0.0
    %311 = vmatprep.subr.mxu0 0.0
    %312 = vmatpush1.msra.mxu0 0.0
    %313 = vmatprep.mubr.f32.mxu0 0.0
    %314 = vmatmul.mubr.f32.gmra.mrb[0].mxu0 %v244
    %v315 = vpop.f32.mrb[0].mxu0
    %v316 = vadd.f32 %v240, %v315
    %v317 = vpop.f32.mrb[0].mxu0
    %318 = vmatprep.mubr.f32.mxu0 0.0
    %319 = vmatmul.mubr.f32.gmra.mrb[0].mxu0 %v247
    %v320 = vpop.f32.mrb[0].mxu0
    %v321 = vadd.f32 %v240, %v320
    %v322 = vpop.f32.mrb[0].mxu0
    %323 = vdwg.mxu0
    %v324 = vadd.f32 %v27, %v316
    %v325 = vadd.f32 %v28, %v321
    %326 = vst.msk [vmem:[#allocation2] sm:$0xff] %vm31, %v324
    %327 = vst.msk [vmem:[#allocation2 + $0x8] sm:$0xff] %vm31, %v325
    // Predicated region
    $region30: #{transformer_decoder_layer.5} parent=1 // pred_check
      _
    $region31: #{transformer_decoder_layer.5} parent=1 // pred_check_branch
      %329 = sbr.rel (0) target = $region33
    $region32: #{transformer_decoder_layer.5} parent=1 // pred_region
      %s331 = ssub.s32 256, 256
      %332 = vsyncadd [#allocation3], %s331
      %s333 = sshll.u32 [#allocation2], 4
      %s334 = int_to_ptr.vmem [resolvable:$true] %s333
      %339 = dma.vmem_to_hbm [thread:$0]  %s334, 256, %s7, [#allocation3], 128, 128, 8
    $region33: #{transformer_decoder_layer.5} parent=1 // pred_fallthru
      _
    // Predicated region
    $region34: #{transformer_decoder_layer.5} parent=1 // pred_check
      _
    $region35: #{transformer_decoder_layer.5} parent=1 // pred_check_branch
      %341 = sbr.rel (0) target = $region37
    $region36: #{transformer_decoder_layer.5} parent=1 // pred_region
      %342 = dma.done [#allocation3], 256
    $region37: #{transformer_decoder_layer.5} parent=1 // pred_fallthru
      _
    %343 = vsyncpa [#allocation3], 1

// kernel: transformer_decoder_layer.3
$region0: #{transformer_decoder_layer.3}
  #allocation0 [shape = 'u32[]', space=smem, size = 0x4, offset = 0x4, fixed_abs, tag = 'smem constant byte address 0x4 - core index']
  #allocation1 [shape = 'u32[144,128]{1,0:T(1,128)}', space=vmem, size = 0x12000, scoped, tag = 'internal scratch']
  #allocation2 [shape = 'f32[8,32]{1,0:T(8,128)}', space=vmem, size = 0x1000, scoped, tag = 'scratch operand']
  %s0 = inlined_call_operand.hbm [shape: f32[2,8,32], index: 0, kind: input, shape index: {}]
  %s1 = inlined_call_operand.hbm [shape: f32[1,32], index: 1, kind: input, shape index: {}]
  %s2 = inlined_call_operand.hbm [shape: f32[1,32], index: 2, kind: input, shape index: {}]
  %s3 = inlined_call_operand.vmem [shape: f32[32,32], index: 3, kind: input, shape index: {}]
  %s4 = inlined_call_operand.vmem [shape: f32[1,32], index: 4, kind: input, shape index: {}]
  %s5 = inlined_call_operand.vmem [shape: f32[32,32], index: 5, kind: input, shape index: {}]
  %s6 = inlined_call_operand.hbm [shape: f32[1,32], index: 6, kind: input, shape index: {}]
  %s7 = inlined_call_operand.vmem [shape: f32[32,32], index: 7, kind: input, shape index: {}]
  %s8 = inlined_call_operand.vmem [shape: f32[1,32], index: 8, kind: input, shape index: {}]
  %s9 = inlined_call_operand.vmem [shape: f32[32,32], index: 9, kind: input, shape index: {}]
  %s10 = inlined_call_operand.vmem [shape: f32[1,32], index: 10, kind: input, shape index: {}]
  %s11 = inlined_call_operand.vmem [shape: f32[2,8,32], index: 11, kind: output, shape index: {}]
  %s12 = sld [smem:[#allocation0]]
  $region93: #{transformer_decoder_layer.3} parent=0
    _
  %s14 = ssub.s32 1, %s12
  %s15 = scalar_select 0, %s14, %s12
  $region1: #{transformer_decoder_layer.3} parent=0
    #allocation3 [shape = 'u8[8192]{0}', space=vmem, size = 0x2000, scoped, tag = 'input window, operand 0']
    #allocation4 [shape = 's32[2]{0}', space=sflag, size = 0x8, scoped, tag = 'scoped memory for transformer_decoder_layer.3']
    #allocation5 [shape = 'u8[512]{0}', space=vmem, size = 0x400, scoped, tag = 'input window, operand 1, single buffered']
    #allocation6 [shape = 's32[1]{0}', space=sflag, size = 0x4, scoped, tag = 'scoped memory for transformer_decoder_layer.3']
    #allocation7 [shape = 'u8[512]{0}', space=vmem, size = 0x400, scoped, tag = 'input window, operand 2, single buffered']
    #allocation8 [shape = 'u8[512]{0}', space=vmem, size = 0x400, scoped, tag = 'input window, operand 6, single buffered']
    #allocation9 [shape = 's32[1]{0}', space=sflag, size = 0x4, scoped, tag = 'scoped memory for transformer_decoder_layer.3']
    %16 = vsyncpa [#allocation4], 0
    %s17 = scalar_lea.sflag [#allocation4], 1
    %18 = vsyncpa %s17, 0
    %19 = vsyncpa [#allocation6], 0
    %20 = vsyncpa [#allocation9], 0
    loop: start=0, step=1, limit=4
    $region2: #{transformer_decoder_layer.3} parent=1 // loop_pre_header
      _
    $region3: #{transformer_decoder_layer.3} parent=1 // loop_header
      %s22 = sphi 0, %s26
      %p23 = scmp.ge.s32.totalorder %s22, 4
      %s32 = sphi 0, %s34
      %s35 = sphi 0, %s32
      %s36 = sphi 0, %s35
      %s52 = sphi 0, %s36
      %s56 = sphi 0, %s56
      %s58 = sphi 0, %s56
      %s59 = sphi 0, %s58
      %s73 = sphi 0, %s59
      %s77 = sphi 0, %s77
      %s79 = sphi 0, %s77
      %s80 = sphi 0, %s79
      %s94 = sphi 0, %s80
      %s98 = sphi 0, %s98
      %s100 = sphi 0, %s98
      %s101 = sphi 0, %s100
      %s115 = sphi 0, %s101
      %s119 = sphi 0, %s119
      %s121 = sphi 0, %s119
      %s122 = sphi 0, %s121
      %s136 = sphi 0, %s122
      %s140 = sphi 0, %s140
      %s142 = sphi 0, %s140
      %s143 = sphi 0, %s142
      %s157 = sphi 0, %s143
      %s161 = sphi 0, %s161
      %s163 = sphi 0, %s161
      %s164 = sphi 0, %s163
      %s178 = sphi 0, %s164
      %s182 = sphi 0, %s182
      %s184 = sphi 0, %s182
      %s185 = sphi 0, %s184
      %s199 = sphi 0, %s185
      %s203 = sphi 0, %s203
      %s205 = sphi 0, %s203
      %s206 = sphi 0, %s205
      %s220 = sphi 0, %s206
      %s224 = sphi 0, %s224
      %s226 = sphi 0, %s224
      %s227 = sphi 0, %s226
      %s241 = sphi 0, %s227
      %s245 = sphi 0, %s245
      %s247 = sphi 0, %s245
      %s248 = sphi 0, %s247
      %s262 = sphi 0, %s248
      %s268 = sphi 0, %s270
      %s271 = sphi 0, %s268
      %s272 = sphi 0, %s271
      %s288 = sphi 0, %s272
    $region4: #{transformer_decoder_layer.3} parent=1 // loop_header_branch
      %25 = sbr.rel (%p23) target = $region8
    $region5: #{transformer_decoder_layer.3} parent=1 // loop_body
      %s27 = ssub.s32 %s22, 1
      %s28 = ssub.s32 %s22, 2
      %s29 = sadd.s32 %s22, 1
      %s30 = ssub.s32 %s22, %s29
      %p31 = scmp.eq.s32.totalorder %s30, 0
      %s33 = sadd.s32 %s32, 1
      %s34 = scalar_select %p31, %s32, %s33
      %p37 = pneg %p31
      %p38 = scmp.eq.s32.totalorder %s22, 1
      %p39 = por %p37, %p38
      %p40 = scmp.ne.s32.totalorder %s32, %s35
      %p41 = scmp.eq.s32.totalorder %s22, 0
      %p42 = por %p40, %p41
      %p43 = scmp.ne.s32.totalorder %s32, %s35
      %p44 = scmp.eq.s32.totalorder %s27, 1
      %p45 = por %p43, %p44
      %p46 = scmp.ne.s32.totalorder %s35, %s36
      %p47 = scmp.eq.s32.totalorder %s27, 0
      %p48 = por %p46, %p47
      %p49 = scmp.ne.s32.totalorder %s35, %s36
      %p50 = scmp.eq.s32.totalorder %s28, 1
      %p51 = por %p49, %p50
      %p53 = scmp.ne.s32.totalorder %s36, %s52
      %p54 = scmp.eq.s32.totalorder %s28, 0
      %p55 = por %p53, %p54
      %s57 = sadd.s32 %s56, 1
      %p60 = scmp.eq.s32.totalorder %s22, 1
      %p61 = scmp.ne.s32.totalorder %s56, %s58
      %p62 = scmp.eq.s32.totalorder %s22, 0
      %p63 = por %p61, %p62
      %p64 = scmp.ne.s32.totalorder %s56, %s58
      %p65 = scmp.eq.s32.totalorder %s27, 1
      %p66 = por %p64, %p65
      %p67 = scmp.ne.s32.totalorder %s58, %s59
      %p68 = scmp.eq.s32.totalorder %s27, 0
      %p69 = por %p67, %p68
      %p70 = scmp.ne.s32.totalorder %s58, %s59
      %p71 = scmp.eq.s32.totalorder %s28, 1
      %p72 = por %p70, %p71
      %p74 = scmp.ne.s32.totalorder %s59, %s73
      %p75 = scmp.eq.s32.totalorder %s28, 0
      %p76 = por %p74, %p75
      %s78 = sadd.s32 %s77, 1
      %p81 = scmp.eq.s32.totalorder %s22, 1
      %p82 = scmp.ne.s32.totalorder %s77, %s79
      %p83 = scmp.eq.s32.totalorder %s22, 0
      %p84 = por %p82, %p83
      %p85 = scmp.ne.s32.totalorder %s77, %s79
      %p86 = scmp.eq.s32.totalorder %s27, 1
      %p87 = por %p85, %p86
      %p88 = scmp.ne.s32.totalorder %s79, %s80
      %p89 = scmp.eq.s32.totalorder %s27, 0
      %p90 = por %p88, %p89
      %p91 = scmp.ne.s32.totalorder %s79, %s80
      %p92 = scmp.eq.s32.totalorder %s28, 1
      %p93 = por %p91, %p92
      %p95 = scmp.ne.s32.totalorder %s80, %s94
      %p96 = scmp.eq.s32.totalorder %s28, 0
      %p97 = por %p95, %p96
      %s99 = sadd.s32 %s98, 1
      %p102 = scmp.eq.s32.totalorder %s22, 1
      %p103 = scmp.ne.s32.totalorder %s98, %s100
      %p104 = scmp.eq.s32.totalorder %s22, 0
      %p105 = por %p103, %p104
      %p106 = scmp.ne.s32.totalorder %s98, %s100
      %p107 = scmp.eq.s32.totalorder %s27, 1
      %p108 = por %p106, %p107
      %p109 = scmp.ne.s32.totalorder %s100, %s101
      %p110 = scmp.eq.s32.totalorder %s27, 0
      %p111 = por %p109, %p110
      %p112 = scmp.ne.s32.totalorder %s100, %s101
      %p113 = scmp.eq.s32.totalorder %s28, 1
      %p114 = por %p112, %p113
      %p116 = scmp.ne.s32.totalorder %s101, %s115
      %p117 = scmp.eq.s32.totalorder %s28, 0
      %p118 = por %p116, %p117
      %s120 = sadd.s32 %s119, 1
      %p123 = scmp.eq.s32.totalorder %s22, 1
      %p124 = scmp.ne.s32.totalorder %s119, %s121
      %p125 = scmp.eq.s32.totalorder %s22, 0
      %p126 = por %p124, %p125
      %p127 = scmp.ne.s32.totalorder %s119, %s121
      %p128 = scmp.eq.s32.totalorder %s27, 1
      %p129 = por %p127, %p128
      %p130 = scmp.ne.s32.totalorder %s121, %s122
      %p131 = scmp.eq.s32.totalorder %s27, 0
      %p132 = por %p130, %p131
      %p133 = scmp.ne.s32.totalorder %s121, %s122
      %p134 = scmp.eq.s32.totalorder %s28, 1
      %p135 = por %p133, %p134
      %p137 = scmp.ne.s32.totalorder %s122, %s136
      %p138 = scmp.eq.s32.totalorder %s28, 0
      %p139 = por %p137, %p138
      %s141 = sadd.s32 %s140, 1
      %p144 = scmp.eq.s32.totalorder %s22, 1
      %p145 = scmp.ne.s32.totalorder %s140, %s142
      %p146 = scmp.eq.s32.totalorder %s22, 0
      %p147 = por %p145, %p146
      %p148 = scmp.ne.s32.totalorder %s140, %s142
      %p149 = scmp.eq.s32.totalorder %s27, 1
      %p150 = por %p148, %p149
      %p151 = scmp.ne.s32.totalorder %s142, %s143
      %p152 = scmp.eq.s32.totalorder %s27, 0
      %p153 = por %p151, %p152
      %p154 = scmp.ne.s32.totalorder %s142, %s143
      %p155 = scmp.eq.s32.totalorder %s28, 1
      %p156 = por %p154, %p155
      %p158 = scmp.ne.s32.totalorder %s143, %s157
      %p159 = scmp.eq.s32.totalorder %s28, 0
      %p160 = por %p158, %p159
      %s162 = sadd.s32 %s161, 1
      %p165 = scmp.eq.s32.totalorder %s22, 1
      %p166 = scmp.ne.s32.totalorder %s161, %s163
      %p167 = scmp.eq.s32.totalorder %s22, 0
      %p168 = por %p166, %p167
      %p169 = scmp.ne.s32.totalorder %s161, %s163
      %p170 = scmp.eq.s32.totalorder %s27, 1
      %p171 = por %p169, %p170
      %p172 = scmp.ne.s32.totalorder %s163, %s164
      %p173 = scmp.eq.s32.totalorder %s27, 0
      %p174 = por %p172, %p173
      %p175 = scmp.ne.s32.totalorder %s163, %s164
      %p176 = scmp.eq.s32.totalorder %s28, 1
      %p177 = por %p175, %p176
      %p179 = scmp.ne.s32.totalorder %s164, %s178
      %p180 = scmp.eq.s32.totalorder %s28, 0
      %p181 = por %p179, %p180
      %s183 = sadd.s32 %s182, 1
      %p186 = scmp.eq.s32.totalorder %s22, 1
      %p187 = scmp.ne.s32.totalorder %s182, %s184
      %p188 = scmp.eq.s32.totalorder %s22, 0
      %p189 = por %p187, %p188
      %p190 = scmp.ne.s32.totalorder %s182, %s184
      %p191 = scmp.eq.s32.totalorder %s27, 1
      %p192 = por %p190, %p191
      %p193 = scmp.ne.s32.totalorder %s184, %s185
      %p194 = scmp.eq.s32.totalorder %s27, 0
      %p195 = por %p193, %p194
      %p196 = scmp.ne.s32.totalorder %s184, %s185
      %p197 = scmp.eq.s32.totalorder %s28, 1
      %p198 = por %p196, %p197
      %p200 = scmp.ne.s32.totalorder %s185, %s199
      %p201 = scmp.eq.s32.totalorder %s28, 0
      %p202 = por %p200, %p201
      %s204 = sadd.s32 %s203, 1
      %p207 = scmp.eq.s32.totalorder %s22, 1
      %p208 = scmp.ne.s32.totalorder %s203, %s205
      %p209 = scmp.eq.s32.totalorder %s22, 0
      %p210 = por %p208, %p209
      %p211 = scmp.ne.s32.totalorder %s203, %s205
      %p212 = scmp.eq.s32.totalorder %s27, 1
      %p213 = por %p211, %p212
      %p214 = scmp.ne.s32.totalorder %s205, %s206
      %p215 = scmp.eq.s32.totalorder %s27, 0
      %p216 = por %p214, %p215
      %p217 = scmp.ne.s32.totalorder %s205, %s206
      %p218 = scmp.eq.s32.totalorder %s28, 1
      %p219 = por %p217, %p218
      %p221 = scmp.ne.s32.totalorder %s206, %s220
      %p222 = scmp.eq.s32.totalorder %s28, 0
      %p223 = por %p221, %p222
      %s225 = sadd.s32 %s224, 1
      %p228 = scmp.eq.s32.totalorder %s22, 1
      %p229 = scmp.ne.s32.totalorder %s224, %s226
      %p230 = scmp.eq.s32.totalorder %s22, 0
      %p231 = por %p229, %p230
      %p232 = scmp.ne.s32.totalorder %s224, %s226
      %p233 = scmp.eq.s32.totalorder %s27, 1
      %p234 = por %p232, %p233
      %p235 = scmp.ne.s32.totalorder %s226, %s227
      %p236 = scmp.eq.s32.totalorder %s27, 0
      %p237 = por %p235, %p236
      %p238 = scmp.ne.s32.totalorder %s226, %s227
      %p239 = scmp.eq.s32.totalorder %s28, 1
      %p240 = por %p238, %p239
      %p242 = scmp.ne.s32.totalorder %s227, %s241
      %p243 = scmp.eq.s32.totalorder %s28, 0
      %p244 = por %p242, %p243
      %s246 = sadd.s32 %s245, 1
      %p249 = scmp.eq.s32.totalorder %s22, 1
      %p250 = scmp.ne.s32.totalorder %s245, %s247
      %p251 = scmp.eq.s32.totalorder %s22, 0
      %p252 = por %p250, %p251
      %p253 = scmp.ne.s32.totalorder %s245, %s247
      %p254 = scmp.eq.s32.totalorder %s27, 1
      %p255 = por %p253, %p254
      %p256 = scmp.ne.s32.totalorder %s247, %s248
      %p257 = scmp.eq.s32.totalorder %s27, 0
      %p258 = por %p256, %p257
      %p259 = scmp.ne.s32.totalorder %s247, %s248
      %p260 = scmp.eq.s32.totalorder %s28, 1
      %p261 = por %p259, %p260
      %p263 = scmp.ne.s32.totalorder %s248, %s262
      %p264 = scmp.eq.s32.totalorder %s28, 0
      %p265 = por %p263, %p264
      %s266 = ssub.s32 %s22, %s29
      %p267 = scmp.eq.s32.totalorder %s266, 0
      %s269 = sadd.s32 %s268, 1
      %s270 = scalar_select %p267, %s268, %s269
      %p273 = pneg %p267
      %p274 = scmp.eq.s32.totalorder %s22, 1
      %p275 = por %p273, %p274
      %p276 = scmp.ne.s32.totalorder %s268, %s271
      %p277 = scmp.eq.s32.totalorder %s22, 0
      %p278 = por %p276, %p277
      %p279 = scmp.ne.s32.totalorder %s268, %s271
      %p280 = scmp.eq.s32.totalorder %s27, 1
      %p281 = por %p279, %p280
      %p282 = scmp.ne.s32.totalorder %s271, %s272
      %p283 = scmp.eq.s32.totalorder %s27, 0
      %p284 = por %p282, %p283
      %p285 = scmp.ne.s32.totalorder %s271, %s272
      %p286 = scmp.eq.s32.totalorder %s28, 1
      %p287 = por %p285, %p286
      %p289 = scmp.ne.s32.totalorder %s272, %s288
      %p290 = scmp.eq.s32.totalorder %s28, 0
      %p291 = por %p289, %p290
      %p292 = scmp.le.s32.totalorder 1, %s22
      %p293 = scmp.lt.s32.totalorder %s22, 3
      %p294 = pnand %p292, %p293
      %p295 = pneg %p294
      // Predicated region
      $region9: #{transformer_decoder_layer.3} parent=5 // pred_check
        _
      $region10: #{transformer_decoder_layer.3} parent=5 // pred_check_branch
        %297 = sbr.rel (%p294) target = $region12
      $region11: #{transformer_decoder_layer.3} parent=5 // pred_region
        %s298 = ssub.s32 %s22, 1
        // Predicated region
        $region13: #{transformer_decoder_layer.3} parent=11 // pred_check
          %p299 = pneg %p69
        $region14: #{transformer_decoder_layer.3} parent=11 // pred_check_branch
          %301 = sbr.rel (%p299) target = $region16
        $region15: #{transformer_decoder_layer.3} parent=11 // pred_region
          %s303 = ssub.s32 16, 16
          %304 = vsyncadd [#allocation6], %s303
          %s306 = sshll.u32 [#allocation5], 4
          %s307 = int_to_ptr.vmem [resolvable:$true] %s306
          %309 = dma.hbm_to_vmem [thread:$0]  %s1, 16, %s307, [#allocation6]
        $region16: #{transformer_decoder_layer.3} parent=11 // pred_fallthru
          _
        // Predicated region
        $region17: #{transformer_decoder_layer.3} parent=11 // pred_check
          %p310 = pneg %p90
        $region18: #{transformer_decoder_layer.3} parent=11 // pred_check_branch
          %312 = sbr.rel (%p310) target = $region20
        $region19: #{transformer_decoder_layer.3} parent=11 // pred_region
          %s314 = ssub.s32 16, 16
          %315 = vsyncadd [#allocation6], %s314
          %s317 = sshll.u32 [#allocation7], 4
          %s318 = int_to_ptr.vmem [resolvable:$true] %s317
          %320 = dma.hbm_to_vmem [thread:$0]  %s2, 16, %s318, [#allocation6]
        $region20: #{transformer_decoder_layer.3} parent=11 // pred_fallthru
          _
        // Predicated region
        $region21: #{transformer_decoder_layer.3} parent=11 // pred_check
          %p321 = pneg %p111
        $region22: #{transformer_decoder_layer.3} parent=11 // pred_check_branch
          %323 = sbr.rel (%p321) target = $region24
        $region23: #{transformer_decoder_layer.3} parent=11 // pred_region
          _
        $region24: #{transformer_decoder_layer.3} parent=11 // pred_fallthru
          _
        // Predicated region
        $region25: #{transformer_decoder_layer.3} parent=11 // pred_check
          %p324 = pneg %p132
        $region26: #{transformer_decoder_layer.3} parent=11 // pred_check_branch
          %326 = sbr.rel (%p324) target = $region28
        $region27: #{transformer_decoder_layer.3} parent=11 // pred_region
          _
        $region28: #{transformer_decoder_layer.3} parent=11 // pred_fallthru
          _
        // Predicated region
        $region29: #{transformer_decoder_layer.3} parent=11 // pred_check
          %p327 = pneg %p153
        $region30: #{transformer_decoder_layer.3} parent=11 // pred_check_branch
          %329 = sbr.rel (%p327) target = $region32
        $region31: #{transformer_decoder_layer.3} parent=11 // pred_region
          _
        $region32: #{transformer_decoder_layer.3} parent=11 // pred_fallthru
          _
        // Predicated region
        $region33: #{transformer_decoder_layer.3} parent=11 // pred_check
          %p330 = pneg %p174
        $region34: #{transformer_decoder_layer.3} parent=11 // pred_check_branch
          %332 = sbr.rel (%p330) target = $region36
        $region35: #{transformer_decoder_layer.3} parent=11 // pred_region
          %s334 = ssub.s32 16, 16
          %335 = vsyncadd [#allocation9], %s334
          %s337 = sshll.u32 [#allocation8], 4
          %s338 = int_to_ptr.vmem [resolvable:$true] %s337
          %340 = dma.hbm_to_vmem [thread:$0]  %s6, 16, %s338, [#allocation9]
        $region36: #{transformer_decoder_layer.3} parent=11 // pred_fallthru
          _
        // Predicated region
        $region37: #{transformer_decoder_layer.3} parent=11 // pred_check
          %p341 = pneg %p195
        $region38: #{transformer_decoder_layer.3} parent=11 // pred_check_branch
          %343 = sbr.rel (%p341) target = $region40
        $region39: #{transformer_decoder_layer.3} parent=11 // pred_region
          _
        $region40: #{transformer_decoder_layer.3} parent=11 // pred_fallthru
          _
        // Predicated region
        $region41: #{transformer_decoder_layer.3} parent=11 // pred_check
          %p344 = pneg %p216
        $region42: #{transformer_decoder_layer.3} parent=11 // pred_check_branch
          %346 = sbr.rel (%p344) target = $region44
        $region43: #{transformer_decoder_layer.3} parent=11 // pred_region
          _
        $region44: #{transformer_decoder_layer.3} parent=11 // pred_fallthru
          _
        // Predicated region
        $region45: #{transformer_decoder_layer.3} parent=11 // pred_check
          %p347 = pneg %p237
        $region46: #{transformer_decoder_layer.3} parent=11 // pred_check_branch
          %349 = sbr.rel (%p347) target = $region48
        $region47: #{transformer_decoder_layer.3} parent=11 // pred_region
          _
        $region48: #{transformer_decoder_layer.3} parent=11 // pred_fallthru
          _
        // Predicated region
        $region49: #{transformer_decoder_layer.3} parent=11 // pred_check
          %p350 = pneg %p258
        $region50: #{transformer_decoder_layer.3} parent=11 // pred_check_branch
          %352 = sbr.rel (%p350) target = $region52
        $region51: #{transformer_decoder_layer.3} parent=11 // pred_region
          _
        $region52: #{transformer_decoder_layer.3} parent=11 // pred_fallthru
          _
      $region12: #{transformer_decoder_layer.3} parent=5 // pred_fallthru
        _
      %p353 = scmp.lt.s32.totalorder %s22, 2
      // Predicated region
      $region53: #{transformer_decoder_layer.3} parent=5 // pred_check
        %p354 = pneg %p353
      $region54: #{transformer_decoder_layer.3} parent=5 // pred_check_branch
        %356 = sbr.rel (%p354) target = $region56
      $region55: #{transformer_decoder_layer.3} parent=5 // pred_region
        // Predicated region
        $region57: #{transformer_decoder_layer.3} parent=55 // pred_check
          %p357 = pneg %p42
        $region58: #{transformer_decoder_layer.3} parent=55 // pred_check_branch
          %359 = sbr.rel (%p357) target = $region60
        $region59: #{transformer_decoder_layer.3} parent=55 // pred_region
          %s360 = sand.u32 %s32, 1
          %s361 = scalar_lea.sflag [#allocation4], %s360
          %s362 = sand.u32 %s32, 1
          %s363 = smul.addr %s362, 8
          %s364 = scalar_lea.vmem [#allocation3], %s363
          %s366 = ssub.s32 128, 128
          %367 = vsyncadd %s361, %s366
          %s368 = smul.addr %s22, 128
          %s369 = scalar_lea.hbm %s0, %s368
          %s371 = sshll.u32 %s364, 4
          %s372 = int_to_ptr.vmem [resolvable:$true] %s371
          %374 = dma.hbm_to_vmem [thread:$0]  %s369, 128, %s372, %s361
        $region60: #{transformer_decoder_layer.3} parent=55 // pred_fallthru
          _
      $region56: #{transformer_decoder_layer.3} parent=5 // pred_fallthru
        _
      %p375 = scmp.le.s32.totalorder 1, %s22
      %p376 = scmp.lt.s32.totalorder %s22, 3
      %p377 = pnand %p375, %p376
      %p378 = pneg %p377
      // Predicated region
      $region61: #{transformer_decoder_layer.3} parent=5 // pred_check
        _
      $region62: #{transformer_decoder_layer.3} parent=5 // pred_check_branch
        %380 = sbr.rel (%p377) target = $region64
      $region63: #{transformer_decoder_layer.3} parent=5 // pred_region
        %s381 = ssub.s32 %s22, 1
        %s382 = sand.u32 %s35, 1
        %s383 = scalar_lea.sflag [#allocation4], %s382
        %s384 = sand.u32 %s35, 1
        %s385 = smul.addr %s384, 8
        %s386 = scalar_lea.vmem [#allocation3], %s385
        // Predicated region
        $region65: #{transformer_decoder_layer.3} parent=63 // pred_check
          %p387 = pneg %p48
        $region66: #{transformer_decoder_layer.3} parent=63 // pred_check_branch
          %389 = sbr.rel (%p387) target = $region68
        $region67: #{transformer_decoder_layer.3} parent=63 // pred_region
          %390 = dma.done %s383, 128
        $region68: #{transformer_decoder_layer.3} parent=63 // pred_fallthru
          _
        // Predicated region
        $region69: #{transformer_decoder_layer.3} parent=63 // pred_check
          %p391 = pneg %p69
        $region70: #{transformer_decoder_layer.3} parent=63 // pred_check_branch
          %393 = sbr.rel (%p391) target = $region72
        $region71: #{transformer_decoder_layer.3} parent=63 // pred_region
          %394 = dma.done [#allocation6], 16
        $region72: #{transformer_decoder_layer.3} parent=63 // pred_fallthru
          _
        // Predicated region
        $region73: #{transformer_decoder_layer.3} parent=63 // pred_check
          %p395 = pneg %p90
        $region74: #{transformer_decoder_layer.3} parent=63 // pred_check_branch
          %397 = sbr.rel (%p395) target = $region76
        $region75: #{transformer_decoder_layer.3} parent=63 // pred_region
          %398 = dma.done [#allocation6], 16
        $region76: #{transformer_decoder_layer.3} parent=63 // pred_fallthru
          _
        // Predicated region
        $region77: #{transformer_decoder_layer.3} parent=63 // pred_check
          %p399 = pneg %p174
        $region78: #{transformer_decoder_layer.3} parent=63 // pred_check_branch
          %401 = sbr.rel (%p399) target = $region80
        $region79: #{transformer_decoder_layer.3} parent=63 // pred_region
          %402 = dma.done [#allocation9], 16
        $region80: #{transformer_decoder_layer.3} parent=63 // pred_fallthru
          _
        %s403 = sand.u32 %s35, 1
        %s404 = scalar_lea.sflag [#allocation4], %s403
        %s405 = sand.u32 %s35, 1
        %s406 = smul.addr %s405, 8
        %s407 = scalar_lea.vmem [#allocation3], %s406
        %p408 = pneg %p48
        %p409 = pneg %p45
        %p410 = pneg %p69
        %p411 = pneg %p66
        %p412 = pneg %p90
        %p413 = pneg %p87
        %p414 = pneg %p111
        %p415 = pneg %p108
        %p416 = pneg %p132
        %p417 = pneg %p129
        %p418 = pneg %p153
        %p419 = pneg %p150
        %p420 = pneg %p174
        %p421 = pneg %p171
        %p422 = pneg %p195
        %p423 = pneg %p192
        %p424 = pneg %p216
        %p425 = pneg %p213
        %p426 = pneg %p237
        %p427 = pneg %p234
        %p428 = pneg %p258
        %p429 = pneg %p255
        %p430 = pneg %p284
        %p431 = pneg %p281
        %p432 = scmp.lt.s32.totalorder %s27, 1
        %s433 = scalar_select %p432, %s27, 1
        %s434 = smul.addr %s433, 8
        %s435 = scalar_lea.vmem %s11, %s434
        %p436 = scmp.lt.s32.totalorder %s27, 1
        %s437 = scalar_select %p436, %s27, 1
        %s438 = smul.addr %s437, 8
        %s439 = scalar_lea.vmem %s11, %s438
        %v440 = vld [vmem:[%s386] sm:$0xff]
        %v441 = vld [vmem:[#allocation5] sm:$0x1]
        %v442 = vld [vmem:[#allocation7] sm:$0x1]
        %vm443 = vcmask 261120
        %v444 = vsel %vm443, %v440, 0.0
        %445 = vadd.xlane.f32.xlu0 %v444
        %v446 = vpop.xlane.xlu0 %445
        %v447 = vrcp.pop 32.0
        %v448 = vmul.f32 %v446, %v447
        %v449 = vsub.f32 %v440, %v448
        %v450 = vmul.f32 %v449, %v449
        %v451 = vsel %vm443, %v450, 0.0
        %452 = vadd.xlane.f32.xlu0 %v451
        %v453 = vpop.xlane.xlu0 %452
        %v454 = vmul.f32 %v453, %v447
        %v455 = vadd.f32 %v454, 1e-05
        %v456 = vrsqrt.pop %v455
        %v457 = vmul.f32 %v449, %v456
        %v459 = vlaneseq
        %v460 = vshrl.u32 %v459, 7
        %v461 = vsub.s32 0, %v460
        %v462 = vrot.slane %v441, %v461
        %v464 = vmul.f32 %v457, %v462
        %v466 = vlaneseq
        %v467 = vshrl.u32 %v466, 7
        %v468 = vsub.s32 0, %v467
        %v469 = vrot.slane %v442, %v468
        %v471 = vadd.f32 %v464, %v469
        %v472 = vld [vmem:[%s3] sm:$0xff]
        %v473 = vld [vmem:[%s3 + $0x8] sm:$0xff]
        %v474 = vld [vmem:[%s3 + $0x10] sm:$0xff]
        %v475 = vld [vmem:[%s3 + $0x18] sm:$0xff]
        %v476 = vld [vmem:[%s4] sm:$0x1]
        %v478 = vlaneseq
        %v479 = vshrl.u32 %v478, 7
        %v480 = vsub.s32 0, %v479
        %v481 = vrot.slane %v476, %v480
        %v484 = vsel %vm443, %v471, 0
        %486 = vmatprep.subr.mxu0 0.0
        %487 = vmatpush1.msra.mxu0 %v472
        %488 = vmatprep.subr.mxu0 0.0
        %489 = vmatpush1.msra.mxu0 %v473
        %490 = vmatprep.subr.mxu0 0.0
        %491 = vmatpush1.msra.mxu0 %v474
        %492 = vmatprep.subr.mxu0 0.0
        %493 = vmatpush1.msra.mxu0 %v475
        %494 = vmatprep.subr.mxu0 0.0
        %495 = vmatpush1.msra.mxu0 0.0
        %496 = vmatprep.subr.mxu0 0.0
        %497 = vmatpush1.msra.mxu0 0.0
        %498 = vmatprep.subr.mxu0 0.0
        %499 = vmatpush1.msra.mxu0 0.0
        %500 = vmatprep.subr.mxu0 0.0
        %501 = vmatpush1.msra.mxu0 0.0
        %502 = vmatprep.subr.mxu0 0.0
        %503 = vmatpush1.msra.mxu0 0.0
        %504 = vmatprep.subr.mxu0 0.0
        %505 = vmatpush1.msra.mxu0 0.0
        %506 = vmatprep.subr.mxu0 0.0
        %507 = vmatpush1.msra.mxu0 0.0
        %508 = vmatprep.subr.mxu0 0.0
        %509 = vmatpush1.msra.mxu0 0.0
        %510 = vmatprep.subr.mxu0 0.0
        %511 = vmatpush1.msra.mxu0 0.0
        %512 = vmatprep.subr.mxu0 0.0
        %513 = vmatpush1.msra.mxu0 0.0
        %514 = vmatprep.subr.mxu0 0.0
        %515 = vmatpush1.msra.mxu0 0.0
        %516 = vmatprep.subr.mxu0 0.0
        %517 = vmatpush1.msra.mxu0 0.0
        %518 = vmatprep.subr.mxu0 0.0
        %519 = vmatpush1.msra.mxu0 0.0
        %520 = vmatprep.subr.mxu0 0.0
        %521 = vmatpush1.msra.mxu0 0.0
        %522 = vmatprep.subr.mxu0 0.0
        %523 = vmatpush1.msra.mxu0 0.0
        %524 = vmatprep.subr.mxu0 0.0
        %525 = vmatpush1.msra.mxu0 0.0
        %526 = vmatprep.subr.mxu0 0.0
        %527 = vmatpush1.msra.mxu0 0.0
        %528 = vmatprep.subr.mxu0 0.0
        %529 = vmatpush1.msra.mxu0 0.0
        %530 = vmatprep.subr.mxu0 0.0
        %531 = vmatpush1.msra.mxu0 0.0
        %532 = vmatprep.subr.mxu0 0.0
        %533 = vmatpush1.msra.mxu0 0.0
        %534 = vmatprep.subr.mxu0 0.0
        %535 = vmatpush1.msra.mxu0 0.0
        %536 = vmatprep.subr.mxu0 0.0
        %537 = vmatpush1.msra.mxu0 0.0
        %538 = vmatprep.subr.mxu0 0.0
        %539 = vmatpush1.msra.mxu0 0.0
        %540 = vmatprep.subr.mxu0 0.0
        %541 = vmatpush1.msra.mxu0 0.0
        %542 = vmatprep.subr.mxu0 0.0
        %543 = vmatpush1.msra.mxu0 0.0
        %544 = vmatprep.subr.mxu0 0.0
        %545 = vmatpush1.msra.mxu0 0.0
        %546 = vmatprep.subr.mxu0 0.0
        %547 = vmatpush1.msra.mxu0 0.0
        %548 = vmatprep.subr.mxu0 0.0
        %549 = vmatpush1.msra.mxu0 0.0
        %550 = vmatprep.mubr.f32.mxu0 0.0
        %551 = vmatmul.mubr.f32.gmra.mrb[0].mxu0 %v484
        %v552 = vpop.f32.mrb[0].mxu0
        %v553 = vadd.f32 %v481, %v552
        %v554 = vpop.f32.mrb[0].mxu0
        %555 = vdwg.mxu0
        %v556 = vld [vmem:[%s5] sm:$0xff]
        %v557 = vld [vmem:[%s5 + $0x8] sm:$0xff]
        %v558 = vld [vmem:[%s5 + $0x10] sm:$0xff]
        %v559 = vld [vmem:[%s5 + $0x18] sm:$0xff]
        %v560 = vld [vmem:[#allocation8] sm:$0x1]
        %v562 = vlaneseq
        %v563 = vshrl.u32 %v562, 7
        %v564 = vsub.s32 0, %v563
        %v565 = vrot.slane %v560, %v564
        %567 = vmatprep.subr.mxu0 0.0
        %568 = vmatpush1.msra.mxu0 %v556
        %569 = vmatprep.subr.mxu0 0.0
        %570 = vmatpush1.msra.mxu0 %v557
        %571 = vmatprep.subr.mxu0 0.0
        %572 = vmatpush1.msra.mxu0 %v558
        %573 = vmatprep.subr.mxu0 0.0
        %574 = vmatpush1.msra.mxu0 %v559
        %575 = vmatprep.subr.mxu0 0.0
        %576 = vmatpush1.msra.mxu0 0.0
        %577 = vmatprep.subr.mxu0 0.0
        %578 = vmatpush1.msra.mxu0 0.0
        %579 = vmatprep.subr.mxu0 0.0
        %580 = vmatpush1.msra.mxu0 0.0
        %581 = vmatprep.subr.mxu0 0.0
        %582 = vmatpush1.msra.mxu0 0.0
        %583 = vmatprep.subr.mxu0 0.0
        %584 = vmatpush1.msra.mxu0 0.0
        %585 = vmatprep.subr.mxu0 0.0
        %586 = vmatpush1.msra.mxu0 0.0
        %587 = vmatprep.subr.mxu0 0.0
        %588 = vmatpush1.msra.mxu0 0.0
        %589 = vmatprep.subr.mxu0 0.0
        %590 = vmatpush1.msra.mxu0 0.0
        %591 = vmatprep.subr.mxu0 0.0
        %592 = vmatpush1.msra.mxu0 0.0
        %593 = vmatprep.subr.mxu0 0.0
        %594 = vmatpush1.msra.mxu0 0.0
        %595 = vmatprep.subr.mxu0 0.0
        %596 = vmatpush1.msra.mxu0 0.0
        %597 = vmatprep.subr.mxu0 0.0
        %598 = vmatpush1.msra.mxu0 0.0
        %599 = vmatprep.subr.mxu0 0.0
        %600 = vmatpush1.msra.mxu0 0.0
        %601 = vmatprep.subr.mxu0 0.0
        %602 = vmatpush1.msra.mxu0 0.0
        %603 = vmatprep.subr.mxu0 0.0
        %604 = vmatpush1.msra.mxu0 0.0
        %605 = vmatprep.subr.mxu0 0.0
        %606 = vmatpush1.msra.mxu0 0.0
        %607 = vmatprep.subr.mxu0 0.0
        %608 = vmatpush1.msra.mxu0 0.0
        %609 = vmatprep.subr.mxu0 0.0
        %610 = vmatpush1.msra.mxu0 0.0
        %611 = vmatprep.subr.mxu0 0.0
        %612 = vmatpush1.msra.mxu0 0.0
        %613 = vmatprep.subr.mxu0 0.0
        %614 = vmatpush1.msra.mxu0 0.0
        %615 = vmatprep.subr.mxu0 0.0
        %616 = vmatpush1.msra.mxu0 0.0
        %617 = vmatprep.subr.mxu0 0.0
        %618 = vmatpush1.msra.mxu0 0.0
        %619 = vmatprep.subr.mxu0 0.0
        %620 = vmatpush1.msra.mxu0 0.0
        %621 = vmatprep.subr.mxu0 0.0
        %622 = vmatpush1.msra.mxu0 0.0
        %623 = vmatprep.subr.mxu0 0.0
        %624 = vmatpush1.msra.mxu0 0.0
        %625 = vmatprep.subr.mxu0 0.0
        %626 = vmatpush1.msra.mxu0 0.0
        %627 = vmatprep.subr.mxu0 0.0
        %628 = vmatpush1.msra.mxu0 0.0
        %629 = vmatprep.subr.mxu0 0.0
        %630 = vmatpush1.msra.mxu0 0.0
        %631 = vmatprep.mubr.f32.mxu0 0.0
        %632 = vmatmul.mubr.f32.gmra.mrb[0].mxu0 %v484
        %v633 = vpop.f32.mrb[0].mxu0
        %v634 = vadd.f32 %v565, %v633
        %v635 = vpop.f32.mrb[0].mxu0
        %636 = vdwg.mxu0
        %v637 = vld [vmem:[%s7] sm:$0xff]
        %v638 = vld [vmem:[%s7 + $0x8] sm:$0xff]
        %v639 = vld [vmem:[%s7 + $0x10] sm:$0xff]
        %v640 = vld [vmem:[%s7 + $0x18] sm:$0xff]
        %v641 = vld [vmem:[%s8] sm:$0x1]
        %v643 = vlaneseq
        %v644 = vshrl.u32 %v643, 7
        %v645 = vsub.s32 0, %v644
        %v646 = vrot.slane %v641, %v645
        %648 = vmatprep.subr.mxu0 0.0
        %649 = vmatpush1.msra.mxu0 %v637
        %650 = vmatprep.subr.mxu0 0.0
        %651 = vmatpush1.msra.mxu0 %v638
        %652 = vmatprep.subr.mxu0 0.0
        %653 = vmatpush1.msra.mxu0 %v639
        %654 = vmatprep.subr.mxu0 0.0
        %655 = vmatpush1.msra.mxu0 %v640
        %656 = vmatprep.subr.mxu0 0.0
        %657 = vmatpush1.msra.mxu0 0.0
        %658 = vmatprep.subr.mxu0 0.0
        %659 = vmatpush1.msra.mxu0 0.0
        %660 = vmatprep.subr.mxu0 0.0
        %661 = vmatpush1.msra.mxu0 0.0
        %662 = vmatprep.subr.mxu0 0.0
        %663 = vmatpush1.msra.mxu0 0.0
        %664 = vmatprep.subr.mxu0 0.0
        %665 = vmatpush1.msra.mxu0 0.0
        %666 = vmatprep.subr.mxu0 0.0
        %667 = vmatpush1.msra.mxu0 0.0
        %668 = vmatprep.subr.mxu0 0.0
        %669 = vmatpush1.msra.mxu0 0.0
        %670 = vmatprep.subr.mxu0 0.0
        %671 = vmatpush1.msra.mxu0 0.0
        %672 = vmatprep.subr.mxu0 0.0
        %673 = vmatpush1.msra.mxu0 0.0
        %674 = vmatprep.subr.mxu0 0.0
        %675 = vmatpush1.msra.mxu0 0.0
        %676 = vmatprep.subr.mxu0 0.0
        %677 = vmatpush1.msra.mxu0 0.0
        %678 = vmatprep.subr.mxu0 0.0
        %679 = vmatpush1.msra.mxu0 0.0
        %680 = vmatprep.subr.mxu0 0.0
        %681 = vmatpush1.msra.mxu0 0.0
        %682 = vmatprep.subr.mxu0 0.0
        %683 = vmatpush1.msra.mxu0 0.0
        %684 = vmatprep.subr.mxu0 0.0
        %685 = vmatpush1.msra.mxu0 0.0
        %686 = vmatprep.subr.mxu0 0.0
        %687 = vmatpush1.msra.mxu0 0.0
        %688 = vmatprep.subr.mxu0 0.0
        %689 = vmatpush1.msra.mxu0 0.0
        %690 = vmatprep.subr.mxu0 0.0
        %691 = vmatpush1.msra.mxu0 0.0
        %692 = vmatprep.subr.mxu0 0.0
        %693 = vmatpush1.msra.mxu0 0.0
        %694 = vmatprep.subr.mxu0 0.0
        %695 = vmatpush1.msra.mxu0 0.0
        %696 = vmatprep.subr.mxu0 0.0
        %697 = vmatpush1.msra.mxu0 0.0
        %698 = vmatprep.subr.mxu0 0.0
        %699 = vmatpush1.msra.mxu0 0.0
        %700 = vmatprep.subr.mxu0 0.0
        %701 = vmatpush1.msra.mxu0 0.0
        %702 = vmatprep.subr.mxu0 0.0
        %703 = vmatpush1.msra.mxu0 0.0
        %704 = vmatprep.subr.mxu0 0.0
        %705 = vmatpush1.msra.mxu0 0.0
        %706 = vmatprep.subr.mxu0 0.0
        %707 = vmatpush1.msra.mxu0 0.0
        %708 = vmatprep.subr.mxu0 0.0
        %709 = vmatpush1.msra.mxu0 0.0
        %710 = vmatprep.subr.mxu0 0.0
        %711 = vmatpush1.msra.mxu0 0.0
        %712 = vmatprep.mubr.f32.mxu0 0.0
        %713 = vmatmul.mubr.f32.gmra.mrb[0].mxu0 %v484
        %v714 = vpop.f32.mrb[0].mxu0
        %v715 = vadd.f32 %v646, %v714
        %v716 = vpop.f32.mrb[0].mxu0
        %717 = vdwg.mxu0
        %vm718 = vcmask 64512
        %v720 = vsel %vm718, %v553, 0
        %v723 = vsel %vm718, %v634, 0
        %725 = vmatprep.subr.mxu0 0.0
        %726 = vmatpush1.xpose.msra.mxu0 %v723
        %727 = vmatprep.subr.mxu0 0.0
        %728 = vmatpush1.xpose.msra.mxu0 0.0
        %729 = vmatprep.subr.mxu0 0.0
        %730 = vmatpush1.xpose.msra.mxu0 0.0
        %731 = vmatprep.subr.mxu0 0.0
        %732 = vmatpush1.xpose.msra.mxu0 0.0
        %733 = vmatprep.subr.mxu0 0.0
        %734 = vmatpush1.xpose.msra.mxu0 0.0
        %735 = vmatprep.subr.mxu0 0.0
        %736 = vmatpush1.xpose.msra.mxu0 0.0
        %737 = vmatprep.subr.mxu0 0.0
        %738 = vmatpush1.xpose.msra.mxu0 0.0
        %739 = vmatprep.subr.mxu0 0.0
        %740 = vmatpush1.xpose.msra.mxu0 0.0
        %741 = vmatprep.subr.mxu0 0.0
        %742 = vmatpush1.xpose.msra.mxu0 0.0
        %743 = vmatprep.subr.mxu0 0.0
        %744 = vmatpush1.xpose.msra.mxu0 0.0
        %745 = vmatprep.subr.mxu0 0.0
        %746 = vmatpush1.xpose.msra.mxu0 0.0
        %747 = vmatprep.subr.mxu0 0.0
        %748 = vmatpush1.xpose.msra.mxu0 0.0
        %749 = vmatprep.subr.mxu0 0.0
        %750 = vmatpush1.xpose.msra.mxu0 0.0
        %751 = vmatprep.subr.mxu0 0.0
        %752 = vmatpush1.xpose.msra.mxu0 0.0
        %753 = vmatprep.subr.mxu0 0.0
        %754 = vmatpush1.xpose.msra.mxu0 0.0
        %755 = vmatprep.subr.mxu0 0.0
        %756 = vmatpush1.xpose.msra.mxu0 0.0
        %757 = vmatprep.subr.mxu0 0.0
        %758 = vmatpush1.xpose.msra.mxu0 0.0
        %759 = vmatprep.subr.mxu0 0.0
        %760 = vmatpush1.xpose.msra.mxu0 0.0
        %761 = vmatprep.subr.mxu0 0.0
        %762 = vmatpush1.xpose.msra.mxu0 0.0
        %763 = vmatprep.subr.mxu0 0.0
        %764 = vmatpush1.xpose.msra.mxu0 0.0
        %765 = vmatprep.subr.mxu0 0.0
        %766 = vmatpush1.xpose.msra.mxu0 0.0
        %767 = vmatprep.subr.mxu0 0.0
        %768 = vmatpush1.xpose.msra.mxu0 0.0
        %769 = vmatprep.subr.mxu0 0.0
        %770 = vmatpush1.xpose.msra.mxu0 0.0
        %771 = vmatprep.subr.mxu0 0.0
        %772 = vmatpush1.xpose.msra.mxu0 0.0
        %773 = vmatprep.subr.mxu0 0.0
        %774 = vmatpush1.xpose.msra.mxu0 0.0
        %775 = vmatprep.subr.mxu0 0.0
        %776 = vmatpush1.xpose.msra.mxu0 0.0
        %777 = vmatprep.subr.mxu0 0.0
        %778 = vmatpush1.xpose.msra.mxu0 0.0
        %779 = vmatprep.subr.mxu0 0.0
        %780 = vmatpush1.xpose.msra.mxu0 0.0
        %781 = vmatprep.subr.mxu0 0.0
        %782 = vmatpush1.xpose.msra.mxu0 0.0
        %783 = vmatprep.subr.mxu0 0.0
        %784 = vmatpush1.xpose.msra.mxu0 0.0
        %785 = vmatprep.subr.mxu0 0.0
        %786 = vmatpush1.xpose.msra.mxu0 0.0
        %787 = vmatprep.subr.mxu0 0.0
        %788 = vmatpush1.xpose.msra.mxu0 0.0
        %789 = vmatprep.mubr.f32.mxu0 0.0
        %790 = vmatmul.mubr.f32.gmra.mrb[0].mxu0 %v720
        %v791 = vpop.f32.mrb[0].mxu0
        %v792 = vadd.f32 0.0, %v791
        %v793 = vpop.f32.mrb[0].mxu0
        %794 = vdwg.mxu0
        %v795 = vmul.f32 %v792, 0.35355338
        %v796 = vsel %vm718, %v795, -inf
        %797 = vmax.xlane.f32.xlu0 %v796
        %v798 = vpop.xlane.xlu0 %797
        %v799 = vsub.f32 %v795, %v798
        %v800 = vmul.f32 %v799, 1.442695
        %v801 = vpow.pop %v800
        %v802 = vsel %vm718, %v801, 0.0
        %803 = vadd.xlane.f32.xlu0 %v802
        %v804 = vpop.xlane.xlu0 %803
        %v806 = vsel %vm718, %v801, 0
        %808 = vmatprep.subr.mxu0 0.0
        %809 = vmatpush1.msra.mxu0 %v715
        %810 = vmatprep.subr.mxu0 0.0
        %811 = vmatpush1.msra.mxu0 0.0
        %812 = vmatprep.subr.mxu0 0.0
        %813 = vmatpush1.msra.mxu0 0.0
        %814 = vmatprep.subr.mxu0 0.0
        %815 = vmatpush1.msra.mxu0 0.0
        %816 = vmatprep.subr.mxu0 0.0
        %817 = vmatpush1.msra.mxu0 0.0
        %818 = vmatprep.subr.mxu0 0.0
        %819 = vmatpush1.msra.mxu0 0.0
        %820 = vmatprep.subr.mxu0 0.0
        %821 = vmatpush1.msra.mxu0 0.0
        %822 = vmatprep.subr.mxu0 0.0
        %823 = vmatpush1.msra.mxu0 0.0
        %824 = vmatprep.subr.mxu0 0.0
        %825 = vmatpush1.msra.mxu0 0.0
        %826 = vmatprep.subr.mxu0 0.0
        %827 = vmatpush1.msra.mxu0 0.0
        %828 = vmatprep.subr.mxu0 0.0
        %829 = vmatpush1.msra.mxu0 0.0
        %830 = vmatprep.subr.mxu0 0.0
        %831 = vmatpush1.msra.mxu0 0.0
        %832 = vmatprep.subr.mxu0 0.0
        %833 = vmatpush1.msra.mxu0 0.0
        %834 = vmatprep.subr.mxu0 0.0
        %835 = vmatpush1.msra.mxu0 0.0
        %836 = vmatprep.subr.mxu0 0.0
        %837 = vmatpush1.msra.mxu0 0.0
        %838 = vmatprep.subr.mxu0 0.0
        %839 = vmatpush1.msra.mxu0 0.0
        %840 = vmatprep.subr.mxu0 0.0
        %841 = vmatpush1.msra.mxu0 0.0
        %842 = vmatprep.subr.mxu0 0.0
        %843 = vmatpush1.msra.mxu0 0.0
        %844 = vmatprep.subr.mxu0 0.0
        %845 = vmatpush1.msra.mxu0 0.0
        %846 = vmatprep.subr.mxu0 0.0
        %847 = vmatpush1.msra.mxu0 0.0
        %848 = vmatprep.subr.mxu0 0.0
        %849 = vmatpush1.msra.mxu0 0.0
        %850 = vmatprep.subr.mxu0 0.0
        %851 = vmatpush1.msra.mxu0 0.0
        %852 = vmatprep.subr.mxu0 0.0
        %853 = vmatpush1.msra.mxu0 0.0
        %854 = vmatprep.subr.mxu0 0.0
        %855 = vmatpush1.msra.mxu0 0.0
        %856 = vmatprep.subr.mxu0 0.0
        %857 = vmatpush1.msra.mxu0 0.0
        %858 = vmatprep.subr.mxu0 0.0
        %859 = vmatpush1.msra.mxu0 0.0
        %860 = vmatprep.subr.mxu0 0.0
        %861 = vmatpush1.msra.mxu0 0.0
        %862 = vmatprep.subr.mxu0 0.0
        %863 = vmatpush1.msra.mxu0 0.0
        %864 = vmatprep.subr.mxu0 0.0
        %865 = vmatpush1.msra.mxu0 0.0
        %866 = vmatprep.subr.mxu0 0.0
        %867 = vmatpush1.msra.mxu0 0.0
        %868 = vmatprep.subr.mxu0 0.0
        %869 = vmatpush1.msra.mxu0 0.0
        %870 = vmatprep.subr.mxu0 0.0
        %871 = vmatpush1.msra.mxu0 0.0
        %872 = vmatprep.mubr.f32.mxu0 0.0
        %873 = vmatmul.mubr.f32.gmra.mrb[0].mxu0 %v806
        %v874 = vpop.f32.mrb[0].mxu0
        %v875 = vadd.f32 0.0, %v874
        %v876 = vpop.f32.mrb[0].mxu0
        %877 = vdwg.mxu0
        %v878 = vrcp.pop %v804
        %v879 = vmul.f32 %v875, %v878
        %880 = vst.msk [vmem:[#allocation2] sm:$0xff] %vm718, %v879
        %881 = vrot.lane.b32.xlu0 %v553, 120
        %v882 = vpop.permute.xlu0 %881
        %883 = vrot.lane.b32.xlu0 %v634, 120
        %v884 = vpop.permute.xlu0 %883
        %v885 = vsel %vm718, %v882, 0
        %v887 = vsel %vm718, %v884, 0
        %889 = vmatprep.subr.mxu0 0.0
        %890 = vmatpush1.xpose.msra.mxu0 %v887
        %891 = vmatprep.subr.mxu0 0.0
        %892 = vmatpush1.xpose.msra.mxu0 0.0
        %893 = vmatprep.subr.mxu0 0.0
        %894 = vmatpush1.xpose.msra.mxu0 0.0
        %895 = vmatprep.subr.mxu0 0.0
        %896 = vmatpush1.xpose.msra.mxu0 0.0
        %897 = vmatprep.subr.mxu0 0.0
        %898 = vmatpush1.xpose.msra.mxu0 0.0
        %899 = vmatprep.subr.mxu0 0.0
        %900 = vmatpush1.xpose.msra.mxu0 0.0
        %901 = vmatprep.subr.mxu0 0.0
        %902 = vmatpush1.xpose.msra.mxu0 0.0
        %903 = vmatprep.subr.mxu0 0.0
        %904 = vmatpush1.xpose.msra.mxu0 0.0
        %905 = vmatprep.subr.mxu0 0.0
        %906 = vmatpush1.xpose.msra.mxu0 0.0
        %907 = vmatprep.subr.mxu0 0.0
        %908 = vmatpush1.xpose.msra.mxu0 0.0
        %909 = vmatprep.subr.mxu0 0.0
        %910 = vmatpush1.xpose.msra.mxu0 0.0
        %911 = vmatprep.subr.mxu0 0.0
        %912 = vmatpush1.xpose.msra.mxu0 0.0
        %913 = vmatprep.subr.mxu0 0.0
        %914 = vmatpush1.xpose.msra.mxu0 0.0
        %915 = vmatprep.subr.mxu0 0.0
        %916 = vmatpush1.xpose.msra.mxu0 0.0
        %917 = vmatprep.subr.mxu0 0.0
        %918 = vmatpush1.xpose.msra.mxu0 0.0
        %919 = vmatprep.subr.mxu0 0.0
        %920 = vmatpush1.xpose.msra.mxu0 0.0
        %921 = vmatprep.subr.mxu0 0.0
        %922 = vmatpush1.xpose.msra.mxu0 0.0
        %923 = vmatprep.subr.mxu0 0.0
        %924 = vmatpush1.xpose.msra.mxu0 0.0
        %925 = vmatprep.subr.mxu0 0.0
        %926 = vmatpush1.xpose.msra.mxu0 0.0
        %927 = vmatprep.subr.mxu0 0.0
        %928 = vmatpush1.xpose.msra.mxu0 0.0
        %929 = vmatprep.subr.mxu0 0.0
        %930 = vmatpush1.xpose.msra.mxu0 0.0
        %931 = vmatprep.subr.mxu0 0.0
        %932 = vmatpush1.xpose.msra.mxu0 0.0
        %933 = vmatprep.subr.mxu0 0.0
        %934 = vmatpush1.xpose.msra.mxu0 0.0
        %935 = vmatprep.subr.mxu0 0.0
        %936 = vmatpush1.xpose.msra.mxu0 0.0
        %937 = vmatprep.subr.mxu0 0.0
        %938 = vmatpush1.xpose.msra.mxu0 0.0
        %939 = vmatprep.subr.mxu0 0.0
        %940 = vmatpush1.xpose.msra.mxu0 0.0
        %941 = vmatprep.subr.mxu0 0.0
        %942 = vmatpush1.xpose.msra.mxu0 0.0
        %943 = vmatprep.subr.mxu0 0.0
        %944 = vmatpush1.xpose.msra.mxu0 0.0
        %945 = vmatprep.subr.mxu0 0.0
        %946 = vmatpush1.xpose.msra.mxu0 0.0
        %947 = vmatprep.subr.mxu0 0.0
        %948 = vmatpush1.xpose.msra.mxu0 0.0
        %949 = vmatprep.subr.mxu0 0.0
        %950 = vmatpush1.xpose.msra.mxu0 0.0
        %951 = vmatprep.subr.mxu0 0.0
        %952 = vmatpush1.xpose.msra.mxu0 0.0
        %953 = vmatprep.mubr.f32.mxu0 0.0
        %954 = vmatmul.mubr.f32.gmra.mrb[0].mxu0 %v885
        %v955 = vpop.f32.mrb[0].mxu0
        %v956 = vadd.f32 0.0, %v955
        %v957 = vpop.f32.mrb[0].mxu0
        %958 = vdwg.mxu0
        %v959 = vmul.f32 %v956, 0.35355338
        %v960 = vsel %vm718, %v959, -inf
        %961 = vmax.xlane.f32.xlu0 %v960
        %v962 = vpop.xlane.xlu0 %961
        %v963 = vsub.f32 %v959, %v962
        %v964 = vmul.f32 %v963, 1.442695
        %v965 = vpow.pop %v964
        %v966 = vsel %vm718, %v965, 0.0
        %967 = vadd.xlane.f32.xlu0 %v966
        %v968 = vpop.xlane.xlu0 %967
        %970 = vrot.lane.b32.xlu0 %v715, 120
        %v971 = vpop.permute.xlu0 %970
        %v974 = vsel %vm718, %v965, 0
        %976 = vmatprep.subr.mxu0 0.0
        %977 = vmatpush1.msra.mxu0 %v971
        %978 = vmatprep.subr.mxu0 0.0
        %979 = vmatpush1.msra.mxu0 0.0
        %980 = vmatprep.subr.mxu0 0.0
        %981 = vmatpush1.msra.mxu0 0.0
        %982 = vmatprep.subr.mxu0 0.0
        %983 = vmatpush1.msra.mxu0 0.0
        %984 = vmatprep.subr.mxu0 0.0
        %985 = vmatpush1.msra.mxu0 0.0
        %986 = vmatprep.subr.mxu0 0.0
        %987 = vmatpush1.msra.mxu0 0.0
        %988 = vmatprep.subr.mxu0 0.0
        %989 = vmatpush1.msra.mxu0 0.0
        %990 = vmatprep.subr.mxu0 0.0
        %991 = vmatpush1.msra.mxu0 0.0
        %992 = vmatprep.subr.mxu0 0.0
        %993 = vmatpush1.msra.mxu0 0.0
        %994 = vmatprep.subr.mxu0 0.0
        %995 = vmatpush1.msra.mxu0 0.0
        %996 = vmatprep.subr.mxu0 0.0
        %997 = vmatpush1.msra.mxu0 0.0
        %998 = vmatprep.subr.mxu0 0.0
        %999 = vmatpush1.msra.mxu0 0.0
        %1000 = vmatprep.subr.mxu0 0.0
        %1001 = vmatpush1.msra.mxu0 0.0
        %1002 = vmatprep.subr.mxu0 0.0
        %1003 = vmatpush1.msra.mxu0 0.0
        %1004 = vmatprep.subr.mxu0 0.0
        %1005 = vmatpush1.msra.mxu0 0.0
        %1006 = vmatprep.subr.mxu0 0.0
        %1007 = vmatpush1.msra.mxu0 0.0
        %1008 = vmatprep.subr.mxu0 0.0
        %1009 = vmatpush1.msra.mxu0 0.0
        %1010 = vmatprep.subr.mxu0 0.0
        %1011 = vmatpush1.msra.mxu0 0.0
        %1012 = vmatprep.subr.mxu0 0.0
        %1013 = vmatpush1.msra.mxu0 0.0
        %1014 = vmatprep.subr.mxu0 0.0
        %1015 = vmatpush1.msra.mxu0 0.0
        %1016 = vmatprep.subr.mxu0 0.0
        %1017 = vmatpush1.msra.mxu0 0.0
        %1018 = vmatprep.subr.mxu0 0.0
        %1019 = vmatpush1.msra.mxu0 0.0
        %1020 = vmatprep.subr.mxu0 0.0
        %1021 = vmatpush1.msra.mxu0 0.0
        %1022 = vmatprep.subr.mxu0 0.0
        %1023 = vmatpush1.msra.mxu0 0.0
        %1024 = vmatprep.subr.mxu0 0.0
        %1025 = vmatpush1.msra.mxu0 0.0
        %1026 = vmatprep.subr.mxu0 0.0
        %1027 = vmatpush1.msra.mxu0 0.0
        %1028 = vmatprep.subr.mxu0 0.0
        %1029 = vmatpush1.msra.mxu0 0.0
        %1030 = vmatprep.subr.mxu0 0.0
        %1031 = vmatpush1.msra.mxu0 0.0
        %1032 = vmatprep.subr.mxu0 0.0
        %1033 = vmatpush1.msra.mxu0 0.0
        %1034 = vmatprep.subr.mxu0 0.0
        %1035 = vmatpush1.msra.mxu0 0.0
        %1036 = vmatprep.subr.mxu0 0.0
        %1037 = vmatpush1.msra.mxu0 0.0
        %1038 = vmatprep.subr.mxu0 0.0
        %1039 = vmatpush1.msra.mxu0 0.0
        %1040 = vmatprep.mubr.f32.mxu0 0.0
        %1041 = vmatmul.mubr.f32.gmra.mrb[0].mxu0 %v974
        %v1042 = vpop.f32.mrb[0].mxu0
        %v1043 = vadd.f32 0.0, %v1042
        %v1044 = vpop.f32.mrb[0].mxu0
        %1045 = vdwg.mxu0
        %v1046 = vrcp.pop %v968
        %v1047 = vmul.f32 %v1043, %v1046
        %1049 = vrot.lane.b32.xlu0 %v1047, 8
        %v1050 = vpop.permute.xlu0 %1049
        %vm1052 = vcmask 130112
        %1053 = vst.msk [vmem:[#allocation2] sm:$0xff] %vm1052, %v1050
        %1054 = vrot.lane.b32.xlu0 %v553, 112
        %v1055 = vpop.permute.xlu0 %1054
        %1056 = vrot.lane.b32.xlu0 %v634, 112
        %v1057 = vpop.permute.xlu0 %1056
        %v1058 = vsel %vm718, %v1055, 0
        %v1060 = vsel %vm718, %v1057, 0
        %1062 = vmatprep.subr.mxu0 0.0
        %1063 = vmatpush1.xpose.msra.mxu0 %v1060
        %1064 = vmatprep.subr.mxu0 0.0
        %1065 = vmatpush1.xpose.msra.mxu0 0.0
        %1066 = vmatprep.subr.mxu0 0.0
        %1067 = vmatpush1.xpose.msra.mxu0 0.0
        %1068 = vmatprep.subr.mxu0 0.0
        %1069 = vmatpush1.xpose.msra.mxu0 0.0
        %1070 = vmatprep.subr.mxu0 0.0
        %1071 = vmatpush1.xpose.msra.mxu0 0.0
        %1072 = vmatprep.subr.mxu0 0.0
        %1073 = vmatpush1.xpose.msra.mxu0 0.0
        %1074 = vmatprep.subr.mxu0 0.0
        %1075 = vmatpush1.xpose.msra.mxu0 0.0
        %1076 = vmatprep.subr.mxu0 0.0
        %1077 = vmatpush1.xpose.msra.mxu0 0.0
        %1078 = vmatprep.subr.mxu0 0.0
        %1079 = vmatpush1.xpose.msra.mxu0 0.0
        %1080 = vmatprep.subr.mxu0 0.0
        %1081 = vmatpush1.xpose.msra.mxu0 0.0
        %1082 = vmatprep.subr.mxu0 0.0
        %1083 = vmatpush1.xpose.msra.mxu0 0.0
        %1084 = vmatprep.subr.mxu0 0.0
        %1085 = vmatpush1.xpose.msra.mxu0 0.0
        %1086 = vmatprep.subr.mxu0 0.0
        %1087 = vmatpush1.xpose.msra.mxu0 0.0
        %1088 = vmatprep.subr.mxu0 0.0
        %1089 = vmatpush1.xpose.msra.mxu0 0.0
        %1090 = vmatprep.subr.mxu0 0.0
        %1091 = vmatpush1.xpose.msra.mxu0 0.0
        %1092 = vmatprep.subr.mxu0 0.0
        %1093 = vmatpush1.xpose.msra.mxu0 0.0
        %1094 = vmatprep.subr.mxu0 0.0
        %1095 = vmatpush1.xpose.msra.mxu0 0.0
        %1096 = vmatprep.subr.mxu0 0.0
        %1097 = vmatpush1.xpose.msra.mxu0 0.0
        %1098 = vmatprep.subr.mxu0 0.0
        %1099 = vmatpush1.xpose.msra.mxu0 0.0
        %1100 = vmatprep.subr.mxu0 0.0
        %1101 = vmatpush1.xpose.msra.mxu0 0.0
        %1102 = vmatprep.subr.mxu0 0.0
        %1103 = vmatpush1.xpose.msra.mxu0 0.0
        %1104 = vmatprep.subr.mxu0 0.0
        %1105 = vmatpush1.xpose.msra.mxu0 0.0
        %1106 = vmatprep.subr.mxu0 0.0
        %1107 = vmatpush1.xpose.msra.mxu0 0.0
        %1108 = vmatprep.subr.mxu0 0.0
        %1109 = vmatpush1.xpose.msra.mxu0 0.0
        %1110 = vmatprep.subr.mxu0 0.0
        %1111 = vmatpush1.xpose.msra.mxu0 0.0
        %1112 = vmatprep.subr.mxu0 0.0
        %1113 = vmatpush1.xpose.msra.mxu0 0.0
        %1114 = vmatprep.subr.mxu0 0.0
        %1115 = vmatpush1.xpose.msra.mxu0 0.0
        %1116 = vmatprep.subr.mxu0 0.0
        %1117 = vmatpush1.xpose.msra.mxu0 0.0
        %1118 = vmatprep.subr.mxu0 0.0
        %1119 = vmatpush1.xpose.msra.mxu0 0.0
        %1120 = vmatprep.subr.mxu0 0.0
        %1121 = vmatpush1.xpose.msra.mxu0 0.0
        %1122 = vmatprep.subr.mxu0 0.0
        %1123 = vmatpush1.xpose.msra.mxu0 0.0
        %1124 = vmatprep.subr.mxu0 0.0
        %1125 = vmatpush1.xpose.msra.mxu0 0.0
        %1126 = vmatprep.mubr.f32.mxu0 0.0
        %1127 = vmatmul.mubr.f32.gmra.mrb[0].mxu0 %v1058
        %v1128 = vpop.f32.mrb[0].mxu0
        %v1129 = vadd.f32 0.0, %v1128
        %v1130 = vpop.f32.mrb[0].mxu0
        %1131 = vdwg.mxu0
        %v1132 = vmul.f32 %v1129, 0.35355338
        %v1133 = vsel %vm718, %v1132, -inf
        %1134 = vmax.xlane.f32.xlu0 %v1133
        %v1135 = vpop.xlane.xlu0 %1134
        %v1136 = vsub.f32 %v1132, %v1135
        %v1137 = vmul.f32 %v1136, 1.442695
        %v1138 = vpow.pop %v1137
        %v1139 = vsel %vm718, %v1138, 0.0
        %1140 = vadd.xlane.f32.xlu0 %v1139
        %v1141 = vpop.xlane.xlu0 %1140
        %1142 = vrot.lane.b32.xlu0 %v715, 112
        %v1143 = vpop.permute.xlu0 %1142
        %v1146 = vsel %vm718, %v1138, 0
        %1148 = vmatprep.subr.mxu0 0.0
        %1149 = vmatpush1.msra.mxu0 %v1143
        %1150 = vmatprep.subr.mxu0 0.0
        %1151 = vmatpush1.msra.mxu0 0.0
        %1152 = vmatprep.subr.mxu0 0.0
        %1153 = vmatpush1.msra.mxu0 0.0
        %1154 = vmatprep.subr.mxu0 0.0
        %1155 = vmatpush1.msra.mxu0 0.0
        %1156 = vmatprep.subr.mxu0 0.0
        %1157 = vmatpush1.msra.mxu0 0.0
        %1158 = vmatprep.subr.mxu0 0.0
        %1159 = vmatpush1.msra.mxu0 0.0
        %1160 = vmatprep.subr.mxu0 0.0
        %1161 = vmatpush1.msra.mxu0 0.0
        %1162 = vmatprep.subr.mxu0 0.0
        %1163 = vmatpush1.msra.mxu0 0.0
        %1164 = vmatprep.subr.mxu0 0.0
        %1165 = vmatpush1.msra.mxu0 0.0
        %1166 = vmatprep.subr.mxu0 0.0
        %1167 = vmatpush1.msra.mxu0 0.0
        %1168 = vmatprep.subr.mxu0 0.0
        %1169 = vmatpush1.msra.mxu0 0.0
        %1170 = vmatprep.subr.mxu0 0.0
        %1171 = vmatpush1.msra.mxu0 0.0
        %1172 = vmatprep.subr.mxu0 0.0
        %1173 = vmatpush1.msra.mxu0 0.0
        %1174 = vmatprep.subr.mxu0 0.0
        %1175 = vmatpush1.msra.mxu0 0.0
        %1176 = vmatprep.subr.mxu0 0.0
        %1177 = vmatpush1.msra.mxu0 0.0
        %1178 = vmatprep.subr.mxu0 0.0
        %1179 = vmatpush1.msra.mxu0 0.0
        %1180 = vmatprep.subr.mxu0 0.0
        %1181 = vmatpush1.msra.mxu0 0.0
        %1182 = vmatprep.subr.mxu0 0.0
        %1183 = vmatpush1.msra.mxu0 0.0
        %1184 = vmatprep.subr.mxu0 0.0
        %1185 = vmatpush1.msra.mxu0 0.0
        %1186 = vmatprep.subr.mxu0 0.0
        %1187 = vmatpush1.msra.mxu0 0.0
        %1188 = vmatprep.subr.mxu0 0.0
        %1189 = vmatpush1.msra.mxu0 0.0
        %1190 = vmatprep.subr.mxu0 0.0
        %1191 = vmatpush1.msra.mxu0 0.0
        %1192 = vmatprep.subr.mxu0 0.0
        %1193 = vmatpush1.msra.mxu0 0.0
        %1194 = vmatprep.subr.mxu0 0.0
        %1195 = vmatpush1.msra.mxu0 0.0
        %1196 = vmatprep.subr.mxu0 0.0
        %1197 = vmatpush1.msra.mxu0 0.0
        %1198 = vmatprep.subr.mxu0 0.0
        %1199 = vmatpush1.msra.mxu0 0.0
        %1200 = vmatprep.subr.mxu0 0.0
        %1201 = vmatpush1.msra.mxu0 0.0
        %1202 = vmatprep.subr.mxu0 0.0
        %1203 = vmatpush1.msra.mxu0 0.0
        %1204 = vmatprep.subr.mxu0 0.0
        %1205 = vmatpush1.msra.mxu0 0.0
        %1206 = vmatprep.subr.mxu0 0.0
        %1207 = vmatpush1.msra.mxu0 0.0
        %1208 = vmatprep.subr.mxu0 0.0
        %1209 = vmatpush1.msra.mxu0 0.0
        %1210 = vmatprep.subr.mxu0 0.0
        %1211 = vmatpush1.msra.mxu0 0.0
        %1212 = vmatprep.mubr.f32.mxu0 0.0
        %1213 = vmatmul.mubr.f32.gmra.mrb[0].mxu0 %v1146
        %v1214 = vpop.f32.mrb[0].mxu0
        %v1215 = vadd.f32 0.0, %v1214
        %v1216 = vpop.f32.mrb[0].mxu0
        %1217 = vdwg.mxu0
        %v1218 = vrcp.pop %v1141
        %v1219 = vmul.f32 %v1215, %v1218
        %1221 = vrot.lane.b32.xlu0 %v1219, 16
        %v1222 = vpop.permute.xlu0 %1221
        %vm1224 = vcmask 195712
        %1225 = vst.msk [vmem:[#allocation2] sm:$0xff] %vm1224, %v1222
        %1226 = vrot.lane.b32.xlu0 %v553, 104
        %v1227 = vpop.permute.xlu0 %1226
        %1228 = vrot.lane.b32.xlu0 %v634, 104
        %v1229 = vpop.permute.xlu0 %1228
        %v1230 = vsel %vm718, %v1227, 0
        %v1232 = vsel %vm718, %v1229, 0
        %1234 = vmatprep.subr.mxu0 0.0
        %1235 = vmatpush1.xpose.msra.mxu0 %v1232
        %1236 = vmatprep.subr.mxu0 0.0
        %1237 = vmatpush1.xpose.msra.mxu0 0.0
        %1238 = vmatprep.subr.mxu0 0.0
        %1239 = vmatpush1.xpose.msra.mxu0 0.0
        %1240 = vmatprep.subr.mxu0 0.0
        %1241 = vmatpush1.xpose.msra.mxu0 0.0
        %1242 = vmatprep.subr.mxu0 0.0
        %1243 = vmatpush1.xpose.msra.mxu0 0.0
        %1244 = vmatprep.subr.mxu0 0.0
        %1245 = vmatpush1.xpose.msra.mxu0 0.0
        %1246 = vmatprep.subr.mxu0 0.0
        %1247 = vmatpush1.xpose.msra.mxu0 0.0
        %1248 = vmatprep.subr.mxu0 0.0
        %1249 = vmatpush1.xpose.msra.mxu0 0.0
        %1250 = vmatprep.subr.mxu0 0.0
        %1251 = vmatpush1.xpose.msra.mxu0 0.0
        %1252 = vmatprep.subr.mxu0 0.0
        %1253 = vmatpush1.xpose.msra.mxu0 0.0
        %1254 = vmatprep.subr.mxu0 0.0
        %1255 = vmatpush1.xpose.msra.mxu0 0.0
        %1256 = vmatprep.subr.mxu0 0.0
        %1257 = vmatpush1.xpose.msra.mxu0 0.0
        %1258 = vmatprep.subr.mxu0 0.0
        %1259 = vmatpush1.xpose.msra.mxu0 0.0
        %1260 = vmatprep.subr.mxu0 0.0
        %1261 = vmatpush1.xpose.msra.mxu0 0.0
        %1262 = vmatprep.subr.mxu0 0.0
        %1263 = vmatpush1.xpose.msra.mxu0 0.0
        %1264 = vmatprep.subr.mxu0 0.0
        %1265 = vmatpush1.xpose.msra.mxu0 0.0
        %1266 = vmatprep.subr.mxu0 0.0
        %1267 = vmatpush1.xpose.msra.mxu0 0.0
        %1268 = vmatprep.subr.mxu0 0.0
        %1269 = vmatpush1.xpose.msra.mxu0 0.0
        %1270 = vmatprep.subr.mxu0 0.0
        %1271 = vmatpush1.xpose.msra.mxu0 0.0
        %1272 = vmatprep.subr.mxu0 0.0
        %1273 = vmatpush1.xpose.msra.mxu0 0.0
        %1274 = vmatprep.subr.mxu0 0.0
        %1275 = vmatpush1.xpose.msra.mxu0 0.0
        %1276 = vmatprep.subr.mxu0 0.0
        %1277 = vmatpush1.xpose.msra.mxu0 0.0
        %1278 = vmatprep.subr.mxu0 0.0
        %1279 = vmatpush1.xpose.msra.mxu0 0.0
        %1280 = vmatprep.subr.mxu0 0.0
        %1281 = vmatpush1.xpose.msra.mxu0 0.0
        %1282 = vmatprep.subr.mxu0 0.0
        %1283 = vmatpush1.xpose.msra.mxu0 0.0
        %1284 = vmatprep.subr.mxu0 0.0
        %1285 = vmatpush1.xpose.msra.mxu0 0.0
        %1286 = vmatprep.subr.mxu0 0.0
        %1287 = vmatpush1.xpose.msra.mxu0 0.0
        %1288 = vmatprep.subr.mxu0 0.0
        %1289 = vmatpush1.xpose.msra.mxu0 0.0
        %1290 = vmatprep.subr.mxu0 0.0
        %1291 = vmatpush1.xpose.msra.mxu0 0.0
        %1292 = vmatprep.subr.mxu0 0.0
        %1293 = vmatpush1.xpose.msra.mxu0 0.0
        %1294 = vmatprep.subr.mxu0 0.0
        %1295 = vmatpush1.xpose.msra.mxu0 0.0
        %1296 = vmatprep.subr.mxu0 0.0
        %1297 = vmatpush1.xpose.msra.mxu0 0.0
        %1298 = vmatprep.mubr.f32.mxu0 0.0
        %1299 = vmatmul.mubr.f32.gmra.mrb[0].mxu0 %v1230
        %v1300 = vpop.f32.mrb[0].mxu0
        %v1301 = vadd.f32 0.0, %v1300
        %v1302 = vpop.f32.mrb[0].mxu0
        %1303 = vdwg.mxu0
        %v1304 = vmul.f32 %v1301, 0.35355338
        %v1305 = vsel %vm718, %v1304, -inf
        %1306 = vmax.xlane.f32.xlu0 %v1305
        %v1307 = vpop.xlane.xlu0 %1306
        %v1308 = vsub.f32 %v1304, %v1307
        %v1309 = vmul.f32 %v1308, 1.442695
        %v1310 = vpow.pop %v1309
        %v1311 = vsel %vm718, %v1310, 0.0
        %1312 = vadd.xlane.f32.xlu0 %v1311
        %v1313 = vpop.xlane.xlu0 %1312
        %1314 = vrot.lane.b32.xlu0 %v715, 104
        %v1315 = vpop.permute.xlu0 %1314
        %v1318 = vsel %vm718, %v1310, 0
        %1320 = vmatprep.subr.mxu0 0.0
        %1321 = vmatpush1.msra.mxu0 %v1315
        %1322 = vmatprep.subr.mxu0 0.0
        %1323 = vmatpush1.msra.mxu0 0.0
        %1324 = vmatprep.subr.mxu0 0.0
        %1325 = vmatpush1.msra.mxu0 0.0
        %1326 = vmatprep.subr.mxu0 0.0
        %1327 = vmatpush1.msra.mxu0 0.0
        %1328 = vmatprep.subr.mxu0 0.0
        %1329 = vmatpush1.msra.mxu0 0.0
        %1330 = vmatprep.subr.mxu0 0.0
        %1331 = vmatpush1.msra.mxu0 0.0
        %1332 = vmatprep.subr.mxu0 0.0
        %1333 = vmatpush1.msra.mxu0 0.0
        %1334 = vmatprep.subr.mxu0 0.0
        %1335 = vmatpush1.msra.mxu0 0.0
        %1336 = vmatprep.subr.mxu0 0.0
        %1337 = vmatpush1.msra.mxu0 0.0
        %1338 = vmatprep.subr.mxu0 0.0
        %1339 = vmatpush1.msra.mxu0 0.0
        %1340 = vmatprep.subr.mxu0 0.0
        %1341 = vmatpush1.msra.mxu0 0.0
        %1342 = vmatprep.subr.mxu0 0.0
        %1343 = vmatpush1.msra.mxu0 0.0
        %1344 = vmatprep.subr.mxu0 0.0
        %1345 = vmatpush1.msra.mxu0 0.0
        %1346 = vmatprep.subr.mxu0 0.0
        %1347 = vmatpush1.msra.mxu0 0.0
        %1348 = vmatprep.subr.mxu0 0.0
        %1349 = vmatpush1.msra.mxu0 0.0
        %1350 = vmatprep.subr.mxu0 0.0
        %1351 = vmatpush1.msra.mxu0 0.0
        %1352 = vmatprep.subr.mxu0 0.0
        %1353 = vmatpush1.msra.mxu0 0.0
        %1354 = vmatprep.subr.mxu0 0.0
        %1355 = vmatpush1.msra.mxu0 0.0
        %1356 = vmatprep.subr.mxu0 0.0
        %1357 = vmatpush1.msra.mxu0 0.0
        %1358 = vmatprep.subr.mxu0 0.0
        %1359 = vmatpush1.msra.mxu0 0.0
        %1360 = vmatprep.subr.mxu0 0.0
        %1361 = vmatpush1.msra.mxu0 0.0
        %1362 = vmatprep.subr.mxu0 0.0
        %1363 = vmatpush1.msra.mxu0 0.0
        %1364 = vmatprep.subr.mxu0 0.0
        %1365 = vmatpush1.msra.mxu0 0.0
        %1366 = vmatprep.subr.mxu0 0.0
        %1367 = vmatpush1.msra.mxu0 0.0
        %1368 = vmatprep.subr.mxu0 0.0
        %1369 = vmatpush1.msra.mxu0 0.0
        %1370 = vmatprep.subr.mxu0 0.0
        %1371 = vmatpush1.msra.mxu0 0.0
        %1372 = vmatprep.subr.mxu0 0.0
        %1373 = vmatpush1.msra.mxu0 0.0
        %1374 = vmatprep.subr.mxu0 0.0
        %1375 = vmatpush1.msra.mxu0 0.0
        %1376 = vmatprep.subr.mxu0 0.0
        %1377 = vmatpush1.msra.mxu0 0.0
        %1378 = vmatprep.subr.mxu0 0.0
        %1379 = vmatpush1.msra.mxu0 0.0
        %1380 = vmatprep.subr.mxu0 0.0
        %1381 = vmatpush1.msra.mxu0 0.0
        %1382 = vmatprep.subr.mxu0 0.0
        %1383 = vmatpush1.msra.mxu0 0.0
        %1384 = vmatprep.mubr.f32.mxu0 0.0
        %1385 = vmatmul.mubr.f32.gmra.mrb[0].mxu0 %v1318
        %v1386 = vpop.f32.mrb[0].mxu0
        %v1387 = vadd.f32 0.0, %v1386
        %v1388 = vpop.f32.mrb[0].mxu0
        %1389 = vdwg.mxu0
        %v1390 = vrcp.pop %v1313
        %v1391 = vmul.f32 %v1387, %v1390
        %1393 = vrot.lane.b32.xlu0 %v1391, 24
        %v1394 = vpop.permute.xlu0 %1393
        %vm1396 = vcmask 261312
        %1397 = vst.msk [vmem:[#allocation2] sm:$0xff] %vm1396, %v1394
        %v1398 = vld [vmem:[#allocation2] sm:$0xff]
        %v1399 = vld [vmem:[%s9] sm:$0xff]
        %v1400 = vld [vmem:[%s9 + $0x8] sm:$0xff]
        %v1401 = vld [vmem:[%s9 + $0x10] sm:$0xff]
        %v1402 = vld [vmem:[%s9 + $0x18] sm:$0xff]
        %v1403 = vld [vmem:[%s10] sm:$0x1]
        %v1405 = vlaneseq
        %v1406 = vshrl.u32 %v1405, 7
        %v1407 = vsub.s32 0, %v1406
        %v1408 = vrot.slane %v1403, %v1407
        %v1411 = vsel %vm443, %v1398, 0
        %1413 = vmatprep.subr.mxu0 0.0
        %1414 = vmatpush1.msra.mxu0 %v1399
        %1415 = vmatprep.subr.mxu0 0.0
        %1416 = vmatpush1.msra.mxu0 %v1400
        %1417 = vmatprep.subr.mxu0 0.0
        %1418 = vmatpush1.msra.mxu0 %v1401
        %1419 = vmatprep.subr.mxu0 0.0
        %1420 = vmatpush1.msra.mxu0 %v1402
        %1421 = vmatprep.subr.mxu0 0.0
        %1422 = vmatpush1.msra.mxu0 0.0
        %1423 = vmatprep.subr.mxu0 0.0
        %1424 = vmatpush1.msra.mxu0 0.0
        %1425 = vmatprep.subr.mxu0 0.0
        %1426 = vmatpush1.msra.mxu0 0.0
        %1427 = vmatprep.subr.mxu0 0.0
        %1428 = vmatpush1.msra.mxu0 0.0
        %1429 = vmatprep.subr.mxu0 0.0
        %1430 = vmatpush1.msra.mxu0 0.0
        %1431 = vmatprep.subr.mxu0 0.0
        %1432 = vmatpush1.msra.mxu0 0.0
        %1433 = vmatprep.subr.mxu0 0.0
        %1434 = vmatpush1.msra.mxu0 0.0
        %1435 = vmatprep.subr.mxu0 0.0
        %1436 = vmatpush1.msra.mxu0 0.0
        %1437 = vmatprep.subr.mxu0 0.0
        %1438 = vmatpush1.msra.mxu0 0.0
        %1439 = vmatprep.subr.mxu0 0.0
        %1440 = vmatpush1.msra.mxu0 0.0
        %1441 = vmatprep.subr.mxu0 0.0
        %1442 = vmatpush1.msra.mxu0 0.0
        %1443 = vmatprep.subr.mxu0 0.0
        %1444 = vmatpush1.msra.mxu0 0.0
        %1445 = vmatprep.subr.mxu0 0.0
        %1446 = vmatpush1.msra.mxu0 0.0
        %1447 = vmatprep.subr.mxu0 0.0
        %1448 = vmatpush1.msra.mxu0 0.0
        %1449 = vmatprep.subr.mxu0 0.0
        %1450 = vmatpush1.msra.mxu0 0.0
        %1451 = vmatprep.subr.mxu0 0.0
        %1452 = vmatpush1.msra.mxu0 0.0
        %1453 = vmatprep.subr.mxu0 0.0
        %1454 = vmatpush1.msra.mxu0 0.0
        %1455 = vmatprep.subr.mxu0 0.0
        %1456 = vmatpush1.msra.mxu0 0.0
        %1457 = vmatprep.subr.mxu0 0.0
        %1458 = vmatpush1.msra.mxu0 0.0
        %1459 = vmatprep.subr.mxu0 0.0
        %1460 = vmatpush1.msra.mxu0 0.0
        %1461 = vmatprep.subr.mxu0 0.0
        %1462 = vmatpush1.msra.mxu0 0.0
        %1463 = vmatprep.subr.mxu0 0.0
        %1464 = vmatpush1.msra.mxu0 0.0
        %1465 = vmatprep.subr.mxu0 0.0
        %1466 = vmatpush1.msra.mxu0 0.0
        %1467 = vmatprep.subr.mxu0 0.0
        %1468 = vmatpush1.msra.mxu0 0.0
        %1469 = vmatprep.subr.mxu0 0.0
        %1470 = vmatpush1.msra.mxu0 0.0
        %1471 = vmatprep.subr.mxu0 0.0
        %1472 = vmatpush1.msra.mxu0 0.0
        %1473 = vmatprep.subr.mxu0 0.0
        %1474 = vmatpush1.msra.mxu0 0.0
        %1475 = vmatprep.subr.mxu0 0.0
        %1476 = vmatpush1.msra.mxu0 0.0
        %1477 = vmatprep.mubr.f32.mxu0 0.0
        %1478 = vmatmul.mubr.f32.gmra.mrb[0].mxu0 %v1411
        %v1479 = vpop.f32.mrb[0].mxu0
        %v1480 = vadd.f32 %v1408, %v1479
        %v1481 = vpop.f32.mrb[0].mxu0
        %1482 = vdwg.mxu0
        %v1483 = vadd.f32 %v440, %v1480
        %1484 = vst.msk [vmem:[%s439] sm:$0xff] %vm443, %v1483
        %p1485 = scmp.lt.s32.totalorder %s27, 1
        %s1486 = scalar_select %p1485, %s27, 1
        %s1487 = smul.addr %s1486, 8
        %s1488 = scalar_lea.vmem %s11, %s1487
        // Predicated region
        $region81: #{transformer_decoder_layer.3} parent=63 // pred_check
          %p1489 = pneg %p281
        $region82: #{transformer_decoder_layer.3} parent=63 // pred_check_branch
          %1491 = sbr.rel (%p1489) target = $region84
        $region83: #{transformer_decoder_layer.3} parent=63 // pred_region
          _
        $region84: #{transformer_decoder_layer.3} parent=63 // pred_fallthru
          _
      $region64: #{transformer_decoder_layer.3} parent=5 // pred_fallthru
        _
      %p1492 = scmp.le.s32.totalorder 2, %s22
      // Predicated region
      $region85: #{transformer_decoder_layer.3} parent=5 // pred_check
        %p1493 = pneg %p1492
      $region86: #{transformer_decoder_layer.3} parent=5 // pred_check_branch
        %1495 = sbr.rel (%p1493) target = $region88
      $region87: #{transformer_decoder_layer.3} parent=5 // pred_region
        %s1496 = ssub.s32 %s22, 2
        // Predicated region
        $region89: #{transformer_decoder_layer.3} parent=87 // pred_check
          %p1497 = pneg %p287
        $region90: #{transformer_decoder_layer.3} parent=87 // pred_check_branch
          %1499 = sbr.rel (%p1497) target = $region92
        $region91: #{transformer_decoder_layer.3} parent=87 // pred_region
          %p1500 = scmp.lt.s32.totalorder %s28, 1
          %s1501 = scalar_select %p1500, %s28, 1
          %s1502 = smul.addr %s1501, 8
          %s1503 = scalar_lea.vmem %s11, %s1502
        $region92: #{transformer_decoder_layer.3} parent=87 // pred_fallthru
          _
      $region88: #{transformer_decoder_layer.3} parent=5 // pred_fallthru
        _
    $region6: #{transformer_decoder_layer.3} parent=1 // loop_footer
      %s26 = sadd.s32 1, %s22
    $region7: #{transformer_decoder_layer.3} parent=1 // loop_footer_branch
      %21 = sbr.rel target = $region3
    $region8: #{transformer_decoder_layer.3} parent=1 // loop_exit
      _
    %1504 = vsyncpa [#allocation4], 1
    %s1505 = scalar_lea.sflag [#allocation4], 1
    %1506 = vsyncpa %s1505, 1
    %1507 = vsyncpa [#allocation6], 1
    %1508 = vsyncpa [#allocation9], 1

// kernel: transformer_decoder_layer.4
$region0: #{transformer_decoder_layer.4}
  #allocation0 [shape = 'u32[]', space=smem, size = 0x4, offset = 0x4, fixed_abs, tag = 'smem constant byte address 0x4 - core index']
  #allocation1 [shape = 'u32[144,128]{1,0:T(1,128)}', space=vmem, size = 0x12000, scoped, tag = 'internal scratch']
  #allocation2 [shape = 'f32[8,32]{1,0:T(8,128)}', space=vmem, size = 0x1000, scoped, tag = 'scratch operand']
  %s0 = inlined_call_operand.vmem [shape: f32[2,8,32], index: 0, kind: input, shape index: {}]
  %s1 = inlined_call_operand.vmem [shape: f32[2,16,32], index: 1, kind: input, shape index: {}]
  %s2 = inlined_call_operand.vmem [shape: f32[1,32], index: 2, kind: input, shape index: {}]
  %s3 = inlined_call_operand.vmem [shape: f32[1,32], index: 3, kind: input, shape index: {}]
  %s4 = inlined_call_operand.vmem [shape: f32[32,32], index: 4, kind: input, shape index: {}]
  %s5 = inlined_call_operand.vmem [shape: f32[1,32], index: 5, kind: input, shape index: {}]
  %s6 = inlined_call_operand.vmem [shape: f32[32,32], index: 6, kind: input, shape index: {}]
  %s7 = inlined_call_operand.vmem [shape: f32[1,32], index: 7, kind: input, shape index: {}]
  %s8 = inlined_call_operand.vmem [shape: f32[32,32], index: 8, kind: input, shape index: {}]
  %s9 = inlined_call_operand.vmem [shape: f32[1,32], index: 9, kind: input, shape index: {}]
  %s10 = inlined_call_operand.vmem [shape: f32[32,32], index: 10, kind: input, shape index: {}]
  %s11 = inlined_call_operand.vmem [shape: f32[1,32], index: 11, kind: input, shape index: {}]
  %s12 = inlined_call_operand.vmem [shape: f32[2,8,32], index: 12, kind: output, shape index: {}]
  %s13 = sld [smem:[#allocation0]]
  $region81: #{transformer_decoder_layer.4} parent=0
    _
  %s15 = ssub.s32 1, %s13
  %s16 = scalar_select 0, %s15, %s13
  loop: start=0, step=1, limit=4
  $region2: #{transformer_decoder_layer.4} parent=0 // loop_pre_header
    _
  $region3: #{transformer_decoder_layer.4} parent=0 // loop_header
    %s18 = sphi 0, %s22
    %p19 = scmp.ge.s32.totalorder %s18, 4
    %s28 = sphi 0, %s30
    %s31 = sphi 0, %s28
    %s32 = sphi 0, %s31
    %s48 = sphi 0, %s32
    %s54 = sphi 0, %s56
    %s57 = sphi 0, %s54
    %s58 = sphi 0, %s57
    %s74 = sphi 0, %s58
    %s78 = sphi 0, %s78
    %s80 = sphi 0, %s78
    %s81 = sphi 0, %s80
    %s95 = sphi 0, %s81
    %s99 = sphi 0, %s99
    %s101 = sphi 0, %s99
    %s102 = sphi 0, %s101
    %s116 = sphi 0, %s102
    %s120 = sphi 0, %s120
    %s122 = sphi 0, %s120
    %s123 = sphi 0, %s122
    %s137 = sphi 0, %s123
    %s141 = sphi 0, %s141
    %s143 = sphi 0, %s141
    %s144 = sphi 0, %s143
    %s158 = sphi 0, %s144
    %s162 = sphi 0, %s162
    %s164 = sphi 0, %s162
    %s165 = sphi 0, %s164
    %s179 = sphi 0, %s165
    %s183 = sphi 0, %s183
    %s185 = sphi 0, %s183
    %s186 = sphi 0, %s185
    %s200 = sphi 0, %s186
    %s204 = sphi 0, %s204
    %s206 = sphi 0, %s204
    %s207 = sphi 0, %s206
    %s221 = sphi 0, %s207
    %s225 = sphi 0, %s225
    %s227 = sphi 0, %s225
    %s228 = sphi 0, %s227
    %s242 = sphi 0, %s228
    %s246 = sphi 0, %s246
    %s248 = sphi 0, %s246
    %s249 = sphi 0, %s248
    %s263 = sphi 0, %s249
    %s267 = sphi 0, %s267
    %s269 = sphi 0, %s267
    %s270 = sphi 0, %s269
    %s284 = sphi 0, %s270
    %s290 = sphi 0, %s292
    %s293 = sphi 0, %s290
    %s294 = sphi 0, %s293
    %s310 = sphi 0, %s294
  $region4: #{transformer_decoder_layer.4} parent=0 // loop_header_branch
    %21 = sbr.rel (%p19) target = $region8
  $region5: #{transformer_decoder_layer.4} parent=0 // loop_body
    %s23 = ssub.s32 %s18, 1
    %s24 = ssub.s32 %s18, 2
    %s25 = sadd.s32 %s18, 1
    %s26 = ssub.s32 %s18, %s25
    %p27 = scmp.eq.s32.totalorder %s26, 0
    %s29 = sadd.s32 %s28, 1
    %s30 = scalar_select %p27, %s28, %s29
    %p33 = pneg %p27
    %p34 = scmp.eq.s32.totalorder %s18, 1
    %p35 = por %p33, %p34
    %p36 = scmp.ne.s32.totalorder %s28, %s31
    %p37 = scmp.eq.s32.totalorder %s18, 0
    %p38 = por %p36, %p37
    %p39 = scmp.ne.s32.totalorder %s28, %s31
    %p40 = scmp.eq.s32.totalorder %s23, 1
    %p41 = por %p39, %p40
    %p42 = scmp.ne.s32.totalorder %s31, %s32
    %p43 = scmp.eq.s32.totalorder %s23, 0
    %p44 = por %p42, %p43
    %p45 = scmp.ne.s32.totalorder %s31, %s32
    %p46 = scmp.eq.s32.totalorder %s24, 1
    %p47 = por %p45, %p46
    %p49 = scmp.ne.s32.totalorder %s32, %s48
    %p50 = scmp.eq.s32.totalorder %s24, 0
    %p51 = por %p49, %p50
    %s52 = ssub.s32 %s18, %s25
    %p53 = scmp.eq.s32.totalorder %s52, 0
    %s55 = sadd.s32 %s54, 1
    %s56 = scalar_select %p53, %s54, %s55
    %p59 = pneg %p53
    %p60 = scmp.eq.s32.totalorder %s18, 1
    %p61 = por %p59, %p60
    %p62 = scmp.ne.s32.totalorder %s54, %s57
    %p63 = scmp.eq.s32.totalorder %s18, 0
    %p64 = por %p62, %p63
    %p65 = scmp.ne.s32.totalorder %s54, %s57
    %p66 = scmp.eq.s32.totalorder %s23, 1
    %p67 = por %p65, %p66
    %p68 = scmp.ne.s32.totalorder %s57, %s58
    %p69 = scmp.eq.s32.totalorder %s23, 0
    %p70 = por %p68, %p69
    %p71 = scmp.ne.s32.totalorder %s57, %s58
    %p72 = scmp.eq.s32.totalorder %s24, 1
    %p73 = por %p71, %p72
    %p75 = scmp.ne.s32.totalorder %s58, %s74
    %p76 = scmp.eq.s32.totalorder %s24, 0
    %p77 = por %p75, %p76
    %s79 = sadd.s32 %s78, 1
    %p82 = scmp.eq.s32.totalorder %s18, 1
    %p83 = scmp.ne.s32.totalorder %s78, %s80
    %p84 = scmp.eq.s32.totalorder %s18, 0
    %p85 = por %p83, %p84
    %p86 = scmp.ne.s32.totalorder %s78, %s80
    %p87 = scmp.eq.s32.totalorder %s23, 1
    %p88 = por %p86, %p87
    %p89 = scmp.ne.s32.totalorder %s80, %s81
    %p90 = scmp.eq.s32.totalorder %s23, 0
    %p91 = por %p89, %p90
    %p92 = scmp.ne.s32.totalorder %s80, %s81
    %p93 = scmp.eq.s32.totalorder %s24, 1
    %p94 = por %p92, %p93
    %p96 = scmp.ne.s32.totalorder %s81, %s95
    %p97 = scmp.eq.s32.totalorder %s24, 0
    %p98 = por %p96, %p97
    %s100 = sadd.s32 %s99, 1
    %p103 = scmp.eq.s32.totalorder %s18, 1
    %p104 = scmp.ne.s32.totalorder %s99, %s101
    %p105 = scmp.eq.s32.totalorder %s18, 0
    %p106 = por %p104, %p105
    %p107 = scmp.ne.s32.totalorder %s99, %s101
    %p108 = scmp.eq.s32.totalorder %s23, 1
    %p109 = por %p107, %p108
    %p110 = scmp.ne.s32.totalorder %s101, %s102
    %p111 = scmp.eq.s32.totalorder %s23, 0
    %p112 = por %p110, %p111
    %p113 = scmp.ne.s32.totalorder %s101, %s102
    %p114 = scmp.eq.s32.totalorder %s24, 1
    %p115 = por %p113, %p114
    %p117 = scmp.ne.s32.totalorder %s102, %s116
    %p118 = scmp.eq.s32.totalorder %s24, 0
    %p119 = por %p117, %p118
    %s121 = sadd.s32 %s120, 1
    %p124 = scmp.eq.s32.totalorder %s18, 1
    %p125 = scmp.ne.s32.totalorder %s120, %s122
    %p126 = scmp.eq.s32.totalorder %s18, 0
    %p127 = por %p125, %p126
    %p128 = scmp.ne.s32.totalorder %s120, %s122
    %p129 = scmp.eq.s32.totalorder %s23, 1
    %p130 = por %p128, %p129
    %p131 = scmp.ne.s32.totalorder %s122, %s123
    %p132 = scmp.eq.s32.totalorder %s23, 0
    %p133 = por %p131, %p132
    %p134 = scmp.ne.s32.totalorder %s122, %s123
    %p135 = scmp.eq.s32.totalorder %s24, 1
    %p136 = por %p134, %p135
    %p138 = scmp.ne.s32.totalorder %s123, %s137
    %p139 = scmp.eq.s32.totalorder %s24, 0
    %p140 = por %p138, %p139
    %s142 = sadd.s32 %s141, 1
    %p145 = scmp.eq.s32.totalorder %s18, 1
    %p146 = scmp.ne.s32.totalorder %s141, %s143
    %p147 = scmp.eq.s32.totalorder %s18, 0
    %p148 = por %p146, %p147
    %p149 = scmp.ne.s32.totalorder %s141, %s143
    %p150 = scmp.eq.s32.totalorder %s23, 1
    %p151 = por %p149, %p150
    %p152 = scmp.ne.s32.totalorder %s143, %s144
    %p153 = scmp.eq.s32.totalorder %s23, 0
    %p154 = por %p152, %p153
    %p155 = scmp.ne.s32.totalorder %s143, %s144
    %p156 = scmp.eq.s32.totalorder %s24, 1
    %p157 = por %p155, %p156
    %p159 = scmp.ne.s32.totalorder %s144, %s158
    %p160 = scmp.eq.s32.totalorder %s24, 0
    %p161 = por %p159, %p160
    %s163 = sadd.s32 %s162, 1
    %p166 = scmp.eq.s32.totalorder %s18, 1
    %p167 = scmp.ne.s32.totalorder %s162, %s164
    %p168 = scmp.eq.s32.totalorder %s18, 0
    %p169 = por %p167, %p168
    %p170 = scmp.ne.s32.totalorder %s162, %s164
    %p171 = scmp.eq.s32.totalorder %s23, 1
    %p172 = por %p170, %p171
    %p173 = scmp.ne.s32.totalorder %s164, %s165
    %p174 = scmp.eq.s32.totalorder %s23, 0
    %p175 = por %p173, %p174
    %p176 = scmp.ne.s32.totalorder %s164, %s165
    %p177 = scmp.eq.s32.totalorder %s24, 1
    %p178 = por %p176, %p177
    %p180 = scmp.ne.s32.totalorder %s165, %s179
    %p181 = scmp.eq.s32.totalorder %s24, 0
    %p182 = por %p180, %p181
    %s184 = sadd.s32 %s183, 1
    %p187 = scmp.eq.s32.totalorder %s18, 1
    %p188 = scmp.ne.s32.totalorder %s183, %s185
    %p189 = scmp.eq.s32.totalorder %s18, 0
    %p190 = por %p188, %p189
    %p191 = scmp.ne.s32.totalorder %s183, %s185
    %p192 = scmp.eq.s32.totalorder %s23, 1
    %p193 = por %p191, %p192
    %p194 = scmp.ne.s32.totalorder %s185, %s186
    %p195 = scmp.eq.s32.totalorder %s23, 0
    %p196 = por %p194, %p195
    %p197 = scmp.ne.s32.totalorder %s185, %s186
    %p198 = scmp.eq.s32.totalorder %s24, 1
    %p199 = por %p197, %p198
    %p201 = scmp.ne.s32.totalorder %s186, %s200
    %p202 = scmp.eq.s32.totalorder %s24, 0
    %p203 = por %p201, %p202
    %s205 = sadd.s32 %s204, 1
    %p208 = scmp.eq.s32.totalorder %s18, 1
    %p209 = scmp.ne.s32.totalorder %s204, %s206
    %p210 = scmp.eq.s32.totalorder %s18, 0
    %p211 = por %p209, %p210
    %p212 = scmp.ne.s32.totalorder %s204, %s206
    %p213 = scmp.eq.s32.totalorder %s23, 1
    %p214 = por %p212, %p213
    %p215 = scmp.ne.s32.totalorder %s206, %s207
    %p216 = scmp.eq.s32.totalorder %s23, 0
    %p217 = por %p215, %p216
    %p218 = scmp.ne.s32.totalorder %s206, %s207
    %p219 = scmp.eq.s32.totalorder %s24, 1
    %p220 = por %p218, %p219
    %p222 = scmp.ne.s32.totalorder %s207, %s221
    %p223 = scmp.eq.s32.totalorder %s24, 0
    %p224 = por %p222, %p223
    %s226 = sadd.s32 %s225, 1
    %p229 = scmp.eq.s32.totalorder %s18, 1
    %p230 = scmp.ne.s32.totalorder %s225, %s227
    %p231 = scmp.eq.s32.totalorder %s18, 0
    %p232 = por %p230, %p231
    %p233 = scmp.ne.s32.totalorder %s225, %s227
    %p234 = scmp.eq.s32.totalorder %s23, 1
    %p235 = por %p233, %p234
    %p236 = scmp.ne.s32.totalorder %s227, %s228
    %p237 = scmp.eq.s32.totalorder %s23, 0
    %p238 = por %p236, %p237
    %p239 = scmp.ne.s32.totalorder %s227, %s228
    %p240 = scmp.eq.s32.totalorder %s24, 1
    %p241 = por %p239, %p240
    %p243 = scmp.ne.s32.totalorder %s228, %s242
    %p244 = scmp.eq.s32.totalorder %s24, 0
    %p245 = por %p243, %p244
    %s247 = sadd.s32 %s246, 1
    %p250 = scmp.eq.s32.totalorder %s18, 1
    %p251 = scmp.ne.s32.totalorder %s246, %s248
    %p252 = scmp.eq.s32.totalorder %s18, 0
    %p253 = por %p251, %p252
    %p254 = scmp.ne.s32.totalorder %s246, %s248
    %p255 = scmp.eq.s32.totalorder %s23, 1
    %p256 = por %p254, %p255
    %p257 = scmp.ne.s32.totalorder %s248, %s249
    %p258 = scmp.eq.s32.totalorder %s23, 0
    %p259 = por %p257, %p258
    %p260 = scmp.ne.s32.totalorder %s248, %s249
    %p261 = scmp.eq.s32.totalorder %s24, 1
    %p262 = por %p260, %p261
    %p264 = scmp.ne.s32.totalorder %s249, %s263
    %p265 = scmp.eq.s32.totalorder %s24, 0
    %p266 = por %p264, %p265
    %s268 = sadd.s32 %s267, 1
    %p271 = scmp.eq.s32.totalorder %s18, 1
    %p272 = scmp.ne.s32.totalorder %s267, %s269
    %p273 = scmp.eq.s32.totalorder %s18, 0
    %p274 = por %p272, %p273
    %p275 = scmp.ne.s32.totalorder %s267, %s269
    %p276 = scmp.eq.s32.totalorder %s23, 1
    %p277 = por %p275, %p276
    %p278 = scmp.ne.s32.totalorder %s269, %s270
    %p279 = scmp.eq.s32.totalorder %s23, 0
    %p280 = por %p278, %p279
    %p281 = scmp.ne.s32.totalorder %s269, %s270
    %p282 = scmp.eq.s32.totalorder %s24, 1
    %p283 = por %p281, %p282
    %p285 = scmp.ne.s32.totalorder %s270, %s284
    %p286 = scmp.eq.s32.totalorder %s24, 0
    %p287 = por %p285, %p286
    %s288 = ssub.s32 %s18, %s25
    %p289 = scmp.eq.s32.totalorder %s288, 0
    %s291 = sadd.s32 %s290, 1
    %s292 = scalar_select %p289, %s290, %s291
    %p295 = pneg %p289
    %p296 = scmp.eq.s32.totalorder %s18, 1
    %p297 = por %p295, %p296
    %p298 = scmp.ne.s32.totalorder %s290, %s293
    %p299 = scmp.eq.s32.totalorder %s18, 0
    %p300 = por %p298, %p299
    %p301 = scmp.ne.s32.totalorder %s290, %s293
    %p302 = scmp.eq.s32.totalorder %s23, 1
    %p303 = por %p301, %p302
    %p304 = scmp.ne.s32.totalorder %s293, %s294
    %p305 = scmp.eq.s32.totalorder %s23, 0
    %p306 = por %p304, %p305
    %p307 = scmp.ne.s32.totalorder %s293, %s294
    %p308 = scmp.eq.s32.totalorder %s24, 1
    %p309 = por %p307, %p308
    %p311 = scmp.ne.s32.totalorder %s294, %s310
    %p312 = scmp.eq.s32.totalorder %s24, 0
    %p313 = por %p311, %p312
    %p314 = scmp.le.s32.totalorder 1, %s18
    %p315 = scmp.lt.s32.totalorder %s18, 3
    %p316 = pnand %p314, %p315
    %p317 = pneg %p316
    // Predicated region
    $region9: #{transformer_decoder_layer.4} parent=5 // pred_check
      _
    $region10: #{transformer_decoder_layer.4} parent=5 // pred_check_branch
      %319 = sbr.rel (%p316) target = $region12
    $region11: #{transformer_decoder_layer.4} parent=5 // pred_region
      %s320 = ssub.s32 %s18, 1
      // Predicated region
      $region13: #{transformer_decoder_layer.4} parent=11 // pred_check
        %p321 = pneg %p91
      $region14: #{transformer_decoder_layer.4} parent=11 // pred_check_branch
        %323 = sbr.rel (%p321) target = $region16
      $region15: #{transformer_decoder_layer.4} parent=11 // pred_region
        _
      $region16: #{transformer_decoder_layer.4} parent=11 // pred_fallthru
        _
      // Predicated region
      $region17: #{transformer_decoder_layer.4} parent=11 // pred_check
        %p324 = pneg %p112
      $region18: #{transformer_decoder_layer.4} parent=11 // pred_check_branch
        %326 = sbr.rel (%p324) target = $region20
      $region19: #{transformer_decoder_layer.4} parent=11 // pred_region
        _
      $region20: #{transformer_decoder_layer.4} parent=11 // pred_fallthru
        _
      // Predicated region
      $region21: #{transformer_decoder_layer.4} parent=11 // pred_check
        %p327 = pneg %p133
      $region22: #{transformer_decoder_layer.4} parent=11 // pred_check_branch
        %329 = sbr.rel (%p327) target = $region24
      $region23: #{transformer_decoder_layer.4} parent=11 // pred_region
        _
      $region24: #{transformer_decoder_layer.4} parent=11 // pred_fallthru
        _
      // Predicated region
      $region25: #{transformer_decoder_layer.4} parent=11 // pred_check
        %p330 = pneg %p154
      $region26: #{transformer_decoder_layer.4} parent=11 // pred_check_branch
        %332 = sbr.rel (%p330) target = $region28
      $region27: #{transformer_decoder_layer.4} parent=11 // pred_region
        _
      $region28: #{transformer_decoder_layer.4} parent=11 // pred_fallthru
        _
      // Predicated region
      $region29: #{transformer_decoder_layer.4} parent=11 // pred_check
        %p333 = pneg %p175
      $region30: #{transformer_decoder_layer.4} parent=11 // pred_check_branch
        %335 = sbr.rel (%p333) target = $region32
      $region31: #{transformer_decoder_layer.4} parent=11 // pred_region
        _
      $region32: #{transformer_decoder_layer.4} parent=11 // pred_fallthru
        _
      // Predicated region
      $region33: #{transformer_decoder_layer.4} parent=11 // pred_check
        %p336 = pneg %p196
      $region34: #{transformer_decoder_layer.4} parent=11 // pred_check_branch
        %338 = sbr.rel (%p336) target = $region36
      $region35: #{transformer_decoder_layer.4} parent=11 // pred_region
        _
      $region36: #{transformer_decoder_layer.4} parent=11 // pred_fallthru
        _
      // Predicated region
      $region37: #{transformer_decoder_layer.4} parent=11 // pred_check
        %p339 = pneg %p217
      $region38: #{transformer_decoder_layer.4} parent=11 // pred_check_branch
        %341 = sbr.rel (%p339) target = $region40
      $region39: #{transformer_decoder_layer.4} parent=11 // pred_region
        _
      $region40: #{transformer_decoder_layer.4} parent=11 // pred_fallthru
        _
      // Predicated region
      $region41: #{transformer_decoder_layer.4} parent=11 // pred_check
        %p342 = pneg %p238
      $region42: #{transformer_decoder_layer.4} parent=11 // pred_check_branch
        %344 = sbr.rel (%p342) target = $region44
      $region43: #{transformer_decoder_layer.4} parent=11 // pred_region
        _
      $region44: #{transformer_decoder_layer.4} parent=11 // pred_fallthru
        _
      // Predicated region
      $region45: #{transformer_decoder_layer.4} parent=11 // pred_check
        %p345 = pneg %p259
      $region46: #{transformer_decoder_layer.4} parent=11 // pred_check_branch
        %347 = sbr.rel (%p345) target = $region48
      $region47: #{transformer_decoder_layer.4} parent=11 // pred_region
        _
      $region48: #{transformer_decoder_layer.4} parent=11 // pred_fallthru
        _
      // Predicated region
      $region49: #{transformer_decoder_layer.4} parent=11 // pred_check
        %p348 = pneg %p280
      $region50: #{transformer_decoder_layer.4} parent=11 // pred_check_branch
        %350 = sbr.rel (%p348) target = $region52
      $region51: #{transformer_decoder_layer.4} parent=11 // pred_region
        _
      $region52: #{transformer_decoder_layer.4} parent=11 // pred_fallthru
        _
    $region12: #{transformer_decoder_layer.4} parent=5 // pred_fallthru
      _
    %p351 = scmp.lt.s32.totalorder %s18, 2
    // Predicated region
    $region53: #{transformer_decoder_layer.4} parent=5 // pred_check
      %p352 = pneg %p351
    $region54: #{transformer_decoder_layer.4} parent=5 // pred_check_branch
      %354 = sbr.rel (%p352) target = $region56
    $region55: #{transformer_decoder_layer.4} parent=5 // pred_region
      // Predicated region
      $region57: #{transformer_decoder_layer.4} parent=55 // pred_check
        %p355 = pneg %p38
      $region58: #{transformer_decoder_layer.4} parent=55 // pred_check_branch
        %357 = sbr.rel (%p355) target = $region60
      $region59: #{transformer_decoder_layer.4} parent=55 // pred_region
        %p358 = scmp.lt.s32.totalorder %s18, 1
        %s359 = scalar_select %p358, %s18, 1
        %s360 = smul.addr %s359, 8
        %s361 = scalar_lea.vmem %s0, %s360
      $region60: #{transformer_decoder_layer.4} parent=55 // pred_fallthru
        _
      // Predicated region
      $region61: #{transformer_decoder_layer.4} parent=55 // pred_check
        %p362 = pneg %p64
      $region62: #{transformer_decoder_layer.4} parent=55 // pred_check_branch
        %364 = sbr.rel (%p362) target = $region64
      $region63: #{transformer_decoder_layer.4} parent=55 // pred_region
        %p365 = scmp.lt.s32.totalorder %s18, 1
        %s366 = scalar_select %p365, %s18, 1
        %s367 = smul.addr %s366, 2
        %s368 = smul.addr %s367, 8
        %s369 = scalar_lea.vmem %s1, %s368
      $region64: #{transformer_decoder_layer.4} parent=55 // pred_fallthru
        _
    $region56: #{transformer_decoder_layer.4} parent=5 // pred_fallthru
      _
    %p370 = scmp.le.s32.totalorder 1, %s18
    %p371 = scmp.lt.s32.totalorder %s18, 3
    %p372 = pnand %p370, %p371
    %p373 = pneg %p372
    // Predicated region
    $region65: #{transformer_decoder_layer.4} parent=5 // pred_check
      _
    $region66: #{transformer_decoder_layer.4} parent=5 // pred_check_branch
      %375 = sbr.rel (%p372) target = $region68
    $region67: #{transformer_decoder_layer.4} parent=5 // pred_region
      %s376 = ssub.s32 %s18, 1
      %p377 = scmp.lt.s32.totalorder %s23, 1
      %s378 = scalar_select %p377, %s23, 1
      %s379 = smul.addr %s378, 8
      %s380 = scalar_lea.vmem %s0, %s379
      %p381 = pneg %p44
      %p382 = pneg %p41
      %p383 = scmp.lt.s32.totalorder %s23, 1
      %s384 = scalar_select %p383, %s23, 1
      %s385 = smul.addr %s384, 2
      %s386 = smul.addr %s385, 8
      %s387 = scalar_lea.vmem %s1, %s386
      %p388 = pneg %p70
      %p389 = pneg %p67
      %p390 = pneg %p91
      %p391 = pneg %p88
      %p392 = pneg %p112
      %p393 = pneg %p109
      %p394 = pneg %p133
      %p395 = pneg %p130
      %p396 = pneg %p154
      %p397 = pneg %p151
      %p398 = pneg %p175
      %p399 = pneg %p172
      %p400 = pneg %p196
      %p401 = pneg %p193
      %p402 = pneg %p217
      %p403 = pneg %p214
      %p404 = pneg %p238
      %p405 = pneg %p235
      %p406 = pneg %p259
      %p407 = pneg %p256
      %p408 = pneg %p280
      %p409 = pneg %p277
      %p410 = pneg %p306
      %p411 = pneg %p303
      %p412 = scmp.lt.s32.totalorder %s23, 1
      %s413 = scalar_select %p412, %s23, 1
      %s414 = smul.addr %s413, 8
      %s415 = scalar_lea.vmem %s12, %s414
      %p416 = scmp.lt.s32.totalorder %s23, 1
      %s417 = scalar_select %p416, %s23, 1
      %s418 = smul.addr %s417, 8
      %s419 = scalar_lea.vmem %s0, %s418
      %p420 = scmp.lt.s32.totalorder %s23, 1
      %s421 = scalar_select %p420, %s23, 1
      %s422 = smul.addr %s421, 2
      %s423 = smul.addr %s422, 8
      %s424 = scalar_lea.vmem %s1, %s423
      %p425 = scmp.lt.s32.totalorder %s23, 1
      %s426 = scalar_select %p425, %s23, 1
      %s427 = smul.addr %s426, 8
      %s428 = scalar_lea.vmem %s12, %s427
      %v429 = vld [vmem:[%s419] sm:$0xff]
      %v430 = vld [vmem:[%s2] sm:$0x1]
      %v431 = vld [vmem:[%s3] sm:$0x1]
      %vm432 = vcmask 261120
      %v433 = vsel %vm432, %v429, 0.0
      %434 = vadd.xlane.f32.xlu0 %v433
      %v435 = vpop.xlane.xlu0 %434
      %v436 = vrcp.pop 32.0
      %v437 = vmul.f32 %v435, %v436
      %v438 = vsub.f32 %v429, %v437
      %v439 = vmul.f32 %v438, %v438
      %v440 = vsel %vm432, %v439, 0.0
      %441 = vadd.xlane.f32.xlu0 %v440
      %v442 = vpop.xlane.xlu0 %441
      %v443 = vmul.f32 %v442, %v436
      %v444 = vadd.f32 %v443, 1e-05
      %v445 = vrsqrt.pop %v444
      %v446 = vmul.f32 %v438, %v445
      %v448 = vlaneseq
      %v449 = vshrl.u32 %v448, 7
      %v450 = vsub.s32 0, %v449
      %v451 = vrot.slane %v430, %v450
      %v453 = vmul.f32 %v446, %v451
      %v455 = vlaneseq
      %v456 = vshrl.u32 %v455, 7
      %v457 = vsub.s32 0, %v456
      %v458 = vrot.slane %v431, %v457
      %v460 = vadd.f32 %v453, %v458
      %v461 = vld [vmem:[%s424] sm:$0xff]
      %v462 = vld [vmem:[%s424 + $0x8] sm:$0xff]
      %v463 = vld [vmem:[%s4] sm:$0xff]
      %v464 = vld [vmem:[%s4 + $0x8] sm:$0xff]
      %v465 = vld [vmem:[%s4 + $0x10] sm:$0xff]
      %v466 = vld [vmem:[%s4 + $0x18] sm:$0xff]
      %v467 = vld [vmem:[%s5] sm:$0x1]
      %v469 = vlaneseq
      %v470 = vshrl.u32 %v469, 7
      %v471 = vsub.s32 0, %v470
      %v472 = vrot.slane %v467, %v471
      %v475 = vsel %vm432, %v460, 0
      %477 = vmatprep.subr.mxu0 0.0
      %478 = vmatpush1.msra.mxu0 %v463
      %479 = vmatprep.subr.mxu0 0.0
      %480 = vmatpush1.msra.mxu0 %v464
      %481 = vmatprep.subr.mxu0 0.0
      %482 = vmatpush1.msra.mxu0 %v465
      %483 = vmatprep.subr.mxu0 0.0
      %484 = vmatpush1.msra.mxu0 %v466
      %485 = vmatprep.subr.mxu0 0.0
      %486 = vmatpush1.msra.mxu0 0.0
      %487 = vmatprep.subr.mxu0 0.0
      %488 = vmatpush1.msra.mxu0 0.0
      %489 = vmatprep.subr.mxu0 0.0
      %490 = vmatpush1.msra.mxu0 0.0
      %491 = vmatprep.subr.mxu0 0.0
      %492 = vmatpush1.msra.mxu0 0.0
      %493 = vmatprep.subr.mxu0 0.0
      %494 = vmatpush1.msra.mxu0 0.0
      %495 = vmatprep.subr.mxu0 0.0
      %496 = vmatpush1.msra.mxu0 0.0
      %497 = vmatprep.subr.mxu0 0.0
      %498 = vmatpush1.msra.mxu0 0.0
      %499 = vmatprep.subr.mxu0 0.0
      %500 = vmatpush1.msra.mxu0 0.0
      %501 = vmatprep.subr.mxu0 0.0
      %502 = vmatpush1.msra.mxu0 0.0
      %503 = vmatprep.subr.mxu0 0.0
      %504 = vmatpush1.msra.mxu0 0.0
      %505 = vmatprep.subr.mxu0 0.0
      %506 = vmatpush1.msra.mxu0 0.0
      %507 = vmatprep.subr.mxu0 0.0
      %508 = vmatpush1.msra.mxu0 0.0
      %509 = vmatprep.subr.mxu0 0.0
      %510 = vmatpush1.msra.mxu0 0.0
      %511 = vmatprep.subr.mxu0 0.0
      %512 = vmatpush1.msra.mxu0 0.0
      %513 = vmatprep.subr.mxu0 0.0
      %514 = vmatpush1.msra.mxu0 0.0
      %515 = vmatprep.subr.mxu0 0.0
      %516 = vmatpush1.msra.mxu0 0.0
      %517 = vmatprep.subr.mxu0 0.0
      %518 = vmatpush1.msra.mxu0 0.0
      %519 = vmatprep.subr.mxu0 0.0
      %520 = vmatpush1.msra.mxu0 0.0
      %521 = vmatprep.subr.mxu0 0.0
      %522 = vmatpush1.msra.mxu0 0.0
      %523 = vmatprep.subr.mxu0 0.0
      %524 = vmatpush1.msra.mxu0 0.0
      %525 = vmatprep.subr.mxu0 0.0
      %526 = vmatpush1.msra.mxu0 0.0
      %527 = vmatprep.subr.mxu0 0.0
      %528 = vmatpush1.msra.mxu0 0.0
      %529 = vmatprep.subr.mxu0 0.0
      %530 = vmatpush1.msra.mxu0 0.0
      %531 = vmatprep.subr.mxu0 0.0
      %532 = vmatpush1.msra.mxu0 0.0
      %533 = vmatprep.subr.mxu0 0.0
      %534 = vmatpush1.msra.mxu0 0.0
      %535 = vmatprep.subr.mxu0 0.0
      %536 = vmatpush1.msra.mxu0 0.0
      %537 = vmatprep.subr.mxu0 0.0
      %538 = vmatpush1.msra.mxu0 0.0
      %539 = vmatprep.subr.mxu0 0.0
      %540 = vmatpush1.msra.mxu0 0.0
      %541 = vmatprep.mubr.f32.mxu0 0.0
      %542 = vmatmul.mubr.f32.gmra.mrb[0].mxu0 %v475
      %v543 = vpop.f32.mrb[0].mxu0
      %v544 = vadd.f32 %v472, %v543
      %v545 = vpop.f32.mrb[0].mxu0
      %546 = vdwg.mxu0
      %v547 = vld [vmem:[%s6] sm:$0xff]
      %v548 = vld [vmem:[%s6 + $0x8] sm:$0xff]
      %v549 = vld [vmem:[%s6 + $0x10] sm:$0xff]
      %v550 = vld [vmem:[%s6 + $0x18] sm:$0xff]
      %v551 = vld [vmem:[%s7] sm:$0x1]
      %v553 = vlaneseq
      %v554 = vshrl.u32 %v553, 7
      %v555 = vsub.s32 0, %v554
      %v556 = vrot.slane %v551, %v555
      %v559 = vsel %vm432, %v461, 0
      %v562 = vsel %vm432, %v462, 0
      %564 = vmatprep.subr.mxu0 0.0
      %565 = vmatpush1.msra.mxu0 %v547
      %566 = vmatprep.subr.mxu0 0.0
      %567 = vmatpush1.msra.mxu0 %v548
      %568 = vmatprep.subr.mxu0 0.0
      %569 = vmatpush1.msra.mxu0 %v549
      %570 = vmatprep.subr.mxu0 0.0
      %571 = vmatpush1.msra.mxu0 %v550
      %572 = vmatprep.subr.mxu0 0.0
      %573 = vmatpush1.msra.mxu0 0.0
      %574 = vmatprep.subr.mxu0 0.0
      %575 = vmatpush1.msra.mxu0 0.0
      %576 = vmatprep.subr.mxu0 0.0
      %577 = vmatpush1.msra.mxu0 0.0
      %578 = vmatprep.subr.mxu0 0.0
      %579 = vmatpush1.msra.mxu0 0.0
      %580 = vmatprep.subr.mxu0 0.0
      %581 = vmatpush1.msra.mxu0 0.0
      %582 = vmatprep.subr.mxu0 0.0
      %583 = vmatpush1.msra.mxu0 0.0
      %584 = vmatprep.subr.mxu0 0.0
      %585 = vmatpush1.msra.mxu0 0.0
      %586 = vmatprep.subr.mxu0 0.0
      %587 = vmatpush1.msra.mxu0 0.0
      %588 = vmatprep.subr.mxu0 0.0
      %589 = vmatpush1.msra.mxu0 0.0
      %590 = vmatprep.subr.mxu0 0.0
      %591 = vmatpush1.msra.mxu0 0.0
      %592 = vmatprep.subr.mxu0 0.0
      %593 = vmatpush1.msra.mxu0 0.0
      %594 = vmatprep.subr.mxu0 0.0
      %595 = vmatpush1.msra.mxu0 0.0
      %596 = vmatprep.subr.mxu0 0.0
      %597 = vmatpush1.msra.mxu0 0.0
      %598 = vmatprep.subr.mxu0 0.0
      %599 = vmatpush1.msra.mxu0 0.0
      %600 = vmatprep.subr.mxu0 0.0
      %601 = vmatpush1.msra.mxu0 0.0
      %602 = vmatprep.subr.mxu0 0.0
      %603 = vmatpush1.msra.mxu0 0.0
      %604 = vmatprep.subr.mxu0 0.0
      %605 = vmatpush1.msra.mxu0 0.0
      %606 = vmatprep.subr.mxu0 0.0
      %607 = vmatpush1.msra.mxu0 0.0
      %608 = vmatprep.subr.mxu0 0.0
      %609 = vmatpush1.msra.mxu0 0.0
      %610 = vmatprep.subr.mxu0 0.0
      %611 = vmatpush1.msra.mxu0 0.0
      %612 = vmatprep.subr.mxu0 0.0
      %613 = vmatpush1.msra.mxu0 0.0
      %614 = vmatprep.subr.mxu0 0.0
      %615 = vmatpush1.msra.mxu0 0.0
      %616 = vmatprep.subr.mxu0 0.0
      %617 = vmatpush1.msra.mxu0 0.0
      %618 = vmatprep.subr.mxu0 0.0
      %619 = vmatpush1.msra.mxu0 0.0
      %620 = vmatprep.subr.mxu0 0.0
      %621 = vmatpush1.msra.mxu0 0.0
      %622 = vmatprep.subr.mxu0 0.0
      %623 = vmatpush1.msra.mxu0 0.0
      %624 = vmatprep.subr.mxu0 0.0
      %625 = vmatpush1.msra.mxu0 0.0
      %626 = vmatprep.subr.mxu0 0.0
      %627 = vmatpush1.msra.mxu0 0.0
      %628 = vmatprep.mubr.f32.mxu0 0.0
      %629 = vmatmul.mubr.f32.gmra.mrb[0].mxu0 %v559
      %v630 = vpop.f32.mrb[0].mxu0
      %v631 = vadd.f32 %v556, %v630
      %v632 = vpop.f32.mrb[0].mxu0
      %633 = vmatprep.mubr.f32.mxu0 0.0
      %634 = vmatmul.mubr.f32.gmra.mrb[0].mxu0 %v562
      %v635 = vpop.f32.mrb[0].mxu0
      %v636 = vadd.f32 %v556, %v635
      %v637 = vpop.f32.mrb[0].mxu0
      %638 = vdwg.mxu0
      %v639 = vld [vmem:[%s8] sm:$0xff]
      %v640 = vld [vmem:[%s8 + $0x8] sm:$0xff]
      %v641 = vld [vmem:[%s8 + $0x10] sm:$0xff]
      %v642 = vld [vmem:[%s8 + $0x18] sm:$0xff]
      %v643 = vld [vmem:[%s9] sm:$0x1]
      %v645 = vlaneseq
      %v646 = vshrl.u32 %v645, 7
      %v647 = vsub.s32 0, %v646
      %v648 = vrot.slane %v643, %v647
      %650 = vmatprep.subr.mxu0 0.0
      %651 = vmatpush1.msra.mxu0 %v639
      %652 = vmatprep.subr.mxu0 0.0
      %653 = vmatpush1.msra.mxu0 %v640
      %654 = vmatprep.subr.mxu0 0.0
      %655 = vmatpush1.msra.mxu0 %v641
      %656 = vmatprep.subr.mxu0 0.0
      %657 = vmatpush1.msra.mxu0 %v642
      %658 = vmatprep.subr.mxu0 0.0
      %659 = vmatpush1.msra.mxu0 0.0
      %660 = vmatprep.subr.mxu0 0.0
      %661 = vmatpush1.msra.mxu0 0.0
      %662 = vmatprep.subr.mxu0 0.0
      %663 = vmatpush1.msra.mxu0 0.0
      %664 = vmatprep.subr.mxu0 0.0
      %665 = vmatpush1.msra.mxu0 0.0
      %666 = vmatprep.subr.mxu0 0.0
      %667 = vmatpush1.msra.mxu0 0.0
      %668 = vmatprep.subr.mxu0 0.0
      %669 = vmatpush1.msra.mxu0 0.0
      %670 = vmatprep.subr.mxu0 0.0
      %671 = vmatpush1.msra.mxu0 0.0
      %672 = vmatprep.subr.mxu0 0.0
      %673 = vmatpush1.msra.mxu0 0.0
      %674 = vmatprep.subr.mxu0 0.0
      %675 = vmatpush1.msra.mxu0 0.0
      %676 = vmatprep.subr.mxu0 0.0
      %677 = vmatpush1.msra.mxu0 0.0
      %678 = vmatprep.subr.mxu0 0.0
      %679 = vmatpush1.msra.mxu0 0.0
      %680 = vmatprep.subr.mxu0 0.0
      %681 = vmatpush1.msra.mxu0 0.0
      %682 = vmatprep.subr.mxu0 0.0
      %683 = vmatpush1.msra.mxu0 0.0
      %684 = vmatprep.subr.mxu0 0.0
      %685 = vmatpush1.msra.mxu0 0.0
      %686 = vmatprep.subr.mxu0 0.0
      %687 = vmatpush1.msra.mxu0 0.0
      %688 = vmatprep.subr.mxu0 0.0
      %689 = vmatpush1.msra.mxu0 0.0
      %690 = vmatprep.subr.mxu0 0.0
      %691 = vmatpush1.msra.mxu0 0.0
      %692 = vmatprep.subr.mxu0 0.0
      %693 = vmatpush1.msra.mxu0 0.0
      %694 = vmatprep.subr.mxu0 0.0
      %695 = vmatpush1.msra.mxu0 0.0
      %696 = vmatprep.subr.mxu0 0.0
      %697 = vmatpush1.msra.mxu0 0.0
      %698 = vmatprep.subr.mxu0 0.0
      %699 = vmatpush1.msra.mxu0 0.0
      %700 = vmatprep.subr.mxu0 0.0
      %701 = vmatpush1.msra.mxu0 0.0
      %702 = vmatprep.subr.mxu0 0.0
      %703 = vmatpush1.msra.mxu0 0.0
      %704 = vmatprep.subr.mxu0 0.0
      %705 = vmatpush1.msra.mxu0 0.0
      %706 = vmatprep.subr.mxu0 0.0
      %707 = vmatpush1.msra.mxu0 0.0
      %708 = vmatprep.subr.mxu0 0.0
      %709 = vmatpush1.msra.mxu0 0.0
      %710 = vmatprep.subr.mxu0 0.0
      %711 = vmatpush1.msra.mxu0 0.0
      %712 = vmatprep.subr.mxu0 0.0
      %713 = vmatpush1.msra.mxu0 0.0
      %714 = vmatprep.mubr.f32.mxu0 0.0
      %715 = vmatmul.mubr.f32.gmra.mrb[0].mxu0 %v559
      %v716 = vpop.f32.mrb[0].mxu0
      %v717 = vadd.f32 %v648, %v716
      %v718 = vpop.f32.mrb[0].mxu0
      %719 = vmatprep.mubr.f32.mxu0 0.0
      %720 = vmatmul.mubr.f32.gmra.mrb[0].mxu0 %v562
      %v721 = vpop.f32.mrb[0].mxu0
      %v722 = vadd.f32 %v648, %v721
      %v723 = vpop.f32.mrb[0].mxu0
      %724 = vdwg.mxu0
      %vm725 = vcmask 64512
      %v727 = vsel %vm725, %v544, 0
      %v730 = vsel %vm725, %v631, 0
      %v733 = vsel %vm725, %v636, 0
      %735 = vmatprep.subr.mxu0 0.0
      %736 = vmatpush1.xpose.msra.mxu0 %v730
      %737 = vmatprep.subr.mxu0 0.0
      %738 = vmatpush1.xpose.msra.mxu0 %v733
      %739 = vmatprep.subr.mxu0 0.0
      %740 = vmatpush1.xpose.msra.mxu0 0.0
      %741 = vmatprep.subr.mxu0 0.0
      %742 = vmatpush1.xpose.msra.mxu0 0.0
      %743 = vmatprep.subr.mxu0 0.0
      %744 = vmatpush1.xpose.msra.mxu0 0.0
      %745 = vmatprep.subr.mxu0 0.0
      %746 = vmatpush1.xpose.msra.mxu0 0.0
      %747 = vmatprep.subr.mxu0 0.0
      %748 = vmatpush1.xpose.msra.mxu0 0.0
      %749 = vmatprep.subr.mxu0 0.0
      %750 = vmatpush1.xpose.msra.mxu0 0.0
      %751 = vmatprep.subr.mxu0 0.0
      %752 = vmatpush1.xpose.msra.mxu0 0.0
      %753 = vmatprep.subr.mxu0 0.0
      %754 = vmatpush1.xpose.msra.mxu0 0.0
      %755 = vmatprep.subr.mxu0 0.0
      %756 = vmatpush1.xpose.msra.mxu0 0.0
      %757 = vmatprep.subr.mxu0 0.0
      %758 = vmatpush1.xpose.msra.mxu0 0.0
      %759 = vmatprep.subr.mxu0 0.0
      %760 = vmatpush1.xpose.msra.mxu0 0.0
      %761 = vmatprep.subr.mxu0 0.0
      %762 = vmatpush1.xpose.msra.mxu0 0.0
      %763 = vmatprep.subr.mxu0 0.0
      %764 = vmatpush1.xpose.msra.mxu0 0.0
      %765 = vmatprep.subr.mxu0 0.0
      %766 = vmatpush1.xpose.msra.mxu0 0.0
      %767 = vmatprep.subr.mxu0 0.0
      %768 = vmatpush1.xpose.msra.mxu0 0.0
      %769 = vmatprep.subr.mxu0 0.0
      %770 = vmatpush1.xpose.msra.mxu0 0.0
      %771 = vmatprep.subr.mxu0 0.0
      %772 = vmatpush1.xpose.msra.mxu0 0.0
      %773 = vmatprep.subr.mxu0 0.0
      %774 = vmatpush1.xpose.msra.mxu0 0.0
      %775 = vmatprep.subr.mxu0 0.0
      %776 = vmatpush1.xpose.msra.mxu0 0.0
      %777 = vmatprep.subr.mxu0 0.0
      %778 = vmatpush1.xpose.msra.mxu0 0.0
      %779 = vmatprep.subr.mxu0 0.0
      %780 = vmatpush1.xpose.msra.mxu0 0.0
      %781 = vmatprep.subr.mxu0 0.0
      %782 = vmatpush1.xpose.msra.mxu0 0.0
      %783 = vmatprep.subr.mxu0 0.0
      %784 = vmatpush1.xpose.msra.mxu0 0.0
      %785 = vmatprep.subr.mxu0 0.0
      %786 = vmatpush1.xpose.msra.mxu0 0.0
      %787 = vmatprep.subr.mxu0 0.0
      %788 = vmatpush1.xpose.msra.mxu0 0.0
      %789 = vmatprep.subr.mxu0 0.0
      %790 = vmatpush1.xpose.msra.mxu0 0.0
      %791 = vmatprep.subr.mxu0 0.0
      %792 = vmatpush1.xpose.msra.mxu0 0.0
      %793 = vmatprep.subr.mxu0 0.0
      %794 = vmatpush1.xpose.msra.mxu0 0.0
      %795 = vmatprep.subr.mxu0 0.0
      %796 = vmatpush1.xpose.msra.mxu0 0.0
      %797 = vmatprep.subr.mxu0 0.0
      %798 = vmatpush1.xpose.msra.mxu0 0.0
      %799 = vmatprep.mubr.f32.mxu0 0.0
      %800 = vmatmul.mubr.f32.gmra.mrb[0].mxu0 %v727
      %v801 = vpop.f32.mrb[0].mxu0
      %v802 = vadd.f32 0.0, %v801
      %v803 = vpop.f32.mrb[0].mxu0
      %804 = vdwg.mxu0
      %v805 = vmul.f32 %v802, 0.35355338
      %vm806 = vcmask 130048
      %v807 = vsel %vm806, %v805, -inf
      %808 = vmax.xlane.f32.xlu0 %v807
      %v809 = vpop.xlane.xlu0 %808
      %v810 = vsub.f32 %v805, %v809
      %v811 = vmul.f32 %v810, 1.442695
      %v812 = vpow.pop %v811
      %v813 = vsel %vm806, %v812, 0.0
      %814 = vadd.xlane.f32.xlu0 %v813
      %v815 = vpop.xlane.xlu0 %814
      %v817 = vsel %vm806, %v812, 0
      %819 = vmatprep.subr.mxu0 0.0
      %820 = vmatpush1.msra.mxu0 %v717
      %821 = vmatprep.subr.mxu0 0.0
      %822 = vmatpush1.msra.mxu0 %v722
      %823 = vmatprep.subr.mxu0 0.0
      %824 = vmatpush1.msra.mxu0 0.0
      %825 = vmatprep.subr.mxu0 0.0
      %826 = vmatpush1.msra.mxu0 0.0
      %827 = vmatprep.subr.mxu0 0.0
      %828 = vmatpush1.msra.mxu0 0.0
      %829 = vmatprep.subr.mxu0 0.0
      %830 = vmatpush1.msra.mxu0 0.0
      %831 = vmatprep.subr.mxu0 0.0
      %832 = vmatpush1.msra.mxu0 0.0
      %833 = vmatprep.subr.mxu0 0.0
      %834 = vmatpush1.msra.mxu0 0.0
      %835 = vmatprep.subr.mxu0 0.0
      %836 = vmatpush1.msra.mxu0 0.0
      %837 = vmatprep.subr.mxu0 0.0
      %838 = vmatpush1.msra.mxu0 0.0
      %839 = vmatprep.subr.mxu0 0.0
      %840 = vmatpush1.msra.mxu0 0.0
      %841 = vmatprep.subr.mxu0 0.0
      %842 = vmatpush1.msra.mxu0 0.0
      %843 = vmatprep.subr.mxu0 0.0
      %844 = vmatpush1.msra.mxu0 0.0
      %845 = vmatprep.subr.mxu0 0.0
      %846 = vmatpush1.msra.mxu0 0.0
      %847 = vmatprep.subr.mxu0 0.0
      %848 = vmatpush1.msra.mxu0 0.0
      %849 = vmatprep.subr.mxu0 0.0
      %850 = vmatpush1.msra.mxu0 0.0
      %851 = vmatprep.subr.mxu0 0.0
      %852 = vmatpush1.msra.mxu0 0.0
      %853 = vmatprep.subr.mxu0 0.0
      %854 = vmatpush1.msra.mxu0 0.0
      %855 = vmatprep.subr.mxu0 0.0
      %856 = vmatpush1.msra.mxu0 0.0
      %857 = vmatprep.subr.mxu0 0.0
      %858 = vmatpush1.msra.mxu0 0.0
      %859 = vmatprep.subr.mxu0 0.0
      %860 = vmatpush1.msra.mxu0 0.0
      %861 = vmatprep.subr.mxu0 0.0
      %862 = vmatpush1.msra.mxu0 0.0
      %863 = vmatprep.subr.mxu0 0.0
      %864 = vmatpush1.msra.mxu0 0.0
      %865 = vmatprep.subr.mxu0 0.0
      %866 = vmatpush1.msra.mxu0 0.0
      %867 = vmatprep.subr.mxu0 0.0
      %868 = vmatpush1.msra.mxu0 0.0
      %869 = vmatprep.subr.mxu0 0.0
      %870 = vmatpush1.msra.mxu0 0.0
      %871 = vmatprep.subr.mxu0 0.0
      %872 = vmatpush1.msra.mxu0 0.0
      %873 = vmatprep.subr.mxu0 0.0
      %874 = vmatpush1.msra.mxu0 0.0
      %875 = vmatprep.subr.mxu0 0.0
      %876 = vmatpush1.msra.mxu0 0.0
      %877 = vmatprep.subr.mxu0 0.0
      %878 = vmatpush1.msra.mxu0 0.0
      %879 = vmatprep.subr.mxu0 0.0
      %880 = vmatpush1.msra.mxu0 0.0
      %881 = vmatprep.subr.mxu0 0.0
      %882 = vmatpush1.msra.mxu0 0.0
      %883 = vmatprep.mubr.f32.mxu0 0.0
      %884 = vmatmul.mubr.f32.gmra.mrb[0].mxu0 %v817
      %v885 = vpop.f32.mrb[0].mxu0
      %v886 = vadd.f32 0.0, %v885
      %v887 = vpop.f32.mrb[0].mxu0
      %888 = vdwg.mxu0
      %v889 = vrcp.pop %v815
      %v890 = vmul.f32 %v886, %v889
      %891 = vst.msk [vmem:[#allocation2] sm:$0xff] %vm725, %v890
      %892 = vrot.lane.b32.xlu0 %v544, 120
      %v893 = vpop.permute.xlu0 %892
      %894 = vrot.lane.b32.xlu0 %v631, 120
      %v895 = vpop.permute.xlu0 %894
      %896 = vrot.lane.b32.xlu0 %v636, 120
      %v897 = vpop.permute.xlu0 %896
      %v898 = vsel %vm725, %v893, 0
      %v900 = vsel %vm725, %v895, 0
      %v902 = vsel %vm725, %v897, 0
      %904 = vmatprep.subr.mxu0 0.0
      %905 = vmatpush1.xpose.msra.mxu0 %v900
      %906 = vmatprep.subr.mxu0 0.0
      %907 = vmatpush1.xpose.msra.mxu0 %v902
      %908 = vmatprep.subr.mxu0 0.0
      %909 = vmatpush1.xpose.msra.mxu0 0.0
      %910 = vmatprep.subr.mxu0 0.0
      %911 = vmatpush1.xpose.msra.mxu0 0.0
      %912 = vmatprep.subr.mxu0 0.0
      %913 = vmatpush1.xpose.msra.mxu0 0.0
      %914 = vmatprep.subr.mxu0 0.0
      %915 = vmatpush1.xpose.msra.mxu0 0.0
      %916 = vmatprep.subr.mxu0 0.0
      %917 = vmatpush1.xpose.msra.mxu0 0.0
      %918 = vmatprep.subr.mxu0 0.0
      %919 = vmatpush1.xpose.msra.mxu0 0.0
      %920 = vmatprep.subr.mxu0 0.0
      %921 = vmatpush1.xpose.msra.mxu0 0.0
      %922 = vmatprep.subr.mxu0 0.0
      %923 = vmatpush1.xpose.msra.mxu0 0.0
      %924 = vmatprep.subr.mxu0 0.0
      %925 = vmatpush1.xpose.msra.mxu0 0.0
      %926 = vmatprep.subr.mxu0 0.0
      %927 = vmatpush1.xpose.msra.mxu0 0.0
      %928 = vmatprep.subr.mxu0 0.0
      %929 = vmatpush1.xpose.msra.mxu0 0.0
      %930 = vmatprep.subr.mxu0 0.0
      %931 = vmatpush1.xpose.msra.mxu0 0.0
      %932 = vmatprep.subr.mxu0 0.0
      %933 = vmatpush1.xpose.msra.mxu0 0.0
      %934 = vmatprep.subr.mxu0 0.0
      %935 = vmatpush1.xpose.msra.mxu0 0.0
      %936 = vmatprep.subr.mxu0 0.0
      %937 = vmatpush1.xpose.msra.mxu0 0.0
      %938 = vmatprep.subr.mxu0 0.0
      %939 = vmatpush1.xpose.msra.mxu0 0.0
      %940 = vmatprep.subr.mxu0 0.0
      %941 = vmatpush1.xpose.msra.mxu0 0.0
      %942 = vmatprep.subr.mxu0 0.0
      %943 = vmatpush1.xpose.msra.mxu0 0.0
      %944 = vmatprep.subr.mxu0 0.0
      %945 = vmatpush1.xpose.msra.mxu0 0.0
      %946 = vmatprep.subr.mxu0 0.0
      %947 = vmatpush1.xpose.msra.mxu0 0.0
      %948 = vmatprep.subr.mxu0 0.0
      %949 = vmatpush1.xpose.msra.mxu0 0.0
      %950 = vmatprep.subr.mxu0 0.0
      %951 = vmatpush1.xpose.msra.mxu0 0.0
      %952 = vmatprep.subr.mxu0 0.0
      %953 = vmatpush1.xpose.msra.mxu0 0.0
      %954 = vmatprep.subr.mxu0 0.0
      %955 = vmatpush1.xpose.msra.mxu0 0.0
      %956 = vmatprep.subr.mxu0 0.0
      %957 = vmatpush1.xpose.msra.mxu0 0.0
      %958 = vmatprep.subr.mxu0 0.0
      %959 = vmatpush1.xpose.msra.mxu0 0.0
      %960 = vmatprep.subr.mxu0 0.0
      %961 = vmatpush1.xpose.msra.mxu0 0.0
      %962 = vmatprep.subr.mxu0 0.0
      %963 = vmatpush1.xpose.msra.mxu0 0.0
      %964 = vmatprep.subr.mxu0 0.0
      %965 = vmatpush1.xpose.msra.mxu0 0.0
      %966 = vmatprep.subr.mxu0 0.0
      %967 = vmatpush1.xpose.msra.mxu0 0.0
      %968 = vmatprep.mubr.f32.mxu0 0.0
      %969 = vmatmul.mubr.f32.gmra.mrb[0].mxu0 %v898
      %v970 = vpop.f32.mrb[0].mxu0
      %v971 = vadd.f32 0.0, %v970
      %v972 = vpop.f32.mrb[0].mxu0
      %973 = vdwg.mxu0
      %v974 = vmul.f32 %v971, 0.35355338
      %v975 = vsel %vm806, %v974, -inf
      %976 = vmax.xlane.f32.xlu0 %v975
      %v977 = vpop.xlane.xlu0 %976
      %v978 = vsub.f32 %v974, %v977
      %v979 = vmul.f32 %v978, 1.442695
      %v980 = vpow.pop %v979
      %v981 = vsel %vm806, %v980, 0.0
      %982 = vadd.xlane.f32.xlu0 %v981
      %v983 = vpop.xlane.xlu0 %982
      %986 = vrot.lane.b32.xlu0 %v717, 120
      %v987 = vpop.permute.xlu0 %986
      %988 = vrot.lane.b32.xlu0 %v722, 120
      %v989 = vpop.permute.xlu0 %988
      %v993 = vsel %vm806, %v980, 0
      %995 = vmatprep.subr.mxu0 0.0
      %996 = vmatpush1.msra.mxu0 %v987
      %997 = vmatprep.subr.mxu0 0.0
      %998 = vmatpush1.msra.mxu0 %v989
      %999 = vmatprep.subr.mxu0 0.0
      %1000 = vmatpush1.msra.mxu0 0.0
      %1001 = vmatprep.subr.mxu0 0.0
      %1002 = vmatpush1.msra.mxu0 0.0
      %1003 = vmatprep.subr.mxu0 0.0
      %1004 = vmatpush1.msra.mxu0 0.0
      %1005 = vmatprep.subr.mxu0 0.0
      %1006 = vmatpush1.msra.mxu0 0.0
      %1007 = vmatprep.subr.mxu0 0.0
      %1008 = vmatpush1.msra.mxu0 0.0
      %1009 = vmatprep.subr.mxu0 0.0
      %1010 = vmatpush1.msra.mxu0 0.0
      %1011 = vmatprep.subr.mxu0 0.0
      %1012 = vmatpush1.msra.mxu0 0.0
      %1013 = vmatprep.subr.mxu0 0.0
      %1014 = vmatpush1.msra.mxu0 0.0
      %1015 = vmatprep.subr.mxu0 0.0
      %1016 = vmatpush1.msra.mxu0 0.0
      %1017 = vmatprep.subr.mxu0 0.0
      %1018 = vmatpush1.msra.mxu0 0.0
      %1019 = vmatprep.subr.mxu0 0.0
      %1020 = vmatpush1.msra.mxu0 0.0
      %1021 = vmatprep.subr.mxu0 0.0
      %1022 = vmatpush1.msra.mxu0 0.0
      %1023 = vmatprep.subr.mxu0 0.0
      %1024 = vmatpush1.msra.mxu0 0.0
      %1025 = vmatprep.subr.mxu0 0.0
      %1026 = vmatpush1.msra.mxu0 0.0
      %1027 = vmatprep.subr.mxu0 0.0
      %1028 = vmatpush1.msra.mxu0 0.0
      %1029 = vmatprep.subr.mxu0 0.0
      %1030 = vmatpush1.msra.mxu0 0.0
      %1031 = vmatprep.subr.mxu0 0.0
      %1032 = vmatpush1.msra.mxu0 0.0
      %1033 = vmatprep.subr.mxu0 0.0
      %1034 = vmatpush1.msra.mxu0 0.0
      %1035 = vmatprep.subr.mxu0 0.0
      %1036 = vmatpush1.msra.mxu0 0.0
      %1037 = vmatprep.subr.mxu0 0.0
      %1038 = vmatpush1.msra.mxu0 0.0
      %1039 = vmatprep.subr.mxu0 0.0
      %1040 = vmatpush1.msra.mxu0 0.0
      %1041 = vmatprep.subr.mxu0 0.0
      %1042 = vmatpush1.msra.mxu0 0.0
      %1043 = vmatprep.subr.mxu0 0.0
      %1044 = vmatpush1.msra.mxu0 0.0
      %1045 = vmatprep.subr.mxu0 0.0
      %1046 = vmatpush1.msra.mxu0 0.0
      %1047 = vmatprep.subr.mxu0 0.0
      %1048 = vmatpush1.msra.mxu0 0.0
      %1049 = vmatprep.subr.mxu0 0.0
      %1050 = vmatpush1.msra.mxu0 0.0
      %1051 = vmatprep.subr.mxu0 0.0
      %1052 = vmatpush1.msra.mxu0 0.0
      %1053 = vmatprep.subr.mxu0 0.0
      %1054 = vmatpush1.msra.mxu0 0.0
      %1055 = vmatprep.subr.mxu0 0.0
      %1056 = vmatpush1.msra.mxu0 0.0
      %1057 = vmatprep.subr.mxu0 0.0
      %1058 = vmatpush1.msra.mxu0 0.0
      %1059 = vmatprep.mubr.f32.mxu0 0.0
      %1060 = vmatmul.mubr.f32.gmra.mrb[0].mxu0 %v993
      %v1061 = vpop.f32.mrb[0].mxu0
      %v1062 = vadd.f32 0.0, %v1061
      %v1063 = vpop.f32.mrb[0].mxu0
      %1064 = vdwg.mxu0
      %v1065 = vrcp.pop %v983
      %v1066 = vmul.f32 %v1062, %v1065
      %1068 = vrot.lane.b32.xlu0 %v1066, 8
      %v1069 = vpop.permute.xlu0 %1068
      %vm1071 = vcmask 130112
      %1072 = vst.msk [vmem:[#allocation2] sm:$0xff] %vm1071, %v1069
      %1073 = vrot.lane.b32.xlu0 %v544, 112
      %v1074 = vpop.permute.xlu0 %1073
      %1075 = vrot.lane.b32.xlu0 %v631, 112
      %v1076 = vpop.permute.xlu0 %1075
      %1077 = vrot.lane.b32.xlu0 %v636, 112
      %v1078 = vpop.permute.xlu0 %1077
      %v1079 = vsel %vm725, %v1074, 0
      %v1081 = vsel %vm725, %v1076, 0
      %v1083 = vsel %vm725, %v1078, 0
      %1085 = vmatprep.subr.mxu0 0.0
      %1086 = vmatpush1.xpose.msra.mxu0 %v1081
      %1087 = vmatprep.subr.mxu0 0.0
      %1088 = vmatpush1.xpose.msra.mxu0 %v1083
      %1089 = vmatprep.subr.mxu0 0.0
      %1090 = vmatpush1.xpose.msra.mxu0 0.0
      %1091 = vmatprep.subr.mxu0 0.0
      %1092 = vmatpush1.xpose.msra.mxu0 0.0
      %1093 = vmatprep.subr.mxu0 0.0
      %1094 = vmatpush1.xpose.msra.mxu0 0.0
      %1095 = vmatprep.subr.mxu0 0.0
      %1096 = vmatpush1.xpose.msra.mxu0 0.0
      %1097 = vmatprep.subr.mxu0 0.0
      %1098 = vmatpush1.xpose.msra.mxu0 0.0
      %1099 = vmatprep.subr.mxu0 0.0
      %1100 = vmatpush1.xpose.msra.mxu0 0.0
      %1101 = vmatprep.subr.mxu0 0.0
      %1102 = vmatpush1.xpose.msra.mxu0 0.0
      %1103 = vmatprep.subr.mxu0 0.0
      %1104 = vmatpush1.xpose.msra.mxu0 0.0
      %1105 = vmatprep.subr.mxu0 0.0
      %1106 = vmatpush1.xpose.msra.mxu0 0.0
      %1107 = vmatprep.subr.mxu0 0.0
      %1108 = vmatpush1.xpose.msra.mxu0 0.0
      %1109 = vmatprep.subr.mxu0 0.0
      %1110 = vmatpush1.xpose.msra.mxu0 0.0
      %1111 = vmatprep.subr.mxu0 0.0
      %1112 = vmatpush1.xpose.msra.mxu0 0.0
      %1113 = vmatprep.subr.mxu0 0.0
      %1114 = vmatpush1.xpose.msra.mxu0 0.0
      %1115 = vmatprep.subr.mxu0 0.0
      %1116 = vmatpush1.xpose.msra.mxu0 0.0
      %1117 = vmatprep.subr.mxu0 0.0
      %1118 = vmatpush1.xpose.msra.mxu0 0.0
      %1119 = vmatprep.subr.mxu0 0.0
      %1120 = vmatpush1.xpose.msra.mxu0 0.0
      %1121 = vmatprep.subr.mxu0 0.0
      %1122 = vmatpush1.xpose.msra.mxu0 0.0
      %1123 = vmatprep.subr.mxu0 0.0
      %1124 = vmatpush1.xpose.msra.mxu0 0.0
      %1125 = vmatprep.subr.mxu0 0.0
      %1126 = vmatpush1.xpose.msra.mxu0 0.0
      %1127 = vmatprep.subr.mxu0 0.0
      %1128 = vmatpush1.xpose.msra.mxu0 0.0
      %1129 = vmatprep.subr.mxu0 0.0
      %1130 = vmatpush1.xpose.msra.mxu0 0.0
      %1131 = vmatprep.subr.mxu0 0.0
      %1132 = vmatpush1.xpose.msra.mxu0 0.0
      %1133 = vmatprep.subr.mxu0 0.0
      %1134 = vmatpush1.xpose.msra.mxu0 0.0
      %1135 = vmatprep.subr.mxu0 0.0
      %1136 = vmatpush1.xpose.msra.mxu0 0.0
      %1137 = vmatprep.subr.mxu0 0.0
      %1138 = vmatpush1.xpose.msra.mxu0 0.0
      %1139 = vmatprep.subr.mxu0 0.0
      %1140 = vmatpush1.xpose.msra.mxu0 0.0
      %1141 = vmatprep.subr.mxu0 0.0
      %1142 = vmatpush1.xpose.msra.mxu0 0.0
      %1143 = vmatprep.subr.mxu0 0.0
      %1144 = vmatpush1.xpose.msra.mxu0 0.0
      %1145 = vmatprep.subr.mxu0 0.0
      %1146 = vmatpush1.xpose.msra.mxu0 0.0
      %1147 = vmatprep.subr.mxu0 0.0
      %1148 = vmatpush1.xpose.msra.mxu0 0.0
      %1149 = vmatprep.mubr.f32.mxu0 0.0
      %1150 = vmatmul.mubr.f32.gmra.mrb[0].mxu0 %v1079
      %v1151 = vpop.f32.mrb[0].mxu0
      %v1152 = vadd.f32 0.0, %v1151
      %v1153 = vpop.f32.mrb[0].mxu0
      %1154 = vdwg.mxu0
      %v1155 = vmul.f32 %v1152, 0.35355338
      %v1156 = vsel %vm806, %v1155, -inf
      %1157 = vmax.xlane.f32.xlu0 %v1156
      %v1158 = vpop.xlane.xlu0 %1157
      %v1159 = vsub.f32 %v1155, %v1158
      %v1160 = vmul.f32 %v1159, 1.442695
      %v1161 = vpow.pop %v1160
      %v1162 = vsel %vm806, %v1161, 0.0
      %1163 = vadd.xlane.f32.xlu0 %v1162
      %v1164 = vpop.xlane.xlu0 %1163
      %1165 = vrot.lane.b32.xlu0 %v717, 112
      %v1166 = vpop.permute.xlu0 %1165
      %1167 = vrot.lane.b32.xlu0 %v722, 112
      %v1168 = vpop.permute.xlu0 %1167
      %v1172 = vsel %vm806, %v1161, 0
      %1174 = vmatprep.subr.mxu0 0.0
      %1175 = vmatpush1.msra.mxu0 %v1166
      %1176 = vmatprep.subr.mxu0 0.0
      %1177 = vmatpush1.msra.mxu0 %v1168
      %1178 = vmatprep.subr.mxu0 0.0
      %1179 = vmatpush1.msra.mxu0 0.0
      %1180 = vmatprep.subr.mxu0 0.0
      %1181 = vmatpush1.msra.mxu0 0.0
      %1182 = vmatprep.subr.mxu0 0.0
      %1183 = vmatpush1.msra.mxu0 0.0
      %1184 = vmatprep.subr.mxu0 0.0
      %1185 = vmatpush1.msra.mxu0 0.0
      %1186 = vmatprep.subr.mxu0 0.0
      %1187 = vmatpush1.msra.mxu0 0.0
      %1188 = vmatprep.subr.mxu0 0.0
      %1189 = vmatpush1.msra.mxu0 0.0
      %1190 = vmatprep.subr.mxu0 0.0
      %1191 = vmatpush1.msra.mxu0 0.0
      %1192 = vmatprep.subr.mxu0 0.0
      %1193 = vmatpush1.msra.mxu0 0.0
      %1194 = vmatprep.subr.mxu0 0.0
      %1195 = vmatpush1.msra.mxu0 0.0
      %1196 = vmatprep.subr.mxu0 0.0
      %1197 = vmatpush1.msra.mxu0 0.0
      %1198 = vmatprep.subr.mxu0 0.0
      %1199 = vmatpush1.msra.mxu0 0.0
      %1200 = vmatprep.subr.mxu0 0.0
      %1201 = vmatpush1.msra.mxu0 0.0
      %1202 = vmatprep.subr.mxu0 0.0
      %1203 = vmatpush1.msra.mxu0 0.0
      %1204 = vmatprep.subr.mxu0 0.0
      %1205 = vmatpush1.msra.mxu0 0.0
      %1206 = vmatprep.subr.mxu0 0.0
      %1207 = vmatpush1.msra.mxu0 0.0
      %1208 = vmatprep.subr.mxu0 0.0
      %1209 = vmatpush1.msra.mxu0 0.0
      %1210 = vmatprep.subr.mxu0 0.0
      %1211 = vmatpush1.msra.mxu0 0.0
      %1212 = vmatprep.subr.mxu0 0.0
      %1213 = vmatpush1.msra.mxu0 0.0
      %1214 = vmatprep.subr.mxu0 0.0
      %1215 = vmatpush1.msra.mxu0 0.0
      %1216 = vmatprep.subr.mxu0 0.0
      %1217 = vmatpush1.msra.mxu0 0.0
      %1218 = vmatprep.subr.mxu0 0.0
      %1219 = vmatpush1.msra.mxu0 0.0
      %1220 = vmatprep.subr.mxu0 0.0
      %1221 = vmatpush1.msra.mxu0 0.0
      %1222 = vmatprep.subr.mxu0 0.0
      %1223 = vmatpush1.msra.mxu0 0.0
      %1224 = vmatprep.subr.mxu0 0.0
      %1225 = vmatpush1.msra.mxu0 0.0
      %1226 = vmatprep.subr.mxu0 0.0
      %1227 = vmatpush1.msra.mxu0 0.0
      %1228 = vmatprep.subr.mxu0 0.0
      %1229 = vmatpush1.msra.mxu0 0.0
      %1230 = vmatprep.subr.mxu0 0.0
      %1231 = vmatpush1.msra.mxu0 0.0
      %1232 = vmatprep.subr.mxu0 0.0
      %1233 = vmatpush1.msra.mxu0 0.0
      %1234 = vmatprep.subr.mxu0 0.0
      %1235 = vmatpush1.msra.mxu0 0.0
      %1236 = vmatprep.subr.mxu0 0.0
      %1237 = vmatpush1.msra.mxu0 0.0
      %1238 = vmatprep.mubr.f32.mxu0 0.0
      %1239 = vmatmul.mubr.f32.gmra.mrb[0].mxu0 %v1172
      %v1240 = vpop.f32.mrb[0].mxu0
      %v1241 = vadd.f32 0.0, %v1240
      %v1242 = vpop.f32.mrb[0].mxu0
      %1243 = vdwg.mxu0
      %v1244 = vrcp.pop %v1164
      %v1245 = vmul.f32 %v1241, %v1244
      %1247 = vrot.lane.b32.xlu0 %v1245, 16
      %v1248 = vpop.permute.xlu0 %1247
      %vm1250 = vcmask 195712
      %1251 = vst.msk [vmem:[#allocation2] sm:$0xff] %vm1250, %v1248
      %1252 = vrot.lane.b32.xlu0 %v544, 104
      %v1253 = vpop.permute.xlu0 %1252
      %1254 = vrot.lane.b32.xlu0 %v631, 104
      %v1255 = vpop.permute.xlu0 %1254
      %1256 = vrot.lane.b32.xlu0 %v636, 104
      %v1257 = vpop.permute.xlu0 %1256
      %v1258 = vsel %vm725, %v1253, 0
      %v1260 = vsel %vm725, %v1255, 0
      %v1262 = vsel %vm725, %v1257, 0
      %1264 = vmatprep.subr.mxu0 0.0
      %1265 = vmatpush1.xpose.msra.mxu0 %v1260
      %1266 = vmatprep.subr.mxu0 0.0
      %1267 = vmatpush1.xpose.msra.mxu0 %v1262
      %1268 = vmatprep.subr.mxu0 0.0
      %1269 = vmatpush1.xpose.msra.mxu0 0.0
      %1270 = vmatprep.subr.mxu0 0.0
      %1271 = vmatpush1.xpose.msra.mxu0 0.0
      %1272 = vmatprep.subr.mxu0 0.0
      %1273 = vmatpush1.xpose.msra.mxu0 0.0
      %1274 = vmatprep.subr.mxu0 0.0
      %1275 = vmatpush1.xpose.msra.mxu0 0.0
      %1276 = vmatprep.subr.mxu0 0.0
      %1277 = vmatpush1.xpose.msra.mxu0 0.0
      %1278 = vmatprep.subr.mxu0 0.0
      %1279 = vmatpush1.xpose.msra.mxu0 0.0
      %1280 = vmatprep.subr.mxu0 0.0
      %1281 = vmatpush1.xpose.msra.mxu0 0.0
      %1282 = vmatprep.subr.mxu0 0.0
      %1283 = vmatpush1.xpose.msra.mxu0 0.0
      %1284 = vmatprep.subr.mxu0 0.0
      %1285 = vmatpush1.xpose.msra.mxu0 0.0
      %1286 = vmatprep.subr.mxu0 0.0
      %1287 = vmatpush1.xpose.msra.mxu0 0.0
      %1288 = vmatprep.subr.mxu0 0.0
      %1289 = vmatpush1.xpose.msra.mxu0 0.0
      %1290 = vmatprep.subr.mxu0 0.0
      %1291 = vmatpush1.xpose.msra.mxu0 0.0
      %1292 = vmatprep.subr.mxu0 0.0
      %1293 = vmatpush1.xpose.msra.mxu0 0.0
      %1294 = vmatprep.subr.mxu0 0.0
      %1295 = vmatpush1.xpose.msra.mxu0 0.0
      %1296 = vmatprep.subr.mxu0 0.0
      %1297 = vmatpush1.xpose.msra.mxu0 0.0
      %1298 = vmatprep.subr.mxu0 0.0
      %1299 = vmatpush1.xpose.msra.mxu0 0.0
      %1300 = vmatprep.subr.mxu0 0.0
      %1301 = vmatpush1.xpose.msra.mxu0 0.0
      %1302 = vmatprep.subr.mxu0 0.0
      %1303 = vmatpush1.xpose.msra.mxu0 0.0
      %1304 = vmatprep.subr.mxu0 0.0
      %1305 = vmatpush1.xpose.msra.mxu0 0.0
      %1306 = vmatprep.subr.mxu0 0.0
      %1307 = vmatpush1.xpose.msra.mxu0 0.0
      %1308 = vmatprep.subr.mxu0 0.0
      %1309 = vmatpush1.xpose.msra.mxu0 0.0
      %1310 = vmatprep.subr.mxu0 0.0
      %1311 = vmatpush1.xpose.msra.mxu0 0.0
      %1312 = vmatprep.subr.mxu0 0.0
      %1313 = vmatpush1.xpose.msra.mxu0 0.0
      %1314 = vmatprep.subr.mxu0 0.0
      %1315 = vmatpush1.xpose.msra.mxu0 0.0
      %1316 = vmatprep.subr.mxu0 0.0
      %1317 = vmatpush1.xpose.msra.mxu0 0.0
      %1318 = vmatprep.subr.mxu0 0.0
      %1319 = vmatpush1.xpose.msra.mxu0 0.0
      %1320 = vmatprep.subr.mxu0 0.0
      %1321 = vmatpush1.xpose.msra.mxu0 0.0
      %1322 = vmatprep.subr.mxu0 0.0
      %1323 = vmatpush1.xpose.msra.mxu0 0.0
      %1324 = vmatprep.subr.mxu0 0.0
      %1325 = vmatpush1.xpose.msra.mxu0 0.0
      %1326 = vmatprep.subr.mxu0 0.0
      %1327 = vmatpush1.xpose.msra.mxu0 0.0
      %1328 = vmatprep.mubr.f32.mxu0 0.0
      %1329 = vmatmul.mubr.f32.gmra.mrb[0].mxu0 %v1258
      %v1330 = vpop.f32.mrb[0].mxu0
      %v1331 = vadd.f32 0.0, %v1330
      %v1332 = vpop.f32.mrb[0].mxu0
      %1333 = vdwg.mxu0
      %v1334 = vmul.f32 %v1331, 0.35355338
      %v1335 = vsel %vm806, %v1334, -inf
      %1336 = vmax.xlane.f32.xlu0 %v1335
      %v1337 = vpop.xlane.xlu0 %1336
      %v1338 = vsub.f32 %v1334, %v1337
      %v1339 = vmul.f32 %v1338, 1.442695
      %v1340 = vpow.pop %v1339
      %v1341 = vsel %vm806, %v1340, 0.0
      %1342 = vadd.xlane.f32.xlu0 %v1341
      %v1343 = vpop.xlane.xlu0 %1342
      %1344 = vrot.lane.b32.xlu0 %v717, 104
      %v1345 = vpop.permute.xlu0 %1344
      %1346 = vrot.lane.b32.xlu0 %v722, 104
      %v1347 = vpop.permute.xlu0 %1346
      %v1351 = vsel %vm806, %v1340, 0
      %1353 = vmatprep.subr.mxu0 0.0
      %1354 = vmatpush1.msra.mxu0 %v1345
      %1355 = vmatprep.subr.mxu0 0.0
      %1356 = vmatpush1.msra.mxu0 %v1347
      %1357 = vmatprep.subr.mxu0 0.0
      %1358 = vmatpush1.msra.mxu0 0.0
      %1359 = vmatprep.subr.mxu0 0.0
      %1360 = vmatpush1.msra.mxu0 0.0
      %1361 = vmatprep.subr.mxu0 0.0
      %1362 = vmatpush1.msra.mxu0 0.0
      %1363 = vmatprep.subr.mxu0 0.0
      %1364 = vmatpush1.msra.mxu0 0.0
      %1365 = vmatprep.subr.mxu0 0.0
      %1366 = vmatpush1.msra.mxu0 0.0
      %1367 = vmatprep.subr.mxu0 0.0
      %1368 = vmatpush1.msra.mxu0 0.0
      %1369 = vmatprep.subr.mxu0 0.0
      %1370 = vmatpush1.msra.mxu0 0.0
      %1371 = vmatprep.subr.mxu0 0.0
      %1372 = vmatpush1.msra.mxu0 0.0
      %1373 = vmatprep.subr.mxu0 0.0
      %1374 = vmatpush1.msra.mxu0 0.0
      %1375 = vmatprep.subr.mxu0 0.0
      %1376 = vmatpush1.msra.mxu0 0.0
      %1377 = vmatprep.subr.mxu0 0.0
      %1378 = vmatpush1.msra.mxu0 0.0
      %1379 = vmatprep.subr.mxu0 0.0
      %1380 = vmatpush1.msra.mxu0 0.0
      %1381 = vmatprep.subr.mxu0 0.0
      %1382 = vmatpush1.msra.mxu0 0.0
      %1383 = vmatprep.subr.mxu0 0.0
      %1384 = vmatpush1.msra.mxu0 0.0
      %1385 = vmatprep.subr.mxu0 0.0
      %1386 = vmatpush1.msra.mxu0 0.0
      %1387 = vmatprep.subr.mxu0 0.0
      %1388 = vmatpush1.msra.mxu0 0.0
      %1389 = vmatprep.subr.mxu0 0.0
      %1390 = vmatpush1.msra.mxu0 0.0
      %1391 = vmatprep.subr.mxu0 0.0
      %1392 = vmatpush1.msra.mxu0 0.0
      %1393 = vmatprep.subr.mxu0 0.0
      %1394 = vmatpush1.msra.mxu0 0.0
      %1395 = vmatprep.subr.mxu0 0.0
      %1396 = vmatpush1.msra.mxu0 0.0
      %1397 = vmatprep.subr.mxu0 0.0
      %1398 = vmatpush1.msra.mxu0 0.0
      %1399 = vmatprep.subr.mxu0 0.0
      %1400 = vmatpush1.msra.mxu0 0.0
      %1401 = vmatprep.subr.mxu0 0.0
      %1402 = vmatpush1.msra.mxu0 0.0
      %1403 = vmatprep.subr.mxu0 0.0
      %1404 = vmatpush1.msra.mxu0 0.0
      %1405 = vmatprep.subr.mxu0 0.0
      %1406 = vmatpush1.msra.mxu0 0.0
      %1407 = vmatprep.subr.mxu0 0.0
      %1408 = vmatpush1.msra.mxu0 0.0
      %1409 = vmatprep.subr.mxu0 0.0
      %1410 = vmatpush1.msra.mxu0 0.0
      %1411 = vmatprep.subr.mxu0 0.0
      %1412 = vmatpush1.msra.mxu0 0.0
      %1413 = vmatprep.subr.mxu0 0.0
      %1414 = vmatpush1.msra.mxu0 0.0
      %1415 = vmatprep.subr.mxu0 0.0
      %1416 = vmatpush1.msra.mxu0 0.0
      %1417 = vmatprep.mubr.f32.mxu0 0.0
      %1418 = vmatmul.mubr.f32.gmra.mrb[0].mxu0 %v1351
      %v1419 = vpop.f32.mrb[0].mxu0
      %v1420 = vadd.f32 0.0, %v1419
      %v1421 = vpop.f32.mrb[0].mxu0
      %1422 = vdwg.mxu0
      %v1423 = vrcp.pop %v1343
      %v1424 = vmul.f32 %v1420, %v1423
      %1426 = vrot.lane.b32.xlu0 %v1424, 24
      %v1427 = vpop.permute.xlu0 %1426
      %vm1429 = vcmask 261312
      %1430 = vst.msk [vmem:[#allocation2] sm:$0xff] %vm1429, %v1427
      %v1431 = vld [vmem:[#allocation2] sm:$0xff]
      %v1432 = vld [vmem:[%s10] sm:$0xff]
      %v1433 = vld [vmem:[%s10 + $0x8] sm:$0xff]
      %v1434 = vld [vmem:[%s10 + $0x10] sm:$0xff]
      %v1435 = vld [vmem:[%s10 + $0x18] sm:$0xff]
      %v1436 = vld [vmem:[%s11] sm:$0x1]
      %v1438 = vlaneseq
      %v1439 = vshrl.u32 %v1438, 7
      %v1440 = vsub.s32 0, %v1439
      %v1441 = vrot.slane %v1436, %v1440
      %v1444 = vsel %vm432, %v1431, 0
      %1446 = vmatprep.subr.mxu0 0.0
      %1447 = vmatpush1.msra.mxu0 %v1432
      %1448 = vmatprep.subr.mxu0 0.0
      %1449 = vmatpush1.msra.mxu0 %v1433
      %1450 = vmatprep.subr.mxu0 0.0
      %1451 = vmatpush1.msra.mxu0 %v1434
      %1452 = vmatprep.subr.mxu0 0.0
      %1453 = vmatpush1.msra.mxu0 %v1435
      %1454 = vmatprep.subr.mxu0 0.0
      %1455 = vmatpush1.msra.mxu0 0.0
      %1456 = vmatprep.subr.mxu0 0.0
      %1457 = vmatpush1.msra.mxu0 0.0
      %1458 = vmatprep.subr.mxu0 0.0
      %1459 = vmatpush1.msra.mxu0 0.0
      %1460 = vmatprep.subr.mxu0 0.0
      %1461 = vmatpush1.msra.mxu0 0.0
      %1462 = vmatprep.subr.mxu0 0.0
      %1463 = vmatpush1.msra.mxu0 0.0
      %1464 = vmatprep.subr.mxu0 0.0
      %1465 = vmatpush1.msra.mxu0 0.0
      %1466 = vmatprep.subr.mxu0 0.0
      %1467 = vmatpush1.msra.mxu0 0.0
      %1468 = vmatprep.subr.mxu0 0.0
      %1469 = vmatpush1.msra.mxu0 0.0
      %1470 = vmatprep.subr.mxu0 0.0
      %1471 = vmatpush1.msra.mxu0 0.0
      %1472 = vmatprep.subr.mxu0 0.0
      %1473 = vmatpush1.msra.mxu0 0.0
      %1474 = vmatprep.subr.mxu0 0.0
      %1475 = vmatpush1.msra.mxu0 0.0
      %1476 = vmatprep.subr.mxu0 0.0
      %1477 = vmatpush1.msra.mxu0 0.0
      %1478 = vmatprep.subr.mxu0 0.0
      %1479 = vmatpush1.msra.mxu0 0.0
      %1480 = vmatprep.subr.mxu0 0.0
      %1481 = vmatpush1.msra.mxu0 0.0
      %1482 = vmatprep.subr.mxu0 0.0
      %1483 = vmatpush1.msra.mxu0 0.0
      %1484 = vmatprep.subr.mxu0 0.0
      %1485 = vmatpush1.msra.mxu0 0.0
      %1486 = vmatprep.subr.mxu0 0.0
      %1487 = vmatpush1.msra.mxu0 0.0
      %1488 = vmatprep.subr.mxu0 0.0
      %1489 = vmatpush1.msra.mxu0 0.0
      %1490 = vmatprep.subr.mxu0 0.0
      %1491 = vmatpush1.msra.mxu0 0.0
      %1492 = vmatprep.subr.mxu0 0.0
      %1493 = vmatpush1.msra.mxu0 0.0
      %1494 = vmatprep.subr.mxu0 0.0
      %1495 = vmatpush1.msra.mxu0 0.0
      %1496 = vmatprep.subr.mxu0 0.0
      %1497 = vmatpush1.msra.mxu0 0.0
      %1498 = vmatprep.subr.mxu0 0.0
      %1499 = vmatpush1.msra.mxu0 0.0
      %1500 = vmatprep.subr.mxu0 0.0
      %1501 = vmatpush1.msra.mxu0 0.0
      %1502 = vmatprep.subr.mxu0 0.0
      %1503 = vmatpush1.msra.mxu0 0.0
      %1504 = vmatprep.subr.mxu0 0.0
      %1505 = vmatpush1.msra.mxu0 0.0
      %1506 = vmatprep.subr.mxu0 0.0
      %1507 = vmatpush1.msra.mxu0 0.0
      %1508 = vmatprep.subr.mxu0 0.0
      %1509 = vmatpush1.msra.mxu0 0.0
      %1510 = vmatprep.mubr.f32.mxu0 0.0
      %1511 = vmatmul.mubr.f32.gmra.mrb[0].mxu0 %v1444
      %v1512 = vpop.f32.mrb[0].mxu0
      %v1513 = vadd.f32 %v1441, %v1512
      %v1514 = vpop.f32.mrb[0].mxu0
      %1515 = vdwg.mxu0
      %v1516 = vadd.f32 %v429, %v1513
      %1517 = vst.msk [vmem:[%s428] sm:$0xff] %vm432, %v1516
      %p1518 = scmp.lt.s32.totalorder %s23, 1
      %s1519 = scalar_select %p1518, %s23, 1
      %s1520 = smul.addr %s1519, 8
      %s1521 = scalar_lea.vmem %s12, %s1520
      // Predicated region
      $region69: #{transformer_decoder_layer.4} parent=67 // pred_check
        %p1522 = pneg %p303
      $region70: #{transformer_decoder_layer.4} parent=67 // pred_check_branch
        %1524 = sbr.rel (%p1522) target = $region72
      $region71: #{transformer_decoder_layer.4} parent=67 // pred_region
        _
      $region72: #{transformer_decoder_layer.4} parent=67 // pred_fallthru
        _
    $region68: #{transformer_decoder_layer.4} parent=5 // pred_fallthru
      _
    %p1525 = scmp.le.s32.totalorder 2, %s18
    // Predicated region
    $region73: #{transformer_decoder_layer.4} parent=5 // pred_check
      %p1526 = pneg %p1525
    $region74: #{transformer_decoder_layer.4} parent=5 // pred_check_branch
      %1528 = sbr.rel (%p1526) target = $region76
    $region75: #{transformer_decoder_layer.4} parent=5 // pred_region
      %s1529 = ssub.s32 %s18, 2
      // Predicated region
      $region77: #{transformer_decoder_layer.4} parent=75 // pred_check
        %p1530 = pneg %p309
      $region78: #{transformer_decoder_layer.4} parent=75 // pred_check_branch
        %1532 = sbr.rel (%p1530) target = $region80
      $region79: #{transformer_decoder_layer.4} parent=75 // pred_region
        %p1533 = scmp.lt.s32.totalorder %s24, 1
        %s1534 = scalar_select %p1533, %s24, 1
        %s1535 = smul.addr %s1534, 8
        %s1536 = scalar_lea.vmem %s12, %s1535
      $region80: #{transformer_decoder_layer.4} parent=75 // pred_fallthru
        _
    $region76: #{transformer_decoder_layer.4} parent=5 // pred_fallthru
      _
  $region6: #{transformer_decoder_layer.4} parent=0 // loop_footer
    %s22 = sadd.s32 1, %s18
  $region7: #{transformer_decoder_layer.4} parent=0 // loop_footer_branch
    %17 = sbr.rel target = $region3
  $region8: #{transformer_decoder_layer.4} parent=0 // loop_exit
    _

</llo_original>
